<compile_context>
chip_gen: v6e
topology: v6e:2x2x1
jax: 0.10.0
libtpu: 0.0.40
codegen_flags: <defaults>
</compile_context>

<pallas_src>
import jax
import jax.numpy as jnp
from jax import lax
from jax.experimental import pallas as pl
from jax.experimental.pallas import tpu as pltpu


def _kernel(x_ref, a1_ref, b1_ref, a2_ref, b2_ref, perm_ref, out_ref, p1_ref):
    # x_ref   : (B, 28, 28)    input images (Cin==1 squeezed)
    # a1_ref  : (5, 28, 384)   conv1 band matrices per kh; cols [0:192) even
    #                          width-pool candidate, [192:384) odd; col = w1*16+c
    # b1_ref  : (1, 192)       conv1 bias tiled over w1
    # a2_ref  : (5, 192, 128)  conv2 band matrices per kh; rows = w_in*16+ci,
    #                          cols [0:64) even / [64:128) odd, col = w3*16+co
    # b2_ref  : (1, 64)        conv2 bias tiled over w3
    # perm_ref: (4, 64, 256)   per-h3 scatter (w3*16+co) -> torch-flat column
    # out_ref : (B, 256)       final output, torch (C,H,W) flatten order
    # p1_ref  : (B, 12, 192)   VMEM scratch: pooled/relu'd conv1 feature map
    B = x_ref.shape[0]
    f32 = jnp.float32

    # ---- conv1 (+ fused width-pool candidates): 5 matmuls (B*24,28)x(28,384)
    xk = x_ref[:, pl.ds(0, 24), :].reshape(B * 24, 28)
    acc1 = jnp.dot(xk, a1_ref[0], preferred_element_type=f32)
    for kh in range(1, 5):
        xk = x_ref[:, pl.ds(kh, 24), :].reshape(B * 24, 28)
        acc1 = acc1 + jnp.dot(xk, a1_ref[kh], preferred_element_type=f32)
    # width pooling (max over even/odd candidates) + bias, once
    wp1 = jnp.maximum(acc1[:, :192], acc1[:, 192:]) + b1_ref[...]
    wp1 = wp1.reshape(B, 24, 192)

    # ---- pool1 over H + relu -> p1 (B, 12, 192), cols = w1*16 + c
    for h1 in range(12):
        p1_ref[:, h1, :] = jnp.maximum(
            jnp.maximum(wp1[:, 2 * h1, :], wp1[:, 2 * h1 + 1, :]), 0.0)

    # ---- conv2 (+ fused width-pool candidates): 5 matmuls (B*8,192)x(192,128)
    pk = p1_ref[:, pl.ds(0, 8), :].reshape(B * 8, 192)
    acc2 = jnp.dot(pk, a2_ref[0], preferred_element_type=f32)
    for kh in range(1, 5):
        pk = p1_ref[:, pl.ds(kh, 8), :].reshape(B * 8, 192)
        acc2 = acc2 + jnp.dot(pk, a2_ref[kh], preferred_element_type=f32)
    wp2 = jnp.maximum(acc2[:, :64], acc2[:, 64:]) + b2_ref[...]
    wp2 = wp2.reshape(B, 8, 64)

    # ---- pool2 over H + relu + scatter into torch (C,H,W)-flat column order
    m = jnp.maximum(jnp.maximum(wp2[:, 0, :], wp2[:, 1, :]), 0.0)       # h3=0
    out = jnp.dot(m, perm_ref[0], preferred_element_type=f32)
    for h3 in range(1, 4):
        m = jnp.maximum(
            jnp.maximum(wp2[:, 2 * h3, :], wp2[:, 2 * h3 + 1, :]), 0.0)  # (B,64)
        out = out + jnp.dot(m, perm_ref[h3], preferred_element_type=f32)
    out_ref[...] = out  # single lane-dense (B, 256) store


def _build_constants(W1, b1, W2, b2):
    """Precompute band/selection/permutation matrices (hoisted out of kernel)."""
    f32 = jnp.float32

    # conv1 band matrices, one per kh; even & odd width-pool candidates
    # concatenated along the output-column axis.
    w1k = jnp.transpose(W1[:, 0], (1, 2, 0)).astype(f32)         # (5,5,16) [kh,kw,co]
    w_in1 = jnp.arange(28)[:, None]

    def band1(w_pos):                                            # w_pos: (12,)
        kw = w_in1 - w_pos[None, :]                              # (28,12)
        valid = (kw >= 0) & (kw <= 4)
        g = w1k[:, jnp.clip(kw, 0, 4), :]                        # (5,28,12,16)
        return jnp.where(valid[None, :, :, None], g, 0.0).reshape(5, 28, 192)

    a1 = jnp.concatenate([band1(2 * jnp.arange(12)),
                          band1(2 * jnp.arange(12) + 1)], axis=-1)   # (5,28,384)
    b1t = jnp.tile(b1.astype(f32), 12).reshape(1, 192)

    # conv2 band matrices, one per kh; even & odd width-pool candidates
    # concatenated along the output-column axis.
    w2k = jnp.transpose(W2, (2, 3, 1, 0)).astype(f32)            # (5,5,16,16) [kh,kw,ci,co]
    w_in2 = jnp.arange(12)[:, None]

    def band2(w_pos):                                            # w_pos: (4,)
        kw = w_in2 - w_pos[None, :]                              # (12,4)
        valid = (kw >= 0) & (kw <= 4)
        g = w2k[:, jnp.clip(kw, 0, 4), :, :]                     # (5,12,4,16,16)
        g = jnp.where(valid[None, :, :, None, None], g, 0.0)
        return jnp.transpose(g, (0, 1, 3, 2, 4)).reshape(5, 192, 64)

    a2 = jnp.concatenate([band2(2 * jnp.arange(4)),
                          band2(2 * jnp.arange(4) + 1)], axis=-1)    # (5,192,128)
    b2t = jnp.tile(b2.astype(f32), 4).reshape(1, 64)

    # Column scatter (w3*16+co) -> torch-flat (co*16 + h3*4 + w3), per h3.
    h3 = jnp.arange(4)[:, None, None]
    w3 = jnp.arange(4)[None, :, None]
    co = jnp.arange(16)[None, None, :]
    perm = jax.nn.one_hot(co * 16 + h3 * 4 + w3, 256,
                          dtype=f32).reshape(4, 64, 256)
    return a1, b1t, a2, b2t, perm


def conv_layers_forward(x_nchw, W1, b1, W2, b2, *, block_b=64):
    """x_nchw: (N, 1, 28, 28) f32; returns (N, 256) f32, matching PyTorch."""
    N = x_nchw.shape[0]
    x = x_nchw.reshape(N, 28, 28).astype(jnp.float32)
    a1, b1t, a2, b2t, perm = _build_constants(W1, b1, W2, b2)

    B = min(block_b, N)                   # images per grid step
    n_pad = (-N) % B
    if n_pad:
        x = jnp.pad(x, ((0, n_pad), (0, 0), (0, 0)))
    Np = N + n_pad

    out = pl.pallas_call(
        _kernel,
        out_shape=jax.ShapeDtypeStruct((Np, 256), jnp.float32),
        grid_spec=pltpu.PrefetchScalarGridSpec(
            num_scalar_prefetch=0,
            grid=(Np // B,),
            in_specs=[
                pl.BlockSpec((B, 28, 28), lambda n: (n, 0, 0)),
                pl.BlockSpec((5, 28, 384), lambda n: (0, 0, 0)),
                pl.BlockSpec((1, 192), lambda n: (0, 0)),
                pl.BlockSpec((5, 192, 128), lambda n: (0, 0, 0)),
                pl.BlockSpec((1, 64), lambda n: (0, 0)),
                pl.BlockSpec((4, 64, 256), lambda n: (0, 0, 0)),
            ],
            out_specs=pl.BlockSpec((B, 256), lambda n: (n, 0)),
            scratch_shapes=[pltpu.VMEM((B, 12, 192), jnp.float32)],
        ),
        compiler_params=pltpu.CompilerParams(
            dimension_semantics=("parallel",)),
    )(x, a1, b1t, a2, b2t, perm)
    return out[:N]


def reference_forward(x, W1, b1, W2, b2):
    dn = ("NCHW", "OIHW", "NCHW")
    y = lax.conv_general_dilated(x, W1, (1, 1), "VALID", dimension_numbers=dn)
    y = y + b1[None, :, None, None]
    y = lax.reduce_window(y, -jnp.inf, lax.max, (1, 1, 2, 2), (1, 1, 2, 2), "VALID")
    y = jnp.maximum(y, 0.0)
    y = lax.conv_general_dilated(y, W2, (1, 1), "VALID", dimension_numbers=dn)
    y = y + b2[None, :, None, None]
    y = lax.reduce_window(y, -jnp.inf, lax.max, (1, 1, 2, 2), (1, 1, 2, 2), "VALID")
    y = jnp.maximum(y, 0.0)
    return y.reshape(-1, 256)


if __name__ == "__main__":
    key = jax.random.PRNGKey(0)
    kx, k1, k2, k3, k4 = jax.random.split(key, 5)

    # Input must be 28x28 (MNIST branch) so the final reshape(-1, 256) is valid.
    x = jax.random.normal(kx, (2, 1, 28, 28), dtype=jnp.float32)

    # Deterministic synthetic parameters (shapes from nn.Conv2d definitions).
    W1 = jax.random.normal(k1, (16, 1, 5, 5), dtype=jnp.float32) * 0.1
    b1 = jax.random.normal(k2, (16,), dtype=jnp.float32) * 0.1
    W2 = jax.random.normal(k3, (16, 16, 5, 5), dtype=jnp.float32) * 0.05
    b2 = jax.random.normal(k4, (16,), dtype=jnp.float32) * 0.1

    out = conv_layers_forward(x, W1, b1, W2, b2)
    out = jax.block_until_ready(out)

    ref = reference_forward(x, W1, b1, W2, b2)
    assert out.shape == (2, 256), out.shape
    assert jnp.allclose(out, ref, rtol=1e-3, atol=1e-3), "mismatch vs reference"
    print("KERNEL_OK")
</pallas_src>

<mosaic_0001>
module attributes {stable_mosaic.version = 11 : i64} {
  func.func @_kernel(%arg0: i32, %arg1: memref<2x28x28xf32, #tpu.memory_space<vmem>>, %arg2: memref<5x28x384xf32, #tpu.memory_space<vmem>>, %arg3: memref<1x192xf32, #tpu.memory_space<vmem>>, %arg4: memref<5x192x128xf32, #tpu.memory_space<vmem>>, %arg5: memref<1x64xf32, #tpu.memory_space<vmem>>, %arg6: memref<4x64x256xf32, #tpu.memory_space<vmem>>, %arg7: memref<2x256xf32, #tpu.memory_space<vmem>>, %arg8: memref<2x12x192xf32, #tpu.memory_space<vmem>>) attributes {dimension_semantics = [#tpu.dimension_semantics<parallel>], iteration_bounds = array<i64: 1>, scalar_prefetch = 0 : i64, scratch_operands = 1 : i64, tpu.core_type = #tpu.core_type<tc>, window_params = [{transform_indices = @transform_0, window_bounds = array<i64: 2, 28, 28>}, {pipeline_mode = #tpu.pipeline_mode<synchronous>, transform_indices = @transform_1, window_bounds = array<i64: 5, 28, 384>}, {pipeline_mode = #tpu.pipeline_mode<synchronous>, transform_indices = @transform_2, window_bounds = array<i64: 1, 192>}, {pipeline_mode = #tpu.pipeline_mode<synchronous>, transform_indices = @transform_3, window_bounds = array<i64: 5, 192, 128>}, {pipeline_mode = #tpu.pipeline_mode<synchronous>, transform_indices = @transform_4, window_bounds = array<i64: 1, 64>}, {pipeline_mode = #tpu.pipeline_mode<synchronous>, transform_indices = @transform_5, window_bounds = array<i64: 4, 64, 256>}, {transform_indices = @transform_6, window_bounds = array<i64: 2, 256>}]} {
    %c0 = arith.constant 0 : index
    %c0_0 = arith.constant 0 : index
    %c0_1 = arith.constant 0 : index
    %0 = vector.load %arg1[%c0, %c0_0, %c0_1] : memref<2x28x28xf32, #tpu.memory_space<vmem>>, vector<2x24x28xf32>
    %1 = vector.shape_cast %0 : vector<2x24x28xf32> to vector<48x28xf32>
    %c0_2 = arith.constant 0 : index
    %c0_3 = arith.constant 0 : index
    %c0_4 = arith.constant 0 : index
    %2 = vector.load %arg2[%c0_2, %c0_3, %c0_4] : memref<5x28x384xf32, #tpu.memory_space<vmem>>, vector<1x28x384xf32>
    %3 = vector.shape_cast %2 : vector<1x28x384xf32> to vector<28x384xf32>
    %cst = arith.constant dense<0.000000e+00> : vector<48x384xf32>
    %4 = tpu.matmul %1, %3, %cst {dimension_numbers = #tpu.dot_dimension_numbers<[1], [0], [0], [1], [0, 0, 1, 1], [], []>} : vector<48x28xf32>, vector<28x384xf32>, vector<48x384xf32> -> vector<48x384xf32>
    %c0_5 = arith.constant 0 : index
    %c1 = arith.constant 1 : index
    %c0_6 = arith.constant 0 : index
    %5 = vector.load %arg1[%c0_5, %c1, %c0_6] : memref<2x28x28xf32, #tpu.memory_space<vmem>>, vector<2x24x28xf32>
    %6 = vector.shape_cast %5 : vector<2x24x28xf32> to vector<48x28xf32>
    %c1_7 = arith.constant 1 : index
    %c0_8 = arith.constant 0 : index
    %c0_9 = arith.constant 0 : index
    %7 = vector.load %arg2[%c1_7, %c0_8, %c0_9] : memref<5x28x384xf32, #tpu.memory_space<vmem>>, vector<1x28x384xf32>
    %8 = vector.shape_cast %7 : vector<1x28x384xf32> to vector<28x384xf32>
    %cst_10 = arith.constant dense<0.000000e+00> : vector<48x384xf32>
    %9 = tpu.matmul %6, %8, %cst_10 {dimension_numbers = #tpu.dot_dimension_numbers<[1], [0], [0], [1], [0, 0, 1, 1], [], []>} : vector<48x28xf32>, vector<28x384xf32>, vector<48x384xf32> -> vector<48x384xf32>
    %10 = arith.addf %4, %9 : vector<48x384xf32>
    %c0_11 = arith.constant 0 : index
    %c2 = arith.constant 2 : index
    %c0_12 = arith.constant 0 : index
    %11 = vector.load %arg1[%c0_11, %c2, %c0_12] : memref<2x28x28xf32, #tpu.memory_space<vmem>>, vector<2x24x28xf32>
    %12 = vector.shape_cast %11 : vector<2x24x28xf32> to vector<48x28xf32>
    %c2_13 = arith.constant 2 : index
    %c0_14 = arith.constant 0 : index
    %c0_15 = arith.constant 0 : index
    %13 = vector.load %arg2[%c2_13, %c0_14, %c0_15] : memref<5x28x384xf32, #tpu.memory_space<vmem>>, vector<1x28x384xf32>
    %14 = vector.shape_cast %13 : vector<1x28x384xf32> to vector<28x384xf32>
    %cst_16 = arith.constant dense<0.000000e+00> : vector<48x384xf32>
    %15 = tpu.matmul %12, %14, %cst_16 {dimension_numbers = #tpu.dot_dimension_numbers<[1], [0], [0], [1], [0, 0, 1, 1], [], []>} : vector<48x28xf32>, vector<28x384xf32>, vector<48x384xf32> -> vector<48x384xf32>
    %16 = arith.addf %10, %15 : vector<48x384xf32>
    %c0_17 = arith.constant 0 : index
    %c3 = arith.constant 3 : index
    %c0_18 = arith.constant 0 : index
    %17 = vector.load %arg1[%c0_17, %c3, %c0_18] : memref<2x28x28xf32, #tpu.memory_space<vmem>>, vector<2x24x28xf32>
    %18 = vector.shape_cast %17 : vector<2x24x28xf32> to vector<48x28xf32>
    %c3_19 = arith.constant 3 : index
    %c0_20 = arith.constant 0 : index
    %c0_21 = arith.constant 0 : index
    %19 = vector.load %arg2[%c3_19, %c0_20, %c0_21] : memref<5x28x384xf32, #tpu.memory_space<vmem>>, vector<1x28x384xf32>
    %20 = vector.shape_cast %19 : vector<1x28x384xf32> to vector<28x384xf32>
    %cst_22 = arith.constant dense<0.000000e+00> : vector<48x384xf32>
    %21 = tpu.matmul %18, %20, %cst_22 {dimension_numbers = #tpu.dot_dimension_numbers<[1], [0], [0], [1], [0, 0, 1, 1], [], []>} : vector<48x28xf32>, vector<28x384xf32>, vector<48x384xf32> -> vector<48x384xf32>
    %22 = arith.addf %16, %21 : vector<48x384xf32>
    %c0_23 = arith.constant 0 : index
    %c4 = arith.constant 4 : index
    %c0_24 = arith.constant 0 : index
    %23 = vector.load %arg1[%c0_23, %c4, %c0_24] : memref<2x28x28xf32, #tpu.memory_space<vmem>>, vector<2x24x28xf32>
    %24 = vector.shape_cast %23 : vector<2x24x28xf32> to vector<48x28xf32>
    %c4_25 = arith.constant 4 : index
    %c0_26 = arith.constant 0 : index
    %c0_27 = arith.constant 0 : index
    %25 = vector.load %arg2[%c4_25, %c0_26, %c0_27] : memref<5x28x384xf32, #tpu.memory_space<vmem>>, vector<1x28x384xf32>
    %26 = vector.shape_cast %25 : vector<1x28x384xf32> to vector<28x384xf32>
    %cst_28 = arith.constant dense<0.000000e+00> : vector<48x384xf32>
    %27 = tpu.matmul %24, %26, %cst_28 {dimension_numbers = #tpu.dot_dimension_numbers<[1], [0], [0], [1], [0, 0, 1, 1], [], []>} : vector<48x28xf32>, vector<28x384xf32>, vector<48x384xf32> -> vector<48x384xf32>
    %28 = arith.addf %22, %27 : vector<48x384xf32>
    %29 = vector.extract_strided_slice %28 {offsets = [0, 0], sizes = [48, 192], strides = [1, 1]} : vector<48x384xf32> to vector<48x192xf32>
    %30 = vector.extract_strided_slice %28 {offsets = [0, 192], sizes = [48, 192], strides = [1, 1]} : vector<48x384xf32> to vector<48x192xf32>
    %31 = arith.maximumf %29, %30 : vector<48x192xf32>
    %c0_29 = arith.constant 0 : index
    %c0_30 = arith.constant 0 : index
    %32 = vector.load %arg3[%c0_29, %c0_30] : memref<1x192xf32, #tpu.memory_space<vmem>>, vector<1x192xf32>
    %33 = vector.broadcast %32 : vector<1x192xf32> to vector<48x192xf32>
    %34 = arith.addf %31, %33 : vector<48x192xf32>
    %35 = vector.shape_cast %34 : vector<48x192xf32> to vector<2x24x192xf32>
    %36 = vector.extract_strided_slice %35 {offsets = [0, 0, 0], sizes = [2, 1, 192], strides = [1, 1, 1]} : vector<2x24x192xf32> to vector<2x1x192xf32>
    %37 = vector.shape_cast %36 : vector<2x1x192xf32> to vector<2x192xf32>
    %38 = vector.extract_strided_slice %35 {offsets = [0, 1, 0], sizes = [2, 1, 192], strides = [1, 1, 1]} : vector<2x24x192xf32> to vector<2x1x192xf32>
    %39 = vector.shape_cast %38 : vector<2x1x192xf32> to vector<2x192xf32>
    %40 = arith.maximumf %37, %39 : vector<2x192xf32>
    %cst_31 = arith.constant 0.000000e+00 : f32
    %41 = vector.broadcast %cst_31 : f32 to vector<2x192xf32>
    %42 = arith.maximumf %40, %41 : vector<2x192xf32>
    %c0_32 = arith.constant 0 : index
    %c0_33 = arith.constant 0 : index
    %c0_34 = arith.constant 0 : index
    %43 = vector.load %arg8[%c0_32, %c0_33, %c0_34] : memref<2x12x192xf32, #tpu.memory_space<vmem>>, vector<2x1x192xf32>
    %44 = vector.shape_cast %43 : vector<2x1x192xf32> to vector<2x192xf32>
    %45 = vector.shape_cast %42 : vector<2x192xf32> to vector<2x1x192xf32>
    tpu.vector_store %arg8[%c0_32, %c0_33, %c0_34], %45 {strides = array<i32>} : memref<2x12x192xf32, #tpu.memory_space<vmem>>, vector<2x1x192xf32>,
    %46 = vector.extract_strided_slice %35 {offsets = [0, 2, 0], sizes = [2, 1, 192], strides = [1, 1, 1]} : vector<2x24x192xf32> to vector<2x1x192xf32>
    %47 = vector.shape_cast %46 : vector<2x1x192xf32> to vector<2x192xf32>
    %48 = vector.extract_strided_slice %35 {offsets = [0, 3, 0], sizes = [2, 1, 192], strides = [1, 1, 1]} : vector<2x24x192xf32> to vector<2x1x192xf32>
    %49 = vector.shape_cast %48 : vector<2x1x192xf32> to vector<2x192xf32>
    %50 = arith.maximumf %47, %49 : vector<2x192xf32>
    %cst_35 = arith.constant 0.000000e+00 : f32
    %51 = vector.broadcast %cst_35 : f32 to vector<2x192xf32>
    %52 = arith.maximumf %50, %51 : vector<2x192xf32>
    %c0_36 = arith.constant 0 : index
    %c1_37 = arith.constant 1 : index
    %c0_38 = arith.constant 0 : index
    %53 = vector.load %arg8[%c0_36, %c1_37, %c0_38] : memref<2x12x192xf32, #tpu.memory_space<vmem>>, vector<2x1x192xf32>
    %54 = vector.shape_cast %53 : vector<2x1x192xf32> to vector<2x192xf32>
    %55 = vector.shape_cast %52 : vector<2x192xf32> to vector<2x1x192xf32>
    tpu.vector_store %arg8[%c0_36, %c1_37, %c0_38], %55 {strides = array<i32>} : memref<2x12x192xf32, #tpu.memory_space<vmem>>, vector<2x1x192xf32>,
    %56 = vector.extract_strided_slice %35 {offsets = [0, 4, 0], sizes = [2, 1, 192], strides = [1, 1, 1]} : vector<2x24x192xf32> to vector<2x1x192xf32>
    %57 = vector.shape_cast %56 : vector<2x1x192xf32> to vector<2x192xf32>
    %58 = vector.extract_strided_slice %35 {offsets = [0, 5, 0], sizes = [2, 1, 192], strides = [1, 1, 1]} : vector<2x24x192xf32> to vector<2x1x192xf32>
    %59 = vector.shape_cast %58 : vector<2x1x192xf32> to vector<2x192xf32>
    %60 = arith.maximumf %57, %59 : vector<2x192xf32>
    %cst_39 = arith.constant 0.000000e+00 : f32
    %61 = vector.broadcast %cst_39 : f32 to vector<2x192xf32>
    %62 = arith.maximumf %60, %61 : vector<2x192xf32>
    %c0_40 = arith.constant 0 : index
    %c2_41 = arith.constant 2 : index
    %c0_42 = arith.constant 0 : index
    %63 = vector.load %arg8[%c0_40, %c2_41, %c0_42] : memref<2x12x192xf32, #tpu.memory_space<vmem>>, vector<2x1x192xf32>
    %64 = vector.shape_cast %63 : vector<2x1x192xf32> to vector<2x192xf32>
    %65 = vector.shape_cast %62 : vector<2x192xf32> to vector<2x1x192xf32>
    tpu.vector_store %arg8[%c0_40, %c2_41, %c0_42], %65 {strides = array<i32>} : memref<2x12x192xf32, #tpu.memory_space<vmem>>, vector<2x1x192xf32>,
    %66 = vector.extract_strided_slice %35 {offsets = [0, 6, 0], sizes = [2, 1, 192], strides = [1, 1, 1]} : vector<2x24x192xf32> to vector<2x1x192xf32>
    %67 = vector.shape_cast %66 : vector<2x1x192xf32> to vector<2x192xf32>
    %68 = vector.extract_strided_slice %35 {offsets = [0, 7, 0], sizes = [2, 1, 192], strides = [1, 1, 1]} : vector<2x24x192xf32> to vector<2x1x192xf32>
    %69 = vector.shape_cast %68 : vector<2x1x192xf32> to vector<2x192xf32>
    %70 = arith.maximumf %67, %69 : vector<2x192xf32>
    %cst_43 = arith.constant 0.000000e+00 : f32
    %71 = vector.broadcast %cst_43 : f32 to vector<2x192xf32>
    %72 = arith.maximumf %70, %71 : vector<2x192xf32>
    %c0_44 = arith.constant 0 : index
    %c3_45 = arith.constant 3 : index
    %c0_46 = arith.constant 0 : index
    %73 = vector.load %arg8[%c0_44, %c3_45, %c0_46] : memref<2x12x192xf32, #tpu.memory_space<vmem>>, vector<2x1x192xf32>
    %74 = vector.shape_cast %73 : vector<2x1x192xf32> to vector<2x192xf32>
    %75 = vector.shape_cast %72 : vector<2x192xf32> to vector<2x1x192xf32>
    tpu.vector_store %arg8[%c0_44, %c3_45, %c0_46], %75 {strides = array<i32>} : memref<2x12x192xf32, #tpu.memory_space<vmem>>, vector<2x1x192xf32>,
    %76 = vector.extract_strided_slice %35 {offsets = [0, 8, 0], sizes = [2, 1, 192], strides = [1, 1, 1]} : vector<2x24x192xf32> to vector<2x1x192xf32>
    %77 = vector.shape_cast %76 : vector<2x1x192xf32> to vector<2x192xf32>
    %78 = vector.extract_strided_slice %35 {offsets = [0, 9, 0], sizes = [2, 1, 192], strides = [1, 1, 1]} : vector<2x24x192xf32> to vector<2x1x192xf32>
    %79 = vector.shape_cast %78 : vector<2x1x192xf32> to vector<2x192xf32>
    %80 = arith.maximumf %77, %79 : vector<2x192xf32>
    %cst_47 = arith.constant 0.000000e+00 : f32
    %81 = vector.broadcast %cst_47 : f32 to vector<2x192xf32>
    %82 = arith.maximumf %80, %81 : vector<2x192xf32>
    %c0_48 = arith.constant 0 : index
    %c4_49 = arith.constant 4 : index
    %c0_50 = arith.constant 0 : index
    %83 = vector.load %arg8[%c0_48, %c4_49, %c0_50] : memref<2x12x192xf32, #tpu.memory_space<vmem>>, vector<2x1x192xf32>
    %84 = vector.shape_cast %83 : vector<2x1x192xf32> to vector<2x192xf32>
    %85 = vector.shape_cast %82 : vector<2x192xf32> to vector<2x1x192xf32>
    tpu.vector_store %arg8[%c0_48, %c4_49, %c0_50], %85 {strides = array<i32>} : memref<2x12x192xf32, #tpu.memory_space<vmem>>, vector<2x1x192xf32>,
    %86 = vector.extract_strided_slice %35 {offsets = [0, 10, 0], sizes = [2, 1, 192], strides = [1, 1, 1]} : vector<2x24x192xf32> to vector<2x1x192xf32>
    %87 = vector.shape_cast %86 : vector<2x1x192xf32> to vector<2x192xf32>
    %88 = vector.extract_strided_slice %35 {offsets = [0, 11, 0], sizes = [2, 1, 192], strides = [1, 1, 1]} : vector<2x24x192xf32> to vector<2x1x192xf32>
    %89 = vector.shape_cast %88 : vector<2x1x192xf32> to vector<2x192xf32>
    %90 = arith.maximumf %87, %89 : vector<2x192xf32>
    %cst_51 = arith.constant 0.000000e+00 : f32
    %91 = vector.broadcast %cst_51 : f32 to vector<2x192xf32>
    %92 = arith.maximumf %90, %91 : vector<2x192xf32>
    %c0_52 = arith.constant 0 : index
    %c5 = arith.constant 5 : index
    %c0_53 = arith.constant 0 : index
    %93 = vector.load %arg8[%c0_52, %c5, %c0_53] : memref<2x12x192xf32, #tpu.memory_space<vmem>>, vector<2x1x192xf32>
    %94 = vector.shape_cast %93 : vector<2x1x192xf32> to vector<2x192xf32>
    %95 = vector.shape_cast %92 : vector<2x192xf32> to vector<2x1x192xf32>
    tpu.vector_store %arg8[%c0_52, %c5, %c0_53], %95 {strides = array<i32>} : memref<2x12x192xf32, #tpu.memory_space<vmem>>, vector<2x1x192xf32>,
    %96 = vector.extract_strided_slice %35 {offsets = [0, 12, 0], sizes = [2, 1, 192], strides = [1, 1, 1]} : vector<2x24x192xf32> to vector<2x1x192xf32>
    %97 = vector.shape_cast %96 : vector<2x1x192xf32> to vector<2x192xf32>
    %98 = vector.extract_strided_slice %35 {offsets = [0, 13, 0], sizes = [2, 1, 192], strides = [1, 1, 1]} : vector<2x24x192xf32> to vector<2x1x192xf32>
    %99 = vector.shape_cast %98 : vector<2x1x192xf32> to vector<2x192xf32>
    %100 = arith.maximumf %97, %99 : vector<2x192xf32>
    %cst_54 = arith.constant 0.000000e+00 : f32
    %101 = vector.broadcast %cst_54 : f32 to vector<2x192xf32>
    %102 = arith.maximumf %100, %101 : vector<2x192xf32>
    %c0_55 = arith.constant 0 : index
    %c6 = arith.constant 6 : index
    %c0_56 = arith.constant 0 : index
    %103 = vector.load %arg8[%c0_55, %c6, %c0_56] : memref<2x12x192xf32, #tpu.memory_space<vmem>>, vector<2x1x192xf32>
    %104 = vector.shape_cast %103 : vector<2x1x192xf32> to vector<2x192xf32>
    %105 = vector.shape_cast %102 : vector<2x192xf32> to vector<2x1x192xf32>
    tpu.vector_store %arg8[%c0_55, %c6, %c0_56], %105 {strides = array<i32>} : memref<2x12x192xf32, #tpu.memory_space<vmem>>, vector<2x1x192xf32>,
    %106 = vector.extract_strided_slice %35 {offsets = [0, 14, 0], sizes = [2, 1, 192], strides = [1, 1, 1]} : vector<2x24x192xf32> to vector<2x1x192xf32>
    %107 = vector.shape_cast %106 : vector<2x1x192xf32> to vector<2x192xf32>
    %108 = vector.extract_strided_slice %35 {offsets = [0, 15, 0], sizes = [2, 1, 192], strides = [1, 1, 1]} : vector<2x24x192xf32> to vector<2x1x192xf32>
    %109 = vector.shape_cast %108 : vector<2x1x192xf32> to vector<2x192xf32>
    %110 = arith.maximumf %107, %109 : vector<2x192xf32>
    %cst_57 = arith.constant 0.000000e+00 : f32
    %111 = vector.broadcast %cst_57 : f32 to vector<2x192xf32>
    %112 = arith.maximumf %110, %111 : vector<2x192xf32>
    %c0_58 = arith.constant 0 : index
    %c7 = arith.constant 7 : index
    %c0_59 = arith.constant 0 : index
    %113 = vector.load %arg8[%c0_58, %c7, %c0_59] : memref<2x12x192xf32, #tpu.memory_space<vmem>>, vector<2x1x192xf32>
    %114 = vector.shape_cast %113 : vector<2x1x192xf32> to vector<2x192xf32>
    %115 = vector.shape_cast %112 : vector<2x192xf32> to vector<2x1x192xf32>
    tpu.vector_store %arg8[%c0_58, %c7, %c0_59], %115 {strides = array<i32>} : memref<2x12x192xf32, #tpu.memory_space<vmem>>, vector<2x1x192xf32>,
    %116 = vector.extract_strided_slice %35 {offsets = [0, 16, 0], sizes = [2, 1, 192], strides = [1, 1, 1]} : vector<2x24x192xf32> to vector<2x1x192xf32>
    %117 = vector.shape_cast %116 : vector<2x1x192xf32> to vector<2x192xf32>
    %118 = vector.extract_strided_slice %35 {offsets = [0, 17, 0], sizes = [2, 1, 192], strides = [1, 1, 1]} : vector<2x24x192xf32> to vector<2x1x192xf32>
    %119 = vector.shape_cast %118 : vector<2x1x192xf32> to vector<2x192xf32>
    %120 = arith.maximumf %117, %119 : vector<2x192xf32>
    %cst_60 = arith.constant 0.000000e+00 : f32
    %121 = vector.broadcast %cst_60 : f32 to vector<2x192xf32>
    %122 = arith.maximumf %120, %121 : vector<2x192xf32>
    %c0_61 = arith.constant 0 : index
    %c8 = arith.constant 8 : index
    %c0_62 = arith.constant 0 : index
    %123 = vector.load %arg8[%c0_61, %c8, %c0_62] : memref<2x12x192xf32, #tpu.memory_space<vmem>>, vector<2x1x192xf32>
    %124 = vector.shape_cast %123 : vector<2x1x192xf32> to vector<2x192xf32>
    %125 = vector.shape_cast %122 : vector<2x192xf32> to vector<2x1x192xf32>
    tpu.vector_store %arg8[%c0_61, %c8, %c0_62], %125 {strides = array<i32>} : memref<2x12x192xf32, #tpu.memory_space<vmem>>, vector<2x1x192xf32>,
    %126 = vector.extract_strided_slice %35 {offsets = [0, 18, 0], sizes = [2, 1, 192], strides = [1, 1, 1]} : vector<2x24x192xf32> to vector<2x1x192xf32>
    %127 = vector.shape_cast %126 : vector<2x1x192xf32> to vector<2x192xf32>
    %128 = vector.extract_strided_slice %35 {offsets = [0, 19, 0], sizes = [2, 1, 192], strides = [1, 1, 1]} : vector<2x24x192xf32> to vector<2x1x192xf32>
    %129 = vector.shape_cast %128 : vector<2x1x192xf32> to vector<2x192xf32>
    %130 = arith.maximumf %127, %129 : vector<2x192xf32>
    %cst_63 = arith.constant 0.000000e+00 : f32
    %131 = vector.broadcast %cst_63 : f32 to vector<2x192xf32>
    %132 = arith.maximumf %130, %131 : vector<2x192xf32>
    %c0_64 = arith.constant 0 : index
    %c9 = arith.constant 9 : index
    %c0_65 = arith.constant 0 : index
    %133 = vector.load %arg8[%c0_64, %c9, %c0_65] : memref<2x12x192xf32, #tpu.memory_space<vmem>>, vector<2x1x192xf32>
    %134 = vector.shape_cast %133 : vector<2x1x192xf32> to vector<2x192xf32>
    %135 = vector.shape_cast %132 : vector<2x192xf32> to vector<2x1x192xf32>
    tpu.vector_store %arg8[%c0_64, %c9, %c0_65], %135 {strides = array<i32>} : memref<2x12x192xf32, #tpu.memory_space<vmem>>, vector<2x1x192xf32>,
    %136 = vector.extract_strided_slice %35 {offsets = [0, 20, 0], sizes = [2, 1, 192], strides = [1, 1, 1]} : vector<2x24x192xf32> to vector<2x1x192xf32>
    %137 = vector.shape_cast %136 : vector<2x1x192xf32> to vector<2x192xf32>
    %138 = vector.extract_strided_slice %35 {offsets = [0, 21, 0], sizes = [2, 1, 192], strides = [1, 1, 1]} : vector<2x24x192xf32> to vector<2x1x192xf32>
    %139 = vector.shape_cast %138 : vector<2x1x192xf32> to vector<2x192xf32>
    %140 = arith.maximumf %137, %139 : vector<2x192xf32>
    %cst_66 = arith.constant 0.000000e+00 : f32
    %141 = vector.broadcast %cst_66 : f32 to vector<2x192xf32>
    %142 = arith.maximumf %140, %141 : vector<2x192xf32>
    %c0_67 = arith.constant 0 : index
    %c10 = arith.constant 10 : index
    %c0_68 = arith.constant 0 : index
    %143 = vector.load %arg8[%c0_67, %c10, %c0_68] : memref<2x12x192xf32, #tpu.memory_space<vmem>>, vector<2x1x192xf32>
    %144 = vector.shape_cast %143 : vector<2x1x192xf32> to vector<2x192xf32>
    %145 = vector.shape_cast %142 : vector<2x192xf32> to vector<2x1x192xf32>
    tpu.vector_store %arg8[%c0_67, %c10, %c0_68], %145 {strides = array<i32>} : memref<2x12x192xf32, #tpu.memory_space<vmem>>, vector<2x1x192xf32>,
    %146 = vector.extract_strided_slice %35 {offsets = [0, 22, 0], sizes = [2, 1, 192], strides = [1, 1, 1]} : vector<2x24x192xf32> to vector<2x1x192xf32>
    %147 = vector.shape_cast %146 : vector<2x1x192xf32> to vector<2x192xf32>
    %148 = vector.extract_strided_slice %35 {offsets = [0, 23, 0], sizes = [2, 1, 192], strides = [1, 1, 1]} : vector<2x24x192xf32> to vector<2x1x192xf32>
    %149 = vector.shape_cast %148 : vector<2x1x192xf32> to vector<2x192xf32>
    %150 = arith.maximumf %147, %149 : vector<2x192xf32>
    %cst_69 = arith.constant 0.000000e+00 : f32
    %151 = vector.broadcast %cst_69 : f32 to vector<2x192xf32>
    %152 = arith.maximumf %150, %151 : vector<2x192xf32>
    %c0_70 = arith.constant 0 : index
    %c11 = arith.constant 11 : index
    %c0_71 = arith.constant 0 : index
    %153 = vector.load %arg8[%c0_70, %c11, %c0_71] : memref<2x12x192xf32, #tpu.memory_space<vmem>>, vector<2x1x192xf32>
    %154 = vector.shape_cast %153 : vector<2x1x192xf32> to vector<2x192xf32>
    %155 = vector.shape_cast %152 : vector<2x192xf32> to vector<2x1x192xf32>
    tpu.vector_store %arg8[%c0_70, %c11, %c0_71], %155 {strides = array<i32>} : memref<2x12x192xf32, #tpu.memory_space<vmem>>, vector<2x1x192xf32>,
    %c0_72 = arith.constant 0 : index
    %c0_73 = arith.constant 0 : index
    %c0_74 = arith.constant 0 : index
    %156 = vector.load %arg8[%c0_72, %c0_73, %c0_74] : memref<2x12x192xf32, #tpu.memory_space<vmem>>, vector<2x8x192xf32>
    %157 = vector.shape_cast %156 : vector<2x8x192xf32> to vector<16x192xf32>
    %c0_75 = arith.constant 0 : index
    %c0_76 = arith.constant 0 : index
    %c0_77 = arith.constant 0 : index
    %158 = vector.load %arg4[%c0_75, %c0_76, %c0_77] : memref<5x192x128xf32, #tpu.memory_space<vmem>>, vector<1x192x128xf32>
    %159 = vector.shape_cast %158 : vector<1x192x128xf32> to vector<192x128xf32>
    %cst_78 = arith.constant dense<0.000000e+00> : vector<16x128xf32>
    %160 = tpu.matmul %157, %159, %cst_78 {dimension_numbers = #tpu.dot_dimension_numbers<[1], [0], [0], [1], [0, 0, 1, 1], [], []>} : vector<16x192xf32>, vector<192x128xf32>, vector<16x128xf32> -> vector<16x128xf32>
    %c0_79 = arith.constant 0 : index
    %c1_80 = arith.constant 1 : index
    %c0_81 = arith.constant 0 : index
    %161 = vector.load %arg8[%c0_79, %c1_80, %c0_81] : memref<2x12x192xf32, #tpu.memory_space<vmem>>, vector<2x8x192xf32>
    %162 = vector.shape_cast %161 : vector<2x8x192xf32> to vector<16x192xf32>
    %c1_82 = arith.constant 1 : index
    %c0_83 = arith.constant 0 : index
    %c0_84 = arith.constant 0 : index
    %163 = vector.load %arg4[%c1_82, %c0_83, %c0_84] : memref<5x192x128xf32, #tpu.memory_space<vmem>>, vector<1x192x128xf32>
    %164 = vector.shape_cast %163 : vector<1x192x128xf32> to vector<192x128xf32>
    %cst_85 = arith.constant dense<0.000000e+00> : vector<16x128xf32>
    %165 = tpu.matmul %162, %164, %cst_85 {dimension_numbers = #tpu.dot_dimension_numbers<[1], [0], [0], [1], [0, 0, 1, 1], [], []>} : vector<16x192xf32>, vector<192x128xf32>, vector<16x128xf32> -> vector<16x128xf32>
    %166 = arith.addf %160, %165 : vector<16x128xf32>
    %c0_86 = arith.constant 0 : index
    %c2_87 = arith.constant 2 : index
    %c0_88 = arith.constant 0 : index
    %167 = vector.load %arg8[%c0_86, %c2_87, %c0_88] : memref<2x12x192xf32, #tpu.memory_space<vmem>>, vector<2x8x192xf32>
    %168 = vector.shape_cast %167 : vector<2x8x192xf32> to vector<16x192xf32>
    %c2_89 = arith.constant 2 : index
    %c0_90 = arith.constant 0 : index
    %c0_91 = arith.constant 0 : index
    %169 = vector.load %arg4[%c2_89, %c0_90, %c0_91] : memref<5x192x128xf32, #tpu.memory_space<vmem>>, vector<1x192x128xf32>
    %170 = vector.shape_cast %169 : vector<1x192x128xf32> to vector<192x128xf32>
    %cst_92 = arith.constant dense<0.000000e+00> : vector<16x128xf32>
    %171 = tpu.matmul %168, %170, %cst_92 {dimension_numbers = #tpu.dot_dimension_numbers<[1], [0], [0], [1], [0, 0, 1, 1], [], []>} : vector<16x192xf32>, vector<192x128xf32>, vector<16x128xf32> -> vector<16x128xf32>
    %172 = arith.addf %166, %171 : vector<16x128xf32>
    %c0_93 = arith.constant 0 : index
    %c3_94 = arith.constant 3 : index
    %c0_95 = arith.constant 0 : index
    %173 = vector.load %arg8[%c0_93, %c3_94, %c0_95] : memref<2x12x192xf32, #tpu.memory_space<vmem>>, vector<2x8x192xf32>
    %174 = vector.shape_cast %173 : vector<2x8x192xf32> to vector<16x192xf32>
    %c3_96 = arith.constant 3 : index
    %c0_97 = arith.constant 0 : index
    %c0_98 = arith.constant 0 : index
    %175 = vector.load %arg4[%c3_96, %c0_97, %c0_98] : memref<5x192x128xf32, #tpu.memory_space<vmem>>, vector<1x192x128xf32>
    %176 = vector.shape_cast %175 : vector<1x192x128xf32> to vector<192x128xf32>
    %cst_99 = arith.constant dense<0.000000e+00> : vector<16x128xf32>
    %177 = tpu.matmul %174, %176, %cst_99 {dimension_numbers = #tpu.dot_dimension_numbers<[1], [0], [0], [1], [0, 0, 1, 1], [], []>} : vector<16x192xf32>, vector<192x128xf32>, vector<16x128xf32> -> vector<16x128xf32>
    %178 = arith.addf %172, %177 : vector<16x128xf32>
    %c0_100 = arith.constant 0 : index
    %c4_101 = arith.constant 4 : index
    %c0_102 = arith.constant 0 : index
    %179 = vector.load %arg8[%c0_100, %c4_101, %c0_102] : memref<2x12x192xf32, #tpu.memory_space<vmem>>, vector<2x8x192xf32>
    %180 = vector.shape_cast %179 : vector<2x8x192xf32> to vector<16x192xf32>
    %c4_103 = arith.constant 4 : index
    %c0_104 = arith.constant 0 : index
    %c0_105 = arith.constant 0 : index
    %181 = vector.load %arg4[%c4_103, %c0_104, %c0_105] : memref<5x192x128xf32, #tpu.memory_space<vmem>>, vector<1x192x128xf32>
    %182 = vector.shape_cast %181 : vector<1x192x128xf32> to vector<192x128xf32>
    %cst_106 = arith.constant dense<0.000000e+00> : vector<16x128xf32>
    %183 = tpu.matmul %180, %182, %cst_106 {dimension_numbers = #tpu.dot_dimension_numbers<[1], [0], [0], [1], [0, 0, 1, 1], [], []>} : vector<16x192xf32>, vector<192x128xf32>, vector<16x128xf32> -> vector<16x128xf32>
    %184 = arith.addf %178, %183 : vector<16x128xf32>
    %185 = vector.extract_strided_slice %184 {offsets = [0, 0], sizes = [16, 64], strides = [1, 1]} : vector<16x128xf32> to vector<16x64xf32>
    %186 = vector.extract_strided_slice %184 {offsets = [0, 64], sizes = [16, 64], strides = [1, 1]} : vector<16x128xf32> to vector<16x64xf32>
    %187 = arith.maximumf %185, %186 : vector<16x64xf32>
    %c0_107 = arith.constant 0 : index
    %c0_108 = arith.constant 0 : index
    %188 = vector.load %arg5[%c0_107, %c0_108] : memref<1x64xf32, #tpu.memory_space<vmem>>, vector<1x64xf32>
    %189 = vector.broadcast %188 : vector<1x64xf32> to vector<16x64xf32>
    %190 = arith.addf %187, %189 : vector<16x64xf32>
    %191 = vector.shape_cast %190 : vector<16x64xf32> to vector<2x8x64xf32>
    %192 = vector.extract_strided_slice %191 {offsets = [0, 0, 0], sizes = [2, 1, 64], strides = [1, 1, 1]} : vector<2x8x64xf32> to vector<2x1x64xf32>
    %193 = vector.shape_cast %192 : vector<2x1x64xf32> to vector<2x64xf32>
    %194 = vector.extract_strided_slice %191 {offsets = [0, 1, 0], sizes = [2, 1, 64], strides = [1, 1, 1]} : vector<2x8x64xf32> to vector<2x1x64xf32>
    %195 = vector.shape_cast %194 : vector<2x1x64xf32> to vector<2x64xf32>
    %196 = arith.maximumf %193, %195 : vector<2x64xf32>
    %cst_109 = arith.constant 0.000000e+00 : f32
    %197 = vector.broadcast %cst_109 : f32 to vector<2x64xf32>
    %198 = arith.maximumf %196, %197 : vector<2x64xf32>
    %c0_110 = arith.constant 0 : index
    %c0_111 = arith.constant 0 : index
    %c0_112 = arith.constant 0 : index
    %199 = vector.load %arg6[%c0_110, %c0_111, %c0_112] : memref<4x64x256xf32, #tpu.memory_space<vmem>>, vector<1x64x256xf32>
    %200 = vector.shape_cast %199 : vector<1x64x256xf32> to vector<64x256xf32>
    %cst_113 = arith.constant dense<0.000000e+00> : vector<2x256xf32>
    %201 = tpu.matmul %198, %200, %cst_113 {dimension_numbers = #tpu.dot_dimension_numbers<[1], [0], [0], [1], [0, 0, 1, 1], [], []>} : vector<2x64xf32>, vector<64x256xf32>, vector<2x256xf32> -> vector<2x256xf32>
    %202 = vector.extract_strided_slice %191 {offsets = [0, 2, 0], sizes = [2, 1, 64], strides = [1, 1, 1]} : vector<2x8x64xf32> to vector<2x1x64xf32>
    %203 = vector.shape_cast %202 : vector<2x1x64xf32> to vector<2x64xf32>
    %204 = vector.extract_strided_slice %191 {offsets = [0, 3, 0], sizes = [2, 1, 64], strides = [1, 1, 1]} : vector<2x8x64xf32> to vector<2x1x64xf32>
    %205 = vector.shape_cast %204 : vector<2x1x64xf32> to vector<2x64xf32>
    %206 = arith.maximumf %203, %205 : vector<2x64xf32>
    %cst_114 = arith.constant 0.000000e+00 : f32
    %207 = vector.broadcast %cst_114 : f32 to vector<2x64xf32>
    %208 = arith.maximumf %206, %207 : vector<2x64xf32>
    %c1_115 = arith.constant 1 : index
    %c0_116 = arith.constant 0 : index
    %c0_117 = arith.constant 0 : index
    %209 = vector.load %arg6[%c1_115, %c0_116, %c0_117] : memref<4x64x256xf32, #tpu.memory_space<vmem>>, vector<1x64x256xf32>
    %210 = vector.shape_cast %209 : vector<1x64x256xf32> to vector<64x256xf32>
    %cst_118 = arith.constant dense<0.000000e+00> : vector<2x256xf32>
    %211 = tpu.matmul %208, %210, %cst_118 {dimension_numbers = #tpu.dot_dimension_numbers<[1], [0], [0], [1], [0, 0, 1, 1], [], []>} : vector<2x64xf32>, vector<64x256xf32>, vector<2x256xf32> -> vector<2x256xf32>
    %212 = arith.addf %201, %211 : vector<2x256xf32>
    %213 = vector.extract_strided_slice %191 {offsets = [0, 4, 0], sizes = [2, 1, 64], strides = [1, 1, 1]} : vector<2x8x64xf32> to vector<2x1x64xf32>
    %214 = vector.shape_cast %213 : vector<2x1x64xf32> to vector<2x64xf32>
    %215 = vector.extract_strided_slice %191 {offsets = [0, 5, 0], sizes = [2, 1, 64], strides = [1, 1, 1]} : vector<2x8x64xf32> to vector<2x1x64xf32>
    %216 = vector.shape_cast %215 : vector<2x1x64xf32> to vector<2x64xf32>
    %217 = arith.maximumf %214, %216 : vector<2x64xf32>
    %cst_119 = arith.constant 0.000000e+00 : f32
    %218 = vector.broadcast %cst_119 : f32 to vector<2x64xf32>
    %219 = arith.maximumf %217, %218 : vector<2x64xf32>
    %c2_120 = arith.constant 2 : index
    %c0_121 = arith.constant 0 : index
    %c0_122 = arith.constant 0 : index
    %220 = vector.load %arg6[%c2_120, %c0_121, %c0_122] : memref<4x64x256xf32, #tpu.memory_space<vmem>>, vector<1x64x256xf32>
    %221 = vector.shape_cast %220 : vector<1x64x256xf32> to vector<64x256xf32>
    %cst_123 = arith.constant dense<0.000000e+00> : vector<2x256xf32>
    %222 = tpu.matmul %219, %221, %cst_123 {dimension_numbers = #tpu.dot_dimension_numbers<[1], [0], [0], [1], [0, 0, 1, 1], [], []>} : vector<2x64xf32>, vector<64x256xf32>, vector<2x256xf32> -> vector<2x256xf32>
    %223 = arith.addf %212, %222 : vector<2x256xf32>
    %224 = vector.extract_strided_slice %191 {offsets = [0, 6, 0], sizes = [2, 1, 64], strides = [1, 1, 1]} : vector<2x8x64xf32> to vector<2x1x64xf32>
    %225 = vector.shape_cast %224 : vector<2x1x64xf32> to vector<2x64xf32>
    %226 = vector.extract_strided_slice %191 {offsets = [0, 7, 0], sizes = [2, 1, 64], strides = [1, 1, 1]} : vector<2x8x64xf32> to vector<2x1x64xf32>
    %227 = vector.shape_cast %226 : vector<2x1x64xf32> to vector<2x64xf32>
    %228 = arith.maximumf %225, %227 : vector<2x64xf32>
    %cst_124 = arith.constant 0.000000e+00 : f32
    %229 = vector.broadcast %cst_124 : f32 to vector<2x64xf32>
    %230 = arith.maximumf %228, %229 : vector<2x64xf32>
    %c3_125 = arith.constant 3 : index
    %c0_126 = arith.constant 0 : index
    %c0_127 = arith.constant 0 : index
    %231 = vector.load %arg6[%c3_125, %c0_126, %c0_127] : memref<4x64x256xf32, #tpu.memory_space<vmem>>, vector<1x64x256xf32>
    %232 = vector.shape_cast %231 : vector<1x64x256xf32> to vector<64x256xf32>
    %cst_128 = arith.constant dense<0.000000e+00> : vector<2x256xf32>
    %233 = tpu.matmul %230, %232, %cst_128 {dimension_numbers = #tpu.dot_dimension_numbers<[1], [0], [0], [1], [0, 0, 1, 1], [], []>} : vector<2x64xf32>, vector<64x256xf32>, vector<2x256xf32> -> vector<2x256xf32>
    %234 = arith.addf %223, %233 : vector<2x256xf32>
    %c0_129 = arith.constant 0 : index
    %c0_130 = arith.constant 0 : index
    %235 = vector.load %arg7[%c0_129, %c0_130] : memref<2x256xf32, #tpu.memory_space<vmem>>, vector<2x256xf32>
    tpu.vector_store %arg7[%c0_129, %c0_130], %234 {strides = array<i32>} : memref<2x256xf32, #tpu.memory_space<vmem>>, vector<2x256xf32>,
    return
  }
  func.func @transform_0(%arg0: i32) -> (i32, i32, i32) {
    %c0_i32 = arith.constant 0 : i32
    %c0_i32_0 = arith.constant 0 : i32
    %c0_i32_1 = arith.constant 0 : i32
    return %arg0, %c0_i32, %c0_i32_0 : i32, i32, i32
  }
  func.func @transform_1(%arg0: i32) -> (i32, i32, i32) {
    %c0_i32 = arith.constant 0 : i32
    %c0_i32_0 = arith.constant 0 : i32
    %c0_i32_1 = arith.constant 0 : i32
    %c0_i32_2 = arith.constant 0 : i32
    return %c0_i32, %c0_i32_0, %c0_i32_1 : i32, i32, i32
  }
  func.func @transform_2(%arg0: i32) -> (i32, i32) {
    %c0_i32 = arith.constant 0 : i32
    %c0_i32_0 = arith.constant 0 : i32
    %c0_i32_1 = arith.constant 0 : i32
    return %c0_i32, %c0_i32_0 : i32, i32
  }
  func.func @transform_3(%arg0: i32) -> (i32, i32, i32) {
    %c0_i32 = arith.constant 0 : i32
    %c0_i32_0 = arith.constant 0 : i32
    %c0_i32_1 = arith.constant 0 : i32
    %c0_i32_2 = arith.constant 0 : i32
    return %c0_i32, %c0_i32_0, %c0_i32_1 : i32, i32, i32
  }
  func.func @transform_4(%arg0: i32) -> (i32, i32) {
    %c0_i32 = arith.constant 0 : i32
    %c0_i32_0 = arith.constant 0 : i32
    %c0_i32_1 = arith.constant 0 : i32
    return %c0_i32, %c0_i32_0 : i32, i32
  }
  func.func @transform_5(%arg0: i32) -> (i32, i32, i32) {
    %c0_i32 = arith.constant 0 : i32
    %c0_i32_0 = arith.constant 0 : i32
    %c0_i32_1 = arith.constant 0 : i32
    %c0_i32_2 = arith.constant 0 : i32
    return %c0_i32, %c0_i32_0, %c0_i32_1 : i32, i32, i32
  }
  func.func @transform_6(%arg0: i32) -> (i32, i32) {
    %c0_i32 = arith.constant 0 : i32
    %c0_i32_0 = arith.constant 0 : i32
    return %arg0, %c0_i32 : i32, i32
  }
}

</mosaic_0001>

<llo_original>
// kernel: tpu_custom_call.1
$region0: #{tpu_custom_call.1}
  #allocation0 [shape = 'u32[]', space=smem, size = 0x4, offset = 0x4, fixed_abs, tag = 'smem constant byte address 0x4 - core index']
  #allocation1 [shape = 'u32[144,128]{1,0:T(1,128)}', space=vmem, size = 0x12000, scoped, tag = 'internal scratch']
  #allocation2 [shape = 'f32[2,12,192]{2,1,0:T(8,128)}', space=vmem, size = 0x8000, scoped, tag = 'scratch operand']
  %s0 = inlined_call_operand.vmem [shape: f32[2,28,28], index: 0, kind: input, shape index: {}]
  %s1 = inlined_call_operand.hbm [shape: f32[5,28,384], index: 1, kind: input, shape index: {}]
  %s2 = inlined_call_operand.vmem [shape: f32[1,192], index: 2, kind: input, shape index: {}]
  %s3 = inlined_call_operand.hbm [shape: f32[5,192,128], index: 3, kind: input, shape index: {}]
  %s4 = inlined_call_operand.vmem [shape: f32[1,64], index: 4, kind: input, shape index: {}]
  %s5 = inlined_call_operand.hbm [shape: f32[4,64,256], index: 5, kind: input, shape index: {}]
  %s6 = inlined_call_operand.hbm [shape: f32[2,256], index: 6, kind: output, shape index: {}]
  %s7 = sld [smem:[#allocation0]]
  $region46: #{tpu_custom_call.1} parent=0
    _
  %s9 = ssub.s32 1, %s7
  %s10 = scalar_select 0, %s9, %s7
  $region1: #{tpu_custom_call.1} parent=0
    #allocation3 [shape = 'u8[245760]{0}', space=vmem, size = 0x3c000, scoped, tag = 'input window, operand 1, single buffered']
    #allocation4 [shape = 's32[1]{0}', space=sflag, size = 0x4, scoped, tag = 'scoped memory for tpu_custom_call.1']
    #allocation5 [shape = 's32[1]{0}', space=sflag, size = 0x4, scoped, tag = 'scoped memory for tpu_custom_call.1']
    #allocation6 [shape = 'u8[491520]{0}', space=vmem, size = 0x78000, scoped, tag = 'input window, operand 3, single buffered']
    #allocation7 [shape = 's32[1]{0}', space=sflag, size = 0x4, scoped, tag = 'scoped memory for tpu_custom_call.1']
    #allocation8 [shape = 'u8[262144]{0}', space=vmem, size = 0x40000, scoped, tag = 'input window, operand 5, single buffered']
    #allocation9 [shape = 'u8[2048]{0}', space=vmem, size = 0x800, scoped, tag = 'output window, operand 0, single buffered']
    %11 = vsyncpa [#allocation4], 0
    %12 = vsyncpa [#allocation7], 0
    %13 = vsyncpa [#allocation5], 0
    // Predicated region
    $region2: #{tpu_custom_call.1} parent=1 // pred_check
      _
    $region3: #{tpu_custom_call.1} parent=1 // pred_check_branch
      %15 = sbr.rel (0) target = $region5
    $region4: #{tpu_custom_call.1} parent=1 // pred_region
      _
    $region5: #{tpu_custom_call.1} parent=1 // pred_fallthru
      _
    // Predicated region
    $region6: #{tpu_custom_call.1} parent=1 // pred_check
      _
    $region7: #{tpu_custom_call.1} parent=1 // pred_check_branch
      %17 = sbr.rel (0) target = $region9
    $region8: #{tpu_custom_call.1} parent=1 // pred_region
      %s19 = ssub.s32 7680, 7680
      %20 = vsyncadd [#allocation4], %s19
      %s21 = sshll.u32 [#allocation3], 4
      %s22 = int_to_ptr.vmem [resolvable:$true] %s21
      %27 = dma.hbm_to_vmem [thread:$0]  %s1, 7680, %s22, [#allocation4], 384, 384, 24
    $region9: #{tpu_custom_call.1} parent=1 // pred_fallthru
      _
    // Predicated region
    $region10: #{tpu_custom_call.1} parent=1 // pred_check
      _
    $region11: #{tpu_custom_call.1} parent=1 // pred_check_branch
      %29 = sbr.rel (0) target = $region13
    $region12: #{tpu_custom_call.1} parent=1 // pred_region
      _
    $region13: #{tpu_custom_call.1} parent=1 // pred_fallthru
      _
    // Predicated region
    $region14: #{tpu_custom_call.1} parent=1 // pred_check
      _
    $region15: #{tpu_custom_call.1} parent=1 // pred_check_branch
      %31 = sbr.rel (0) target = $region17
    $region16: #{tpu_custom_call.1} parent=1 // pred_region
      %s33 = ssub.s32 15360, 15360
      %34 = vsyncadd [#allocation7], %s33
      %s35 = sshll.u32 [#allocation6], 4
      %s36 = int_to_ptr.vmem [resolvable:$true] %s35
      %41 = dma.hbm_to_vmem [thread:$0]  %s3, 15360, %s36, [#allocation7], 128, 128, 8
    $region17: #{tpu_custom_call.1} parent=1 // pred_fallthru
      _
    // Predicated region
    $region18: #{tpu_custom_call.1} parent=1 // pred_check
      _
    $region19: #{tpu_custom_call.1} parent=1 // pred_check_branch
      %43 = sbr.rel (0) target = $region21
    $region20: #{tpu_custom_call.1} parent=1 // pred_region
      _
    $region21: #{tpu_custom_call.1} parent=1 // pred_fallthru
      _
    // Predicated region
    $region22: #{tpu_custom_call.1} parent=1 // pred_check
      _
    $region23: #{tpu_custom_call.1} parent=1 // pred_check_branch
      %45 = sbr.rel (0) target = $region25
    $region24: #{tpu_custom_call.1} parent=1 // pred_region
      %s47 = ssub.s32 8192, 8192
      %48 = vsyncadd [#allocation7], %s47
      %s49 = sshll.u32 [#allocation8], 4
      %s50 = int_to_ptr.vmem [resolvable:$true] %s49
      %55 = dma.hbm_to_vmem [thread:$0]  %s5, 8192, %s50, [#allocation7], 256, 256, 16
    $region25: #{tpu_custom_call.1} parent=1 // pred_fallthru
      _
    // Predicated region
    $region26: #{tpu_custom_call.1} parent=1 // pred_check
      _
    $region27: #{tpu_custom_call.1} parent=1 // pred_check_branch
      %57 = sbr.rel (0) target = $region29
    $region28: #{tpu_custom_call.1} parent=1 // pred_region
      %58 = dma.done [#allocation4], 7680
    $region29: #{tpu_custom_call.1} parent=1 // pred_fallthru
      _
    // Predicated region
    $region30: #{tpu_custom_call.1} parent=1 // pred_check
      _
    $region31: #{tpu_custom_call.1} parent=1 // pred_check_branch
      %60 = sbr.rel (0) target = $region33
    $region32: #{tpu_custom_call.1} parent=1 // pred_region
      %61 = dma.done [#allocation7], 15360
    $region33: #{tpu_custom_call.1} parent=1 // pred_fallthru
      _
    // Predicated region
    $region34: #{tpu_custom_call.1} parent=1 // pred_check
      _
    $region35: #{tpu_custom_call.1} parent=1 // pred_check_branch
      %63 = sbr.rel (0) target = $region37
    $region36: #{tpu_custom_call.1} parent=1 // pred_region
      %64 = dma.done [#allocation7], 8192
    $region37: #{tpu_custom_call.1} parent=1 // pred_fallthru
      _
    %v65 = vld [vmem:[%s0] sm:$0xff]
    %v66 = vld [vmem:[%s0 + $0x8] sm:$0xff]
    %v67 = vld [vmem:[%s0 + $0x10] sm:$0xff]
    %v68 = vld [vmem:[%s0 + $0x20] sm:$0xff]
    %v69 = vld [vmem:[%s0 + $0x28] sm:$0xff]
    %v70 = vld [vmem:[%s0 + $0x30] sm:$0xff]
    %v71 = vld [vmem:[#allocation3] sm:$0xff]
    %v72 = vld [vmem:[#allocation3 + $0x8] sm:$0xff]
    %v73 = vld [vmem:[#allocation3 + $0x10] sm:$0xff]
    %v74 = vld [vmem:[#allocation3 + $0x18] sm:$0xff]
    %v75 = vld [vmem:[#allocation3 + $0x20] sm:$0xff]
    %v76 = vld [vmem:[#allocation3 + $0x28] sm:$0xff]
    %v77 = vld [vmem:[#allocation3 + $0x30] sm:$0xff]
    %v78 = vld [vmem:[#allocation3 + $0x38] sm:$0xff]
    %v79 = vld [vmem:[#allocation3 + $0x40] sm:$0xff]
    %v80 = vld [vmem:[#allocation3 + $0x48] sm:$0xf]
    %v81 = vld [vmem:[#allocation3 + $0x50] sm:$0xf]
    %v82 = vld [vmem:[#allocation3 + $0x58] sm:$0xf]
    %v83 = vld [vmem:[%s0 + $0x1] sm:$0xff]
    %v84 = vld [vmem:[%s0 + $0x9] sm:$0xff]
    %v85 = vld [vmem:[%s0 + $0x11] sm:$0xff]
    %v86 = vld [vmem:[%s0 + $0x21] sm:$0xff]
    %v87 = vld [vmem:[%s0 + $0x29] sm:$0xff]
    %v88 = vld [vmem:[%s0 + $0x31] sm:$0xff]
    %s89 = scalar_lea.vmem [#allocation3], 96
    %v90 = vld [vmem:[%s89] sm:$0xff]
    %v91 = vld [vmem:[%s89 + $0x8] sm:$0xff]
    %v92 = vld [vmem:[%s89 + $0x10] sm:$0xff]
    %v93 = vld [vmem:[%s89 + $0x18] sm:$0xff]
    %v94 = vld [vmem:[%s89 + $0x20] sm:$0xff]
    %v95 = vld [vmem:[%s89 + $0x28] sm:$0xff]
    %v96 = vld [vmem:[%s89 + $0x30] sm:$0xff]
    %v97 = vld [vmem:[%s89 + $0x38] sm:$0xff]
    %v98 = vld [vmem:[%s89 + $0x40] sm:$0xff]
    %v99 = vld [vmem:[%s89 + $0x48] sm:$0xf]
    %v100 = vld [vmem:[%s89 + $0x50] sm:$0xf]
    %v101 = vld [vmem:[%s89 + $0x58] sm:$0xf]
    %vm102 = vcmask 228352
    %v104 = vsel %vm102, %v83, 0
    %v107 = vsel %vm102, %v84, 0
    %v110 = vsel %vm102, %v85, 0
    %v113 = vsel %vm102, %v86, 0
    %v116 = vsel %vm102, %v87, 0
    %v119 = vsel %vm102, %v88, 0
    %vm121 = vcmask 1043456
    %v123 = vsel %vm121, %v99, 0
    %v126 = vsel %vm121, %v100, 0
    %v129 = vsel %vm121, %v101, 0
    %131 = vmatprep.subr.mxu0 0.0
    %132 = vmatpush1.msra.mxu0 0.0
    %133 = vmatprep.subr.mxu0 0.0
    %134 = vmatpush1.msra.mxu0 0.0
    %135 = vmatprep.subr.mxu0 0.0
    %136 = vmatpush1.msra.mxu0 0.0
    %137 = vmatprep.subr.mxu0 0.0
    %138 = vmatpush1.msra.mxu0 0.0
    %139 = vmatprep.subr.mxu0 0.0
    %140 = vmatpush1.msra.mxu0 0.0
    %141 = vmatprep.subr.mxu0 0.0
    %142 = vmatpush1.msra.mxu0 0.0
    %143 = vmatprep.subr.mxu0 0.0
    %144 = vmatpush1.msra.mxu0 0.0
    %145 = vmatprep.subr.mxu0 0.0
    %146 = vmatpush1.msra.mxu0 0.0
    %147 = vmatprep.subr.mxu0 0.0
    %148 = vmatpush1.msra.mxu0 0.0
    %149 = vmatprep.subr.mxu0 0.0
    %150 = vmatpush1.msra.mxu0 0.0
    %151 = vmatprep.subr.mxu0 0.0
    %152 = vmatpush1.msra.mxu0 0.0
    %153 = vmatprep.subr.mxu0 0.0
    %154 = vmatpush1.msra.mxu0 0.0
    %155 = vmatprep.subr.mxu0 %v126
    %156 = vmatpush1.msra.mxu0 %v123
    %157 = vmatprep.subr.mxu0 %v97
    %158 = vmatpush1.msra.mxu0 %v96
    %159 = vmatprep.subr.mxu0 %v94
    %160 = vmatpush1.msra.mxu0 %v93
    %161 = vmatprep.subr.mxu0 %v91
    %162 = vmatpush1.msra.mxu0 %v90
    %163 = vmatprep.subr.mxu0 0.0
    %164 = vmatpush2.msra.mxu0 0.0
    %165 = vmatprep.subr.mxu0 0.0
    %166 = vmatpush2.msra.mxu0 0.0
    %167 = vmatprep.subr.mxu0 0.0
    %168 = vmatpush2.msra.mxu0 0.0
    %169 = vmatprep.subr.mxu0 0.0
    %170 = vmatpush2.msra.mxu0 0.0
    %171 = vmatprep.subr.mxu0 0.0
    %172 = vmatpush2.msra.mxu0 0.0
    %173 = vmatprep.subr.mxu0 0.0
    %174 = vmatpush2.msra.mxu0 0.0
    %175 = vmatprep.subr.mxu0 0.0
    %176 = vmatpush2.msra.mxu0 0.0
    %177 = vmatprep.subr.mxu0 0.0
    %178 = vmatpush2.msra.mxu0 0.0
    %179 = vmatprep.subr.mxu0 0.0
    %180 = vmatpush2.msra.mxu0 0.0
    %181 = vmatprep.subr.mxu0 0.0
    %182 = vmatpush2.msra.mxu0 0.0
    %183 = vmatprep.subr.mxu0 0.0
    %184 = vmatpush2.msra.mxu0 0.0
    %185 = vmatprep.subr.mxu0 0.0
    %186 = vmatpush2.msra.mxu0 0.0
    %187 = vmatprep.subr.mxu0 0.0
    %188 = vmatpush2.msra.mxu0 0.0
    %189 = vmatprep.subr.mxu0 0.0
    %190 = vmatpush2.msra.mxu0 0.0
    %191 = vmatprep.subr.mxu0 0.0
    %192 = vmatpush2.msra.mxu0 0.0
    %193 = vmatprep.subr.mxu0 0.0
    %194 = vmatpush2.msra.mxu0 0.0
    %195 = vmatprep.mubr.f32.mxu0 0.0
    %196 = vmatmul.mubr.f32.gmra.mxu0 %v104
    %v197 = vpop.f32.mrf.mxu0
    %v198 = vadd.f32 0.0, %v197
    %v199 = vpop.f32.mrf.mxu0
    %v200 = vadd.f32 0.0, %v199
    %201 = vmatprep.mubr.f32.mxu0 0.0
    %202 = vmatmul.mubr.f32.gmra.mxu0 %v107
    %v203 = vpop.f32.mrf.mxu0
    %v204 = vadd.f32 0.0, %v203
    %v205 = vpop.f32.mrf.mxu0
    %v206 = vadd.f32 0.0, %v205
    %207 = vmatprep.mubr.f32.mxu0 0.0
    %208 = vmatmul.mubr.f32.gmra.mxu0 %v110
    %v209 = vpop.f32.mrf.mxu0
    %v210 = vadd.f32 0.0, %v209
    %v211 = vpop.f32.mrf.mxu0
    %v212 = vadd.f32 0.0, %v211
    %213 = vmatprep.mubr.f32.mxu0 0.0
    %214 = vmatmul.mubr.f32.gmra.mxu0 %v113
    %v215 = vpop.f32.mrf.mxu0
    %v216 = vadd.f32 0.0, %v215
    %v217 = vpop.f32.mrf.mxu0
    %v218 = vadd.f32 0.0, %v217
    %219 = vmatprep.mubr.f32.mxu0 0.0
    %220 = vmatmul.mubr.f32.gmra.mxu0 %v116
    %v221 = vpop.f32.mrf.mxu0
    %v222 = vadd.f32 0.0, %v221
    %v223 = vpop.f32.mrf.mxu0
    %v224 = vadd.f32 0.0, %v223
    %225 = vmatprep.mubr.f32.mxu0 0.0
    %226 = vmatmul.mubr.f32.gmra.mxu0 %v119
    %v227 = vpop.f32.mrf.mxu0
    %v228 = vadd.f32 0.0, %v227
    %v229 = vpop.f32.mrf.mxu0
    %v230 = vadd.f32 0.0, %v229
    %231 = vdwg.mxu0
    %232 = vmatprep.subr.mxu0 0.0
    %233 = vmatpush1.msra.mxu0 0.0
    %234 = vmatprep.subr.mxu0 0.0
    %235 = vmatpush1.msra.mxu0 0.0
    %236 = vmatprep.subr.mxu0 0.0
    %237 = vmatpush1.msra.mxu0 0.0
    %238 = vmatprep.subr.mxu0 0.0
    %239 = vmatpush1.msra.mxu0 0.0
    %240 = vmatprep.subr.mxu0 0.0
    %241 = vmatpush1.msra.mxu0 0.0
    %242 = vmatprep.subr.mxu0 0.0
    %243 = vmatpush1.msra.mxu0 0.0
    %244 = vmatprep.subr.mxu0 0.0
    %245 = vmatpush1.msra.mxu0 0.0
    %246 = vmatprep.subr.mxu0 0.0
    %247 = vmatpush1.msra.mxu0 0.0
    %248 = vmatprep.subr.mxu0 0.0
    %249 = vmatpush1.msra.mxu0 0.0
    %250 = vmatprep.subr.mxu0 0.0
    %251 = vmatpush1.msra.mxu0 0.0
    %252 = vmatprep.subr.mxu0 0.0
    %253 = vmatpush1.msra.mxu0 0.0
    %254 = vmatprep.subr.mxu0 0.0
    %255 = vmatpush1.msra.mxu0 0.0
    %256 = vmatprep.subr.mxu0 0.0
    %257 = vmatpush1.msra.mxu0 %v129
    %258 = vmatprep.subr.mxu0 0.0
    %259 = vmatpush1.msra.mxu0 %v98
    %260 = vmatprep.subr.mxu0 0.0
    %261 = vmatpush1.msra.mxu0 %v95
    %262 = vmatprep.subr.mxu0 0.0
    %263 = vmatpush1.msra.mxu0 %v92
    %264 = vmatprep.subr.mxu0 0.0
    %265 = vmatpush2.msra.mxu0 0.0
    %266 = vmatprep.subr.mxu0 0.0
    %267 = vmatpush2.msra.mxu0 0.0
    %268 = vmatprep.subr.mxu0 0.0
    %269 = vmatpush2.msra.mxu0 0.0
    %270 = vmatprep.subr.mxu0 0.0
    %271 = vmatpush2.msra.mxu0 0.0
    %272 = vmatprep.subr.mxu0 0.0
    %273 = vmatpush2.msra.mxu0 0.0
    %274 = vmatprep.subr.mxu0 0.0
    %275 = vmatpush2.msra.mxu0 0.0
    %276 = vmatprep.subr.mxu0 0.0
    %277 = vmatpush2.msra.mxu0 0.0
    %278 = vmatprep.subr.mxu0 0.0
    %279 = vmatpush2.msra.mxu0 0.0
    %280 = vmatprep.subr.mxu0 0.0
    %281 = vmatpush2.msra.mxu0 0.0
    %282 = vmatprep.subr.mxu0 0.0
    %283 = vmatpush2.msra.mxu0 0.0
    %284 = vmatprep.subr.mxu0 0.0
    %285 = vmatpush2.msra.mxu0 0.0
    %286 = vmatprep.subr.mxu0 0.0
    %287 = vmatpush2.msra.mxu0 0.0
    %288 = vmatprep.subr.mxu0 0.0
    %289 = vmatpush2.msra.mxu0 0.0
    %290 = vmatprep.subr.mxu0 0.0
    %291 = vmatpush2.msra.mxu0 0.0
    %292 = vmatprep.subr.mxu0 0.0
    %293 = vmatpush2.msra.mxu0 0.0
    %294 = vmatprep.subr.mxu0 0.0
    %295 = vmatpush2.msra.mxu0 0.0
    %296 = vmatprep.mubr.f32.mxu0 0.0
    %297 = vmatmul.mubr.f32.gmra.mxu0 %v104
    %v298 = vpop.f32.mrf.mxu0
    %v299 = vadd.f32 0.0, %v298
    %v300 = vpop.f32.mrf.mxu0
    %301 = vmatprep.mubr.f32.mxu0 0.0
    %302 = vmatmul.mubr.f32.gmra.mxu0 %v107
    %v303 = vpop.f32.mrf.mxu0
    %v304 = vadd.f32 0.0, %v303
    %v305 = vpop.f32.mrf.mxu0
    %306 = vmatprep.mubr.f32.mxu0 0.0
    %307 = vmatmul.mubr.f32.gmra.mxu0 %v110
    %v308 = vpop.f32.mrf.mxu0
    %v309 = vadd.f32 0.0, %v308
    %v310 = vpop.f32.mrf.mxu0
    %311 = vmatprep.mubr.f32.mxu0 0.0
    %312 = vmatmul.mubr.f32.gmra.mxu0 %v113
    %v313 = vpop.f32.mrf.mxu0
    %v314 = vadd.f32 0.0, %v313
    %v315 = vpop.f32.mrf.mxu0
    %316 = vmatprep.mubr.f32.mxu0 0.0
    %317 = vmatmul.mubr.f32.gmra.mxu0 %v116
    %v318 = vpop.f32.mrf.mxu0
    %v319 = vadd.f32 0.0, %v318
    %v320 = vpop.f32.mrf.mxu0
    %321 = vmatprep.mubr.f32.mxu0 0.0
    %322 = vmatmul.mubr.f32.gmra.mxu0 %v119
    %v323 = vpop.f32.mrf.mxu0
    %v324 = vadd.f32 0.0, %v323
    %v325 = vpop.f32.mrf.mxu0
    %326 = vdwg.mxu0
    %v328 = vsel %vm102, %v65, 0
    %v331 = vsel %vm102, %v66, 0
    %v334 = vsel %vm102, %v67, 0
    %v337 = vsel %vm102, %v68, 0
    %v340 = vsel %vm102, %v69, 0
    %v343 = vsel %vm102, %v70, 0
    %v346 = vsel %vm121, %v80, 0
    %v349 = vsel %vm121, %v81, 0
    %v352 = vsel %vm121, %v82, 0
    %354 = vmatprep.subr.mxu0 0.0
    %355 = vmatpush1.msra.mxu0 0.0
    %356 = vmatprep.subr.mxu0 0.0
    %357 = vmatpush1.msra.mxu0 0.0
    %358 = vmatprep.subr.mxu0 0.0
    %359 = vmatpush1.msra.mxu0 0.0
    %360 = vmatprep.subr.mxu0 0.0
    %361 = vmatpush1.msra.mxu0 0.0
    %362 = vmatprep.subr.mxu0 0.0
    %363 = vmatpush1.msra.mxu0 0.0
    %364 = vmatprep.subr.mxu0 0.0
    %365 = vmatpush1.msra.mxu0 0.0
    %366 = vmatprep.subr.mxu0 0.0
    %367 = vmatpush1.msra.mxu0 0.0
    %368 = vmatprep.subr.mxu0 0.0
    %369 = vmatpush1.msra.mxu0 0.0
    %370 = vmatprep.subr.mxu0 0.0
    %371 = vmatpush1.msra.mxu0 0.0
    %372 = vmatprep.subr.mxu0 0.0
    %373 = vmatpush1.msra.mxu0 0.0
    %374 = vmatprep.subr.mxu0 0.0
    %375 = vmatpush1.msra.mxu0 0.0
    %376 = vmatprep.subr.mxu0 0.0
    %377 = vmatpush1.msra.mxu0 0.0
    %378 = vmatprep.subr.mxu0 %v349
    %379 = vmatpush1.msra.mxu0 %v346
    %380 = vmatprep.subr.mxu0 %v78
    %381 = vmatpush1.msra.mxu0 %v77
    %382 = vmatprep.subr.mxu0 %v75
    %383 = vmatpush1.msra.mxu0 %v74
    %384 = vmatprep.subr.mxu0 %v72
    %385 = vmatpush1.msra.mxu0 %v71
    %386 = vmatprep.subr.mxu0 0.0
    %387 = vmatpush2.msra.mxu0 0.0
    %388 = vmatprep.subr.mxu0 0.0
    %389 = vmatpush2.msra.mxu0 0.0
    %390 = vmatprep.subr.mxu0 0.0
    %391 = vmatpush2.msra.mxu0 0.0
    %392 = vmatprep.subr.mxu0 0.0
    %393 = vmatpush2.msra.mxu0 0.0
    %394 = vmatprep.subr.mxu0 0.0
    %395 = vmatpush2.msra.mxu0 0.0
    %396 = vmatprep.subr.mxu0 0.0
    %397 = vmatpush2.msra.mxu0 0.0
    %398 = vmatprep.subr.mxu0 0.0
    %399 = vmatpush2.msra.mxu0 0.0
    %400 = vmatprep.subr.mxu0 0.0
    %401 = vmatpush2.msra.mxu0 0.0
    %402 = vmatprep.subr.mxu0 0.0
    %403 = vmatpush2.msra.mxu0 0.0
    %404 = vmatprep.subr.mxu0 0.0
    %405 = vmatpush2.msra.mxu0 0.0
    %406 = vmatprep.subr.mxu0 0.0
    %407 = vmatpush2.msra.mxu0 0.0
    %408 = vmatprep.subr.mxu0 0.0
    %409 = vmatpush2.msra.mxu0 0.0
    %410 = vmatprep.subr.mxu0 0.0
    %411 = vmatpush2.msra.mxu0 0.0
    %412 = vmatprep.subr.mxu0 0.0
    %413 = vmatpush2.msra.mxu0 0.0
    %414 = vmatprep.subr.mxu0 0.0
    %415 = vmatpush2.msra.mxu0 0.0
    %416 = vmatprep.subr.mxu0 0.0
    %417 = vmatpush2.msra.mxu0 0.0
    %418 = vmatprep.mubr.f32.mxu0 0.0
    %419 = vmatmul.mubr.f32.gmra.mxu0 %v328
    %v420 = vpop.f32.mrf.mxu0
    %v421 = vadd.f32 %v198, %v420
    %v422 = vpop.f32.mrf.mxu0
    %v423 = vadd.f32 %v200, %v422
    %424 = vmatprep.mubr.f32.mxu0 0.0
    %425 = vmatmul.mubr.f32.gmra.mxu0 %v331
    %v426 = vpop.f32.mrf.mxu0
    %v427 = vadd.f32 %v204, %v426
    %v428 = vpop.f32.mrf.mxu0
    %v429 = vadd.f32 %v206, %v428
    %430 = vmatprep.mubr.f32.mxu0 0.0
    %431 = vmatmul.mubr.f32.gmra.mxu0 %v334
    %v432 = vpop.f32.mrf.mxu0
    %v433 = vadd.f32 %v210, %v432
    %v434 = vpop.f32.mrf.mxu0
    %v435 = vadd.f32 %v212, %v434
    %436 = vmatprep.mubr.f32.mxu0 0.0
    %437 = vmatmul.mubr.f32.gmra.mxu0 %v337
    %v438 = vpop.f32.mrf.mxu0
    %v439 = vadd.f32 %v216, %v438
    %v440 = vpop.f32.mrf.mxu0
    %v441 = vadd.f32 %v218, %v440
    %442 = vmatprep.mubr.f32.mxu0 0.0
    %443 = vmatmul.mubr.f32.gmra.mxu0 %v340
    %v444 = vpop.f32.mrf.mxu0
    %v445 = vadd.f32 %v222, %v444
    %v446 = vpop.f32.mrf.mxu0
    %v447 = vadd.f32 %v224, %v446
    %448 = vmatprep.mubr.f32.mxu0 0.0
    %449 = vmatmul.mubr.f32.gmra.mxu0 %v343
    %v450 = vpop.f32.mrf.mxu0
    %v451 = vadd.f32 %v228, %v450
    %v452 = vpop.f32.mrf.mxu0
    %v453 = vadd.f32 %v230, %v452
    %454 = vdwg.mxu0
    %455 = vmatprep.subr.mxu0 0.0
    %456 = vmatpush1.msra.mxu0 0.0
    %457 = vmatprep.subr.mxu0 0.0
    %458 = vmatpush1.msra.mxu0 0.0
    %459 = vmatprep.subr.mxu0 0.0
    %460 = vmatpush1.msra.mxu0 0.0
    %461 = vmatprep.subr.mxu0 0.0
    %462 = vmatpush1.msra.mxu0 0.0
    %463 = vmatprep.subr.mxu0 0.0
    %464 = vmatpush1.msra.mxu0 0.0
    %465 = vmatprep.subr.mxu0 0.0
    %466 = vmatpush1.msra.mxu0 0.0
    %467 = vmatprep.subr.mxu0 0.0
    %468 = vmatpush1.msra.mxu0 0.0
    %469 = vmatprep.subr.mxu0 0.0
    %470 = vmatpush1.msra.mxu0 0.0
    %471 = vmatprep.subr.mxu0 0.0
    %472 = vmatpush1.msra.mxu0 0.0
    %473 = vmatprep.subr.mxu0 0.0
    %474 = vmatpush1.msra.mxu0 0.0
    %475 = vmatprep.subr.mxu0 0.0
    %476 = vmatpush1.msra.mxu0 0.0
    %477 = vmatprep.subr.mxu0 0.0
    %478 = vmatpush1.msra.mxu0 0.0
    %479 = vmatprep.subr.mxu0 0.0
    %480 = vmatpush1.msra.mxu0 %v352
    %481 = vmatprep.subr.mxu0 0.0
    %482 = vmatpush1.msra.mxu0 %v79
    %483 = vmatprep.subr.mxu0 0.0
    %484 = vmatpush1.msra.mxu0 %v76
    %485 = vmatprep.subr.mxu0 0.0
    %486 = vmatpush1.msra.mxu0 %v73
    %487 = vmatprep.subr.mxu0 0.0
    %488 = vmatpush2.msra.mxu0 0.0
    %489 = vmatprep.subr.mxu0 0.0
    %490 = vmatpush2.msra.mxu0 0.0
    %491 = vmatprep.subr.mxu0 0.0
    %492 = vmatpush2.msra.mxu0 0.0
    %493 = vmatprep.subr.mxu0 0.0
    %494 = vmatpush2.msra.mxu0 0.0
    %495 = vmatprep.subr.mxu0 0.0
    %496 = vmatpush2.msra.mxu0 0.0
    %497 = vmatprep.subr.mxu0 0.0
    %498 = vmatpush2.msra.mxu0 0.0
    %499 = vmatprep.subr.mxu0 0.0
    %500 = vmatpush2.msra.mxu0 0.0
    %501 = vmatprep.subr.mxu0 0.0
    %502 = vmatpush2.msra.mxu0 0.0
    %503 = vmatprep.subr.mxu0 0.0
    %504 = vmatpush2.msra.mxu0 0.0
    %505 = vmatprep.subr.mxu0 0.0
    %506 = vmatpush2.msra.mxu0 0.0
    %507 = vmatprep.subr.mxu0 0.0
    %508 = vmatpush2.msra.mxu0 0.0
    %509 = vmatprep.subr.mxu0 0.0
    %510 = vmatpush2.msra.mxu0 0.0
    %511 = vmatprep.subr.mxu0 0.0
    %512 = vmatpush2.msra.mxu0 0.0
    %513 = vmatprep.subr.mxu0 0.0
    %514 = vmatpush2.msra.mxu0 0.0
    %515 = vmatprep.subr.mxu0 0.0
    %516 = vmatpush2.msra.mxu0 0.0
    %517 = vmatprep.subr.mxu0 0.0
    %518 = vmatpush2.msra.mxu0 0.0
    %519 = vmatprep.mubr.f32.mxu0 0.0
    %520 = vmatmul.mubr.f32.gmra.mxu0 %v328
    %v521 = vpop.f32.mrf.mxu0
    %v522 = vadd.f32 %v299, %v521
    %v523 = vpop.f32.mrf.mxu0
    %524 = vmatprep.mubr.f32.mxu0 0.0
    %525 = vmatmul.mubr.f32.gmra.mxu0 %v331
    %v526 = vpop.f32.mrf.mxu0
    %v527 = vadd.f32 %v304, %v526
    %v528 = vpop.f32.mrf.mxu0
    %529 = vmatprep.mubr.f32.mxu0 0.0
    %530 = vmatmul.mubr.f32.gmra.mxu0 %v334
    %v531 = vpop.f32.mrf.mxu0
    %v532 = vadd.f32 %v309, %v531
    %v533 = vpop.f32.mrf.mxu0
    %534 = vmatprep.mubr.f32.mxu0 0.0
    %535 = vmatmul.mubr.f32.gmra.mxu0 %v337
    %v536 = vpop.f32.mrf.mxu0
    %v537 = vadd.f32 %v314, %v536
    %v538 = vpop.f32.mrf.mxu0
    %539 = vmatprep.mubr.f32.mxu0 0.0
    %540 = vmatmul.mubr.f32.gmra.mxu0 %v340
    %v541 = vpop.f32.mrf.mxu0
    %v542 = vadd.f32 %v319, %v541
    %v543 = vpop.f32.mrf.mxu0
    %544 = vmatprep.mubr.f32.mxu0 0.0
    %545 = vmatmul.mubr.f32.gmra.mxu0 %v343
    %v546 = vpop.f32.mrf.mxu0
    %v547 = vadd.f32 %v324, %v546
    %v548 = vpop.f32.mrf.mxu0
    %549 = vdwg.mxu0
    %v550 = vld [vmem:[%s0 + $0x2] sm:$0xff]
    %v551 = vld [vmem:[%s0 + $0xa] sm:$0xff]
    %v552 = vld [vmem:[%s0 + $0x12] sm:$0xff]
    %v553 = vld [vmem:[%s0 + $0x22] sm:$0xff]
    %v554 = vld [vmem:[%s0 + $0x2a] sm:$0xff]
    %v555 = vld [vmem:[%s0 + $0x32] sm:$0xff]
    %s556 = scalar_lea.vmem [#allocation3], 192
    %v557 = vld [vmem:[%s556] sm:$0xff]
    %v558 = vld [vmem:[%s556 + $0x8] sm:$0xff]
    %v559 = vld [vmem:[%s556 + $0x10] sm:$0xff]
    %v560 = vld [vmem:[%s556 + $0x18] sm:$0xff]
    %v561 = vld [vmem:[%s556 + $0x20] sm:$0xff]
    %v562 = vld [vmem:[%s556 + $0x28] sm:$0xff]
    %v563 = vld [vmem:[%s556 + $0x30] sm:$0xff]
    %v564 = vld [vmem:[%s556 + $0x38] sm:$0xff]
    %v565 = vld [vmem:[%s556 + $0x40] sm:$0xff]
    %v566 = vld [vmem:[%s556 + $0x48] sm:$0xf]
    %v567 = vld [vmem:[%s556 + $0x50] sm:$0xf]
    %v568 = vld [vmem:[%s556 + $0x58] sm:$0xf]
    %v570 = vsel %vm102, %v550, 0
    %v573 = vsel %vm102, %v551, 0
    %v576 = vsel %vm102, %v552, 0
    %v579 = vsel %vm102, %v553, 0
    %v582 = vsel %vm102, %v554, 0
    %v585 = vsel %vm102, %v555, 0
    %v588 = vsel %vm121, %v566, 0
    %v591 = vsel %vm121, %v567, 0
    %v594 = vsel %vm121, %v568, 0
    %596 = vmatprep.subr.mxu0 0.0
    %597 = vmatpush1.msra.mxu0 0.0
    %598 = vmatprep.subr.mxu0 0.0
    %599 = vmatpush1.msra.mxu0 0.0
    %600 = vmatprep.subr.mxu0 0.0
    %601 = vmatpush1.msra.mxu0 0.0
    %602 = vmatprep.subr.mxu0 0.0
    %603 = vmatpush1.msra.mxu0 0.0
    %604 = vmatprep.subr.mxu0 0.0
    %605 = vmatpush1.msra.mxu0 0.0
    %606 = vmatprep.subr.mxu0 0.0
    %607 = vmatpush1.msra.mxu0 0.0
    %608 = vmatprep.subr.mxu0 0.0
    %609 = vmatpush1.msra.mxu0 0.0
    %610 = vmatprep.subr.mxu0 0.0
    %611 = vmatpush1.msra.mxu0 0.0
    %612 = vmatprep.subr.mxu0 0.0
    %613 = vmatpush1.msra.mxu0 0.0
    %614 = vmatprep.subr.mxu0 0.0
    %615 = vmatpush1.msra.mxu0 0.0
    %616 = vmatprep.subr.mxu0 0.0
    %617 = vmatpush1.msra.mxu0 0.0
    %618 = vmatprep.subr.mxu0 0.0
    %619 = vmatpush1.msra.mxu0 0.0
    %620 = vmatprep.subr.mxu0 %v591
    %621 = vmatpush1.msra.mxu0 %v588
    %622 = vmatprep.subr.mxu0 %v564
    %623 = vmatpush1.msra.mxu0 %v563
    %624 = vmatprep.subr.mxu0 %v561
    %625 = vmatpush1.msra.mxu0 %v560
    %626 = vmatprep.subr.mxu0 %v558
    %627 = vmatpush1.msra.mxu0 %v557
    %628 = vmatprep.subr.mxu0 0.0
    %629 = vmatpush2.msra.mxu0 0.0
    %630 = vmatprep.subr.mxu0 0.0
    %631 = vmatpush2.msra.mxu0 0.0
    %632 = vmatprep.subr.mxu0 0.0
    %633 = vmatpush2.msra.mxu0 0.0
    %634 = vmatprep.subr.mxu0 0.0
    %635 = vmatpush2.msra.mxu0 0.0
    %636 = vmatprep.subr.mxu0 0.0
    %637 = vmatpush2.msra.mxu0 0.0
    %638 = vmatprep.subr.mxu0 0.0
    %639 = vmatpush2.msra.mxu0 0.0
    %640 = vmatprep.subr.mxu0 0.0
    %641 = vmatpush2.msra.mxu0 0.0
    %642 = vmatprep.subr.mxu0 0.0
    %643 = vmatpush2.msra.mxu0 0.0
    %644 = vmatprep.subr.mxu0 0.0
    %645 = vmatpush2.msra.mxu0 0.0
    %646 = vmatprep.subr.mxu0 0.0
    %647 = vmatpush2.msra.mxu0 0.0
    %648 = vmatprep.subr.mxu0 0.0
    %649 = vmatpush2.msra.mxu0 0.0
    %650 = vmatprep.subr.mxu0 0.0
    %651 = vmatpush2.msra.mxu0 0.0
    %652 = vmatprep.subr.mxu0 0.0
    %653 = vmatpush2.msra.mxu0 0.0
    %654 = vmatprep.subr.mxu0 0.0
    %655 = vmatpush2.msra.mxu0 0.0
    %656 = vmatprep.subr.mxu0 0.0
    %657 = vmatpush2.msra.mxu0 0.0
    %658 = vmatprep.subr.mxu0 0.0
    %659 = vmatpush2.msra.mxu0 0.0
    %660 = vmatprep.mubr.f32.mxu0 0.0
    %661 = vmatmul.mubr.f32.gmra.mxu0 %v570
    %v662 = vpop.f32.mrf.mxu0
    %v663 = vadd.f32 0.0, %v662
    %v664 = vpop.f32.mrf.mxu0
    %v665 = vadd.f32 0.0, %v664
    %666 = vmatprep.mubr.f32.mxu0 0.0
    %667 = vmatmul.mubr.f32.gmra.mxu0 %v573
    %v668 = vpop.f32.mrf.mxu0
    %v669 = vadd.f32 0.0, %v668
    %v670 = vpop.f32.mrf.mxu0
    %v671 = vadd.f32 0.0, %v670
    %672 = vmatprep.mubr.f32.mxu0 0.0
    %673 = vmatmul.mubr.f32.gmra.mxu0 %v576
    %v674 = vpop.f32.mrf.mxu0
    %v675 = vadd.f32 0.0, %v674
    %v676 = vpop.f32.mrf.mxu0
    %v677 = vadd.f32 0.0, %v676
    %678 = vmatprep.mubr.f32.mxu0 0.0
    %679 = vmatmul.mubr.f32.gmra.mxu0 %v579
    %v680 = vpop.f32.mrf.mxu0
    %v681 = vadd.f32 0.0, %v680
    %v682 = vpop.f32.mrf.mxu0
    %v683 = vadd.f32 0.0, %v682
    %684 = vmatprep.mubr.f32.mxu0 0.0
    %685 = vmatmul.mubr.f32.gmra.mxu0 %v582
    %v686 = vpop.f32.mrf.mxu0
    %v687 = vadd.f32 0.0, %v686
    %v688 = vpop.f32.mrf.mxu0
    %v689 = vadd.f32 0.0, %v688
    %690 = vmatprep.mubr.f32.mxu0 0.0
    %691 = vmatmul.mubr.f32.gmra.mxu0 %v585
    %v692 = vpop.f32.mrf.mxu0
    %v693 = vadd.f32 0.0, %v692
    %v694 = vpop.f32.mrf.mxu0
    %v695 = vadd.f32 0.0, %v694
    %696 = vdwg.mxu0
    %697 = vmatprep.subr.mxu0 0.0
    %698 = vmatpush1.msra.mxu0 0.0
    %699 = vmatprep.subr.mxu0 0.0
    %700 = vmatpush1.msra.mxu0 0.0
    %701 = vmatprep.subr.mxu0 0.0
    %702 = vmatpush1.msra.mxu0 0.0
    %703 = vmatprep.subr.mxu0 0.0
    %704 = vmatpush1.msra.mxu0 0.0
    %705 = vmatprep.subr.mxu0 0.0
    %706 = vmatpush1.msra.mxu0 0.0
    %707 = vmatprep.subr.mxu0 0.0
    %708 = vmatpush1.msra.mxu0 0.0
    %709 = vmatprep.subr.mxu0 0.0
    %710 = vmatpush1.msra.mxu0 0.0
    %711 = vmatprep.subr.mxu0 0.0
    %712 = vmatpush1.msra.mxu0 0.0
    %713 = vmatprep.subr.mxu0 0.0
    %714 = vmatpush1.msra.mxu0 0.0
    %715 = vmatprep.subr.mxu0 0.0
    %716 = vmatpush1.msra.mxu0 0.0
    %717 = vmatprep.subr.mxu0 0.0
    %718 = vmatpush1.msra.mxu0 0.0
    %719 = vmatprep.subr.mxu0 0.0
    %720 = vmatpush1.msra.mxu0 0.0
    %721 = vmatprep.subr.mxu0 0.0
    %722 = vmatpush1.msra.mxu0 %v594
    %723 = vmatprep.subr.mxu0 0.0
    %724 = vmatpush1.msra.mxu0 %v565
    %725 = vmatprep.subr.mxu0 0.0
    %726 = vmatpush1.msra.mxu0 %v562
    %727 = vmatprep.subr.mxu0 0.0
    %728 = vmatpush1.msra.mxu0 %v559
    %729 = vmatprep.subr.mxu0 0.0
    %730 = vmatpush2.msra.mxu0 0.0
    %731 = vmatprep.subr.mxu0 0.0
    %732 = vmatpush2.msra.mxu0 0.0
    %733 = vmatprep.subr.mxu0 0.0
    %734 = vmatpush2.msra.mxu0 0.0
    %735 = vmatprep.subr.mxu0 0.0
    %736 = vmatpush2.msra.mxu0 0.0
    %737 = vmatprep.subr.mxu0 0.0
    %738 = vmatpush2.msra.mxu0 0.0
    %739 = vmatprep.subr.mxu0 0.0
    %740 = vmatpush2.msra.mxu0 0.0
    %741 = vmatprep.subr.mxu0 0.0
    %742 = vmatpush2.msra.mxu0 0.0
    %743 = vmatprep.subr.mxu0 0.0
    %744 = vmatpush2.msra.mxu0 0.0
    %745 = vmatprep.subr.mxu0 0.0
    %746 = vmatpush2.msra.mxu0 0.0
    %747 = vmatprep.subr.mxu0 0.0
    %748 = vmatpush2.msra.mxu0 0.0
    %749 = vmatprep.subr.mxu0 0.0
    %750 = vmatpush2.msra.mxu0 0.0
    %751 = vmatprep.subr.mxu0 0.0
    %752 = vmatpush2.msra.mxu0 0.0
    %753 = vmatprep.subr.mxu0 0.0
    %754 = vmatpush2.msra.mxu0 0.0
    %755 = vmatprep.subr.mxu0 0.0
    %756 = vmatpush2.msra.mxu0 0.0
    %757 = vmatprep.subr.mxu0 0.0
    %758 = vmatpush2.msra.mxu0 0.0
    %759 = vmatprep.subr.mxu0 0.0
    %760 = vmatpush2.msra.mxu0 0.0
    %761 = vmatprep.mubr.f32.mxu0 0.0
    %762 = vmatmul.mubr.f32.gmra.mxu0 %v570
    %v763 = vpop.f32.mrf.mxu0
    %v764 = vadd.f32 0.0, %v763
    %v765 = vpop.f32.mrf.mxu0
    %766 = vmatprep.mubr.f32.mxu0 0.0
    %767 = vmatmul.mubr.f32.gmra.mxu0 %v573
    %v768 = vpop.f32.mrf.mxu0
    %v769 = vadd.f32 0.0, %v768
    %v770 = vpop.f32.mrf.mxu0
    %771 = vmatprep.mubr.f32.mxu0 0.0
    %772 = vmatmul.mubr.f32.gmra.mxu0 %v576
    %v773 = vpop.f32.mrf.mxu0
    %v774 = vadd.f32 0.0, %v773
    %v775 = vpop.f32.mrf.mxu0
    %776 = vmatprep.mubr.f32.mxu0 0.0
    %777 = vmatmul.mubr.f32.gmra.mxu0 %v579
    %v778 = vpop.f32.mrf.mxu0
    %v779 = vadd.f32 0.0, %v778
    %v780 = vpop.f32.mrf.mxu0
    %781 = vmatprep.mubr.f32.mxu0 0.0
    %782 = vmatmul.mubr.f32.gmra.mxu0 %v582
    %v783 = vpop.f32.mrf.mxu0
    %v784 = vadd.f32 0.0, %v783
    %v785 = vpop.f32.mrf.mxu0
    %786 = vmatprep.mubr.f32.mxu0 0.0
    %787 = vmatmul.mubr.f32.gmra.mxu0 %v585
    %v788 = vpop.f32.mrf.mxu0
    %v789 = vadd.f32 0.0, %v788
    %v790 = vpop.f32.mrf.mxu0
    %791 = vdwg.mxu0
    %v792 = vadd.f32 %v421, %v663
    %v793 = vadd.f32 %v423, %v665
    %v794 = vadd.f32 %v522, %v764
    %v795 = vadd.f32 %v427, %v669
    %v796 = vadd.f32 %v429, %v671
    %v797 = vadd.f32 %v527, %v769
    %v798 = vadd.f32 %v433, %v675
    %v799 = vadd.f32 %v435, %v677
    %v800 = vadd.f32 %v532, %v774
    %v801 = vadd.f32 %v439, %v681
    %v802 = vadd.f32 %v441, %v683
    %v803 = vadd.f32 %v537, %v779
    %v804 = vadd.f32 %v445, %v687
    %v805 = vadd.f32 %v447, %v689
    %v806 = vadd.f32 %v542, %v784
    %v807 = vadd.f32 %v451, %v693
    %v808 = vadd.f32 %v453, %v695
    %v809 = vadd.f32 %v547, %v789
    %v810 = vld [vmem:[%s0 + $0x3] sm:$0xff]
    %v811 = vld [vmem:[%s0 + $0xb] sm:$0xff]
    %v812 = vld [vmem:[%s0 + $0x13] sm:$0xff]
    %v813 = vld [vmem:[%s0 + $0x23] sm:$0xff]
    %v814 = vld [vmem:[%s0 + $0x2b] sm:$0xff]
    %v815 = vld [vmem:[%s0 + $0x33] sm:$0xff]
    %s816 = scalar_lea.vmem [#allocation3], 288
    %v817 = vld [vmem:[%s816] sm:$0xff]
    %v818 = vld [vmem:[%s816 + $0x8] sm:$0xff]
    %v819 = vld [vmem:[%s816 + $0x10] sm:$0xff]
    %v820 = vld [vmem:[%s816 + $0x18] sm:$0xff]
    %v821 = vld [vmem:[%s816 + $0x20] sm:$0xff]
    %v822 = vld [vmem:[%s816 + $0x28] sm:$0xff]
    %v823 = vld [vmem:[%s816 + $0x30] sm:$0xff]
    %v824 = vld [vmem:[%s816 + $0x38] sm:$0xff]
    %v825 = vld [vmem:[%s816 + $0x40] sm:$0xff]
    %v826 = vld [vmem:[%s816 + $0x48] sm:$0xf]
    %v827 = vld [vmem:[%s816 + $0x50] sm:$0xf]
    %v828 = vld [vmem:[%s816 + $0x58] sm:$0xf]
    %v830 = vsel %vm102, %v810, 0
    %v833 = vsel %vm102, %v811, 0
    %v836 = vsel %vm102, %v812, 0
    %v839 = vsel %vm102, %v813, 0
    %v842 = vsel %vm102, %v814, 0
    %v845 = vsel %vm102, %v815, 0
    %v848 = vsel %vm121, %v826, 0
    %v851 = vsel %vm121, %v827, 0
    %v854 = vsel %vm121, %v828, 0
    %856 = vmatprep.subr.mxu0 0.0
    %857 = vmatpush1.msra.mxu0 0.0
    %858 = vmatprep.subr.mxu0 0.0
    %859 = vmatpush1.msra.mxu0 0.0
    %860 = vmatprep.subr.mxu0 0.0
    %861 = vmatpush1.msra.mxu0 0.0
    %862 = vmatprep.subr.mxu0 0.0
    %863 = vmatpush1.msra.mxu0 0.0
    %864 = vmatprep.subr.mxu0 0.0
    %865 = vmatpush1.msra.mxu0 0.0
    %866 = vmatprep.subr.mxu0 0.0
    %867 = vmatpush1.msra.mxu0 0.0
    %868 = vmatprep.subr.mxu0 0.0
    %869 = vmatpush1.msra.mxu0 0.0
    %870 = vmatprep.subr.mxu0 0.0
    %871 = vmatpush1.msra.mxu0 0.0
    %872 = vmatprep.subr.mxu0 0.0
    %873 = vmatpush1.msra.mxu0 0.0
    %874 = vmatprep.subr.mxu0 0.0
    %875 = vmatpush1.msra.mxu0 0.0
    %876 = vmatprep.subr.mxu0 0.0
    %877 = vmatpush1.msra.mxu0 0.0
    %878 = vmatprep.subr.mxu0 0.0
    %879 = vmatpush1.msra.mxu0 0.0
    %880 = vmatprep.subr.mxu0 %v851
    %881 = vmatpush1.msra.mxu0 %v848
    %882 = vmatprep.subr.mxu0 %v824
    %883 = vmatpush1.msra.mxu0 %v823
    %884 = vmatprep.subr.mxu0 %v821
    %885 = vmatpush1.msra.mxu0 %v820
    %886 = vmatprep.subr.mxu0 %v818
    %887 = vmatpush1.msra.mxu0 %v817
    %888 = vmatprep.subr.mxu0 0.0
    %889 = vmatpush2.msra.mxu0 0.0
    %890 = vmatprep.subr.mxu0 0.0
    %891 = vmatpush2.msra.mxu0 0.0
    %892 = vmatprep.subr.mxu0 0.0
    %893 = vmatpush2.msra.mxu0 0.0
    %894 = vmatprep.subr.mxu0 0.0
    %895 = vmatpush2.msra.mxu0 0.0
    %896 = vmatprep.subr.mxu0 0.0
    %897 = vmatpush2.msra.mxu0 0.0
    %898 = vmatprep.subr.mxu0 0.0
    %899 = vmatpush2.msra.mxu0 0.0
    %900 = vmatprep.subr.mxu0 0.0
    %901 = vmatpush2.msra.mxu0 0.0
    %902 = vmatprep.subr.mxu0 0.0
    %903 = vmatpush2.msra.mxu0 0.0
    %904 = vmatprep.subr.mxu0 0.0
    %905 = vmatpush2.msra.mxu0 0.0
    %906 = vmatprep.subr.mxu0 0.0
    %907 = vmatpush2.msra.mxu0 0.0
    %908 = vmatprep.subr.mxu0 0.0
    %909 = vmatpush2.msra.mxu0 0.0
    %910 = vmatprep.subr.mxu0 0.0
    %911 = vmatpush2.msra.mxu0 0.0
    %912 = vmatprep.subr.mxu0 0.0
    %913 = vmatpush2.msra.mxu0 0.0
    %914 = vmatprep.subr.mxu0 0.0
    %915 = vmatpush2.msra.mxu0 0.0
    %916 = vmatprep.subr.mxu0 0.0
    %917 = vmatpush2.msra.mxu0 0.0
    %918 = vmatprep.subr.mxu0 0.0
    %919 = vmatpush2.msra.mxu0 0.0
    %920 = vmatprep.mubr.f32.mxu0 0.0
    %921 = vmatmul.mubr.f32.gmra.mxu0 %v830
    %v922 = vpop.f32.mrf.mxu0
    %v923 = vadd.f32 0.0, %v922
    %v924 = vpop.f32.mrf.mxu0
    %v925 = vadd.f32 0.0, %v924
    %926 = vmatprep.mubr.f32.mxu0 0.0
    %927 = vmatmul.mubr.f32.gmra.mxu0 %v833
    %v928 = vpop.f32.mrf.mxu0
    %v929 = vadd.f32 0.0, %v928
    %v930 = vpop.f32.mrf.mxu0
    %v931 = vadd.f32 0.0, %v930
    %932 = vmatprep.mubr.f32.mxu0 0.0
    %933 = vmatmul.mubr.f32.gmra.mxu0 %v836
    %v934 = vpop.f32.mrf.mxu0
    %v935 = vadd.f32 0.0, %v934
    %v936 = vpop.f32.mrf.mxu0
    %v937 = vadd.f32 0.0, %v936
    %938 = vmatprep.mubr.f32.mxu0 0.0
    %939 = vmatmul.mubr.f32.gmra.mxu0 %v839
    %v940 = vpop.f32.mrf.mxu0
    %v941 = vadd.f32 0.0, %v940
    %v942 = vpop.f32.mrf.mxu0
    %v943 = vadd.f32 0.0, %v942
    %944 = vmatprep.mubr.f32.mxu0 0.0
    %945 = vmatmul.mubr.f32.gmra.mxu0 %v842
    %v946 = vpop.f32.mrf.mxu0
    %v947 = vadd.f32 0.0, %v946
    %v948 = vpop.f32.mrf.mxu0
    %v949 = vadd.f32 0.0, %v948
    %950 = vmatprep.mubr.f32.mxu0 0.0
    %951 = vmatmul.mubr.f32.gmra.mxu0 %v845
    %v952 = vpop.f32.mrf.mxu0
    %v953 = vadd.f32 0.0, %v952
    %v954 = vpop.f32.mrf.mxu0
    %v955 = vadd.f32 0.0, %v954
    %956 = vdwg.mxu0
    %957 = vmatprep.subr.mxu0 0.0
    %958 = vmatpush1.msra.mxu0 0.0
    %959 = vmatprep.subr.mxu0 0.0
    %960 = vmatpush1.msra.mxu0 0.0
    %961 = vmatprep.subr.mxu0 0.0
    %962 = vmatpush1.msra.mxu0 0.0
    %963 = vmatprep.subr.mxu0 0.0
    %964 = vmatpush1.msra.mxu0 0.0
    %965 = vmatprep.subr.mxu0 0.0
    %966 = vmatpush1.msra.mxu0 0.0
    %967 = vmatprep.subr.mxu0 0.0
    %968 = vmatpush1.msra.mxu0 0.0
    %969 = vmatprep.subr.mxu0 0.0
    %970 = vmatpush1.msra.mxu0 0.0
    %971 = vmatprep.subr.mxu0 0.0
    %972 = vmatpush1.msra.mxu0 0.0
    %973 = vmatprep.subr.mxu0 0.0
    %974 = vmatpush1.msra.mxu0 0.0
    %975 = vmatprep.subr.mxu0 0.0
    %976 = vmatpush1.msra.mxu0 0.0
    %977 = vmatprep.subr.mxu0 0.0
    %978 = vmatpush1.msra.mxu0 0.0
    %979 = vmatprep.subr.mxu0 0.0
    %980 = vmatpush1.msra.mxu0 0.0
    %981 = vmatprep.subr.mxu0 0.0
    %982 = vmatpush1.msra.mxu0 %v854
    %983 = vmatprep.subr.mxu0 0.0
    %984 = vmatpush1.msra.mxu0 %v825
    %985 = vmatprep.subr.mxu0 0.0
    %986 = vmatpush1.msra.mxu0 %v822
    %987 = vmatprep.subr.mxu0 0.0
    %988 = vmatpush1.msra.mxu0 %v819
    %989 = vmatprep.subr.mxu0 0.0
    %990 = vmatpush2.msra.mxu0 0.0
    %991 = vmatprep.subr.mxu0 0.0
    %992 = vmatpush2.msra.mxu0 0.0
    %993 = vmatprep.subr.mxu0 0.0
    %994 = vmatpush2.msra.mxu0 0.0
    %995 = vmatprep.subr.mxu0 0.0
    %996 = vmatpush2.msra.mxu0 0.0
    %997 = vmatprep.subr.mxu0 0.0
    %998 = vmatpush2.msra.mxu0 0.0
    %999 = vmatprep.subr.mxu0 0.0
    %1000 = vmatpush2.msra.mxu0 0.0
    %1001 = vmatprep.subr.mxu0 0.0
    %1002 = vmatpush2.msra.mxu0 0.0
    %1003 = vmatprep.subr.mxu0 0.0
    %1004 = vmatpush2.msra.mxu0 0.0
    %1005 = vmatprep.subr.mxu0 0.0
    %1006 = vmatpush2.msra.mxu0 0.0
    %1007 = vmatprep.subr.mxu0 0.0
    %1008 = vmatpush2.msra.mxu0 0.0
    %1009 = vmatprep.subr.mxu0 0.0
    %1010 = vmatpush2.msra.mxu0 0.0
    %1011 = vmatprep.subr.mxu0 0.0
    %1012 = vmatpush2.msra.mxu0 0.0
    %1013 = vmatprep.subr.mxu0 0.0
    %1014 = vmatpush2.msra.mxu0 0.0
    %1015 = vmatprep.subr.mxu0 0.0
    %1016 = vmatpush2.msra.mxu0 0.0
    %1017 = vmatprep.subr.mxu0 0.0
    %1018 = vmatpush2.msra.mxu0 0.0
    %1019 = vmatprep.subr.mxu0 0.0
    %1020 = vmatpush2.msra.mxu0 0.0
    %1021 = vmatprep.mubr.f32.mxu0 0.0
    %1022 = vmatmul.mubr.f32.gmra.mxu0 %v830
    %v1023 = vpop.f32.mrf.mxu0
    %v1024 = vadd.f32 0.0, %v1023
    %v1025 = vpop.f32.mrf.mxu0
    %1026 = vmatprep.mubr.f32.mxu0 0.0
    %1027 = vmatmul.mubr.f32.gmra.mxu0 %v833
    %v1028 = vpop.f32.mrf.mxu0
    %v1029 = vadd.f32 0.0, %v1028
    %v1030 = vpop.f32.mrf.mxu0
    %1031 = vmatprep.mubr.f32.mxu0 0.0
    %1032 = vmatmul.mubr.f32.gmra.mxu0 %v836
    %v1033 = vpop.f32.mrf.mxu0
    %v1034 = vadd.f32 0.0, %v1033
    %v1035 = vpop.f32.mrf.mxu0
    %1036 = vmatprep.mubr.f32.mxu0 0.0
    %1037 = vmatmul.mubr.f32.gmra.mxu0 %v839
    %v1038 = vpop.f32.mrf.mxu0
    %v1039 = vadd.f32 0.0, %v1038
    %v1040 = vpop.f32.mrf.mxu0
    %1041 = vmatprep.mubr.f32.mxu0 0.0
    %1042 = vmatmul.mubr.f32.gmra.mxu0 %v842
    %v1043 = vpop.f32.mrf.mxu0
    %v1044 = vadd.f32 0.0, %v1043
    %v1045 = vpop.f32.mrf.mxu0
    %1046 = vmatprep.mubr.f32.mxu0 0.0
    %1047 = vmatmul.mubr.f32.gmra.mxu0 %v845
    %v1048 = vpop.f32.mrf.mxu0
    %v1049 = vadd.f32 0.0, %v1048
    %v1050 = vpop.f32.mrf.mxu0
    %1051 = vdwg.mxu0
    %v1052 = vadd.f32 %v792, %v923
    %v1053 = vadd.f32 %v793, %v925
    %v1054 = vadd.f32 %v794, %v1024
    %v1055 = vadd.f32 %v795, %v929
    %v1056 = vadd.f32 %v796, %v931
    %v1057 = vadd.f32 %v797, %v1029
    %v1058 = vadd.f32 %v798, %v935
    %v1059 = vadd.f32 %v799, %v937
    %v1060 = vadd.f32 %v800, %v1034
    %v1061 = vadd.f32 %v801, %v941
    %v1062 = vadd.f32 %v802, %v943
    %v1063 = vadd.f32 %v803, %v1039
    %v1064 = vadd.f32 %v804, %v947
    %v1065 = vadd.f32 %v805, %v949
    %v1066 = vadd.f32 %v806, %v1044
    %v1067 = vadd.f32 %v807, %v953
    %v1068 = vadd.f32 %v808, %v955
    %v1069 = vadd.f32 %v809, %v1049
    %v1070 = vld [vmem:[%s0 + $0x4] sm:$0xff]
    %v1071 = vld [vmem:[%s0 + $0xc] sm:$0xff]
    %v1072 = vld [vmem:[%s0 + $0x14] sm:$0xff]
    %v1073 = vld [vmem:[%s0 + $0x24] sm:$0xff]
    %v1074 = vld [vmem:[%s0 + $0x2c] sm:$0xff]
    %v1075 = vld [vmem:[%s0 + $0x34] sm:$0xff]
    %s1076 = scalar_lea.vmem [#allocation3], 384
    %v1077 = vld [vmem:[%s1076] sm:$0xff]
    %v1078 = vld [vmem:[%s1076 + $0x8] sm:$0xff]
    %v1079 = vld [vmem:[%s1076 + $0x10] sm:$0xff]
    %v1080 = vld [vmem:[%s1076 + $0x18] sm:$0xff]
    %v1081 = vld [vmem:[%s1076 + $0x20] sm:$0xff]
    %v1082 = vld [vmem:[%s1076 + $0x28] sm:$0xff]
    %v1083 = vld [vmem:[%s1076 + $0x30] sm:$0xff]
    %v1084 = vld [vmem:[%s1076 + $0x38] sm:$0xff]
    %v1085 = vld [vmem:[%s1076 + $0x40] sm:$0xff]
    %v1086 = vld [vmem:[%s1076 + $0x48] sm:$0xf]
    %v1087 = vld [vmem:[%s1076 + $0x50] sm:$0xf]
    %v1088 = vld [vmem:[%s1076 + $0x58] sm:$0xf]
    %v1090 = vsel %vm102, %v1070, 0
    %v1093 = vsel %vm102, %v1071, 0
    %v1096 = vsel %vm102, %v1072, 0
    %v1099 = vsel %vm102, %v1073, 0
    %v1102 = vsel %vm102, %v1074, 0
    %v1105 = vsel %vm102, %v1075, 0
    %v1108 = vsel %vm121, %v1086, 0
    %v1111 = vsel %vm121, %v1087, 0
    %v1114 = vsel %vm121, %v1088, 0
    %1116 = vmatprep.subr.mxu0 0.0
    %1117 = vmatpush1.msra.mxu0 0.0
    %1118 = vmatprep.subr.mxu0 0.0
    %1119 = vmatpush1.msra.mxu0 0.0
    %1120 = vmatprep.subr.mxu0 0.0
    %1121 = vmatpush1.msra.mxu0 0.0
    %1122 = vmatprep.subr.mxu0 0.0
    %1123 = vmatpush1.msra.mxu0 0.0
    %1124 = vmatprep.subr.mxu0 0.0
    %1125 = vmatpush1.msra.mxu0 0.0
    %1126 = vmatprep.subr.mxu0 0.0
    %1127 = vmatpush1.msra.mxu0 0.0
    %1128 = vmatprep.subr.mxu0 0.0
    %1129 = vmatpush1.msra.mxu0 0.0
    %1130 = vmatprep.subr.mxu0 0.0
    %1131 = vmatpush1.msra.mxu0 0.0
    %1132 = vmatprep.subr.mxu0 0.0
    %1133 = vmatpush1.msra.mxu0 0.0
    %1134 = vmatprep.subr.mxu0 0.0
    %1135 = vmatpush1.msra.mxu0 0.0
    %1136 = vmatprep.subr.mxu0 0.0
    %1137 = vmatpush1.msra.mxu0 0.0
    %1138 = vmatprep.subr.mxu0 0.0
    %1139 = vmatpush1.msra.mxu0 0.0
    %1140 = vmatprep.subr.mxu0 %v1111
    %1141 = vmatpush1.msra.mxu0 %v1108
    %1142 = vmatprep.subr.mxu0 %v1084
    %1143 = vmatpush1.msra.mxu0 %v1083
    %1144 = vmatprep.subr.mxu0 %v1081
    %1145 = vmatpush1.msra.mxu0 %v1080
    %1146 = vmatprep.subr.mxu0 %v1078
    %1147 = vmatpush1.msra.mxu0 %v1077
    %1148 = vmatprep.subr.mxu0 0.0
    %1149 = vmatpush2.msra.mxu0 0.0
    %1150 = vmatprep.subr.mxu0 0.0
    %1151 = vmatpush2.msra.mxu0 0.0
    %1152 = vmatprep.subr.mxu0 0.0
    %1153 = vmatpush2.msra.mxu0 0.0
    %1154 = vmatprep.subr.mxu0 0.0
    %1155 = vmatpush2.msra.mxu0 0.0
    %1156 = vmatprep.subr.mxu0 0.0
    %1157 = vmatpush2.msra.mxu0 0.0
    %1158 = vmatprep.subr.mxu0 0.0
    %1159 = vmatpush2.msra.mxu0 0.0
    %1160 = vmatprep.subr.mxu0 0.0
    %1161 = vmatpush2.msra.mxu0 0.0
    %1162 = vmatprep.subr.mxu0 0.0
    %1163 = vmatpush2.msra.mxu0 0.0
    %1164 = vmatprep.subr.mxu0 0.0
    %1165 = vmatpush2.msra.mxu0 0.0
    %1166 = vmatprep.subr.mxu0 0.0
    %1167 = vmatpush2.msra.mxu0 0.0
    %1168 = vmatprep.subr.mxu0 0.0
    %1169 = vmatpush2.msra.mxu0 0.0
    %1170 = vmatprep.subr.mxu0 0.0
    %1171 = vmatpush2.msra.mxu0 0.0
    %1172 = vmatprep.subr.mxu0 0.0
    %1173 = vmatpush2.msra.mxu0 0.0
    %1174 = vmatprep.subr.mxu0 0.0
    %1175 = vmatpush2.msra.mxu0 0.0
    %1176 = vmatprep.subr.mxu0 0.0
    %1177 = vmatpush2.msra.mxu0 0.0
    %1178 = vmatprep.subr.mxu0 0.0
    %1179 = vmatpush2.msra.mxu0 0.0
    %1180 = vmatprep.mubr.f32.mxu0 0.0
    %1181 = vmatmul.mubr.f32.gmra.mxu0 %v1090
    %v1182 = vpop.f32.mrf.mxu0
    %v1183 = vadd.f32 0.0, %v1182
    %v1184 = vpop.f32.mrf.mxu0
    %v1185 = vadd.f32 0.0, %v1184
    %1186 = vmatprep.mubr.f32.mxu0 0.0
    %1187 = vmatmul.mubr.f32.gmra.mxu0 %v1093
    %v1188 = vpop.f32.mrf.mxu0
    %v1189 = vadd.f32 0.0, %v1188
    %v1190 = vpop.f32.mrf.mxu0
    %v1191 = vadd.f32 0.0, %v1190
    %1192 = vmatprep.mubr.f32.mxu0 0.0
    %1193 = vmatmul.mubr.f32.gmra.mxu0 %v1096
    %v1194 = vpop.f32.mrf.mxu0
    %v1195 = vadd.f32 0.0, %v1194
    %v1196 = vpop.f32.mrf.mxu0
    %v1197 = vadd.f32 0.0, %v1196
    %1198 = vmatprep.mubr.f32.mxu0 0.0
    %1199 = vmatmul.mubr.f32.gmra.mxu0 %v1099
    %v1200 = vpop.f32.mrf.mxu0
    %v1201 = vadd.f32 0.0, %v1200
    %v1202 = vpop.f32.mrf.mxu0
    %v1203 = vadd.f32 0.0, %v1202
    %1204 = vmatprep.mubr.f32.mxu0 0.0
    %1205 = vmatmul.mubr.f32.gmra.mxu0 %v1102
    %v1206 = vpop.f32.mrf.mxu0
    %v1207 = vadd.f32 0.0, %v1206
    %v1208 = vpop.f32.mrf.mxu0
    %v1209 = vadd.f32 0.0, %v1208
    %1210 = vmatprep.mubr.f32.mxu0 0.0
    %1211 = vmatmul.mubr.f32.gmra.mxu0 %v1105
    %v1212 = vpop.f32.mrf.mxu0
    %v1213 = vadd.f32 0.0, %v1212
    %v1214 = vpop.f32.mrf.mxu0
    %v1215 = vadd.f32 0.0, %v1214
    %1216 = vdwg.mxu0
    %1217 = vmatprep.subr.mxu0 0.0
    %1218 = vmatpush1.msra.mxu0 0.0
    %1219 = vmatprep.subr.mxu0 0.0
    %1220 = vmatpush1.msra.mxu0 0.0
    %1221 = vmatprep.subr.mxu0 0.0
    %1222 = vmatpush1.msra.mxu0 0.0
    %1223 = vmatprep.subr.mxu0 0.0
    %1224 = vmatpush1.msra.mxu0 0.0
    %1225 = vmatprep.subr.mxu0 0.0
    %1226 = vmatpush1.msra.mxu0 0.0
    %1227 = vmatprep.subr.mxu0 0.0
    %1228 = vmatpush1.msra.mxu0 0.0
    %1229 = vmatprep.subr.mxu0 0.0
    %1230 = vmatpush1.msra.mxu0 0.0
    %1231 = vmatprep.subr.mxu0 0.0
    %1232 = vmatpush1.msra.mxu0 0.0
    %1233 = vmatprep.subr.mxu0 0.0
    %1234 = vmatpush1.msra.mxu0 0.0
    %1235 = vmatprep.subr.mxu0 0.0
    %1236 = vmatpush1.msra.mxu0 0.0
    %1237 = vmatprep.subr.mxu0 0.0
    %1238 = vmatpush1.msra.mxu0 0.0
    %1239 = vmatprep.subr.mxu0 0.0
    %1240 = vmatpush1.msra.mxu0 0.0
    %1241 = vmatprep.subr.mxu0 0.0
    %1242 = vmatpush1.msra.mxu0 %v1114
    %1243 = vmatprep.subr.mxu0 0.0
    %1244 = vmatpush1.msra.mxu0 %v1085
    %1245 = vmatprep.subr.mxu0 0.0
    %1246 = vmatpush1.msra.mxu0 %v1082
    %1247 = vmatprep.subr.mxu0 0.0
    %1248 = vmatpush1.msra.mxu0 %v1079
    %1249 = vmatprep.subr.mxu0 0.0
    %1250 = vmatpush2.msra.mxu0 0.0
    %1251 = vmatprep.subr.mxu0 0.0
    %1252 = vmatpush2.msra.mxu0 0.0
    %1253 = vmatprep.subr.mxu0 0.0
    %1254 = vmatpush2.msra.mxu0 0.0
    %1255 = vmatprep.subr.mxu0 0.0
    %1256 = vmatpush2.msra.mxu0 0.0
    %1257 = vmatprep.subr.mxu0 0.0
    %1258 = vmatpush2.msra.mxu0 0.0
    %1259 = vmatprep.subr.mxu0 0.0
    %1260 = vmatpush2.msra.mxu0 0.0
    %1261 = vmatprep.subr.mxu0 0.0
    %1262 = vmatpush2.msra.mxu0 0.0
    %1263 = vmatprep.subr.mxu0 0.0
    %1264 = vmatpush2.msra.mxu0 0.0
    %1265 = vmatprep.subr.mxu0 0.0
    %1266 = vmatpush2.msra.mxu0 0.0
    %1267 = vmatprep.subr.mxu0 0.0
    %1268 = vmatpush2.msra.mxu0 0.0
    %1269 = vmatprep.subr.mxu0 0.0
    %1270 = vmatpush2.msra.mxu0 0.0
    %1271 = vmatprep.subr.mxu0 0.0
    %1272 = vmatpush2.msra.mxu0 0.0
    %1273 = vmatprep.subr.mxu0 0.0
    %1274 = vmatpush2.msra.mxu0 0.0
    %1275 = vmatprep.subr.mxu0 0.0
    %1276 = vmatpush2.msra.mxu0 0.0
    %1277 = vmatprep.subr.mxu0 0.0
    %1278 = vmatpush2.msra.mxu0 0.0
    %1279 = vmatprep.subr.mxu0 0.0
    %1280 = vmatpush2.msra.mxu0 0.0
    %1281 = vmatprep.mubr.f32.mxu0 0.0
    %1282 = vmatmul.mubr.f32.gmra.mxu0 %v1090
    %v1283 = vpop.f32.mrf.mxu0
    %v1284 = vadd.f32 0.0, %v1283
    %v1285 = vpop.f32.mrf.mxu0
    %1286 = vmatprep.mubr.f32.mxu0 0.0
    %1287 = vmatmul.mubr.f32.gmra.mxu0 %v1093
    %v1288 = vpop.f32.mrf.mxu0
    %v1289 = vadd.f32 0.0, %v1288
    %v1290 = vpop.f32.mrf.mxu0
    %1291 = vmatprep.mubr.f32.mxu0 0.0
    %1292 = vmatmul.mubr.f32.gmra.mxu0 %v1096
    %v1293 = vpop.f32.mrf.mxu0
    %v1294 = vadd.f32 0.0, %v1293
    %v1295 = vpop.f32.mrf.mxu0
    %1296 = vmatprep.mubr.f32.mxu0 0.0
    %1297 = vmatmul.mubr.f32.gmra.mxu0 %v1099
    %v1298 = vpop.f32.mrf.mxu0
    %v1299 = vadd.f32 0.0, %v1298
    %v1300 = vpop.f32.mrf.mxu0
    %1301 = vmatprep.mubr.f32.mxu0 0.0
    %1302 = vmatmul.mubr.f32.gmra.mxu0 %v1102
    %v1303 = vpop.f32.mrf.mxu0
    %v1304 = vadd.f32 0.0, %v1303
    %v1305 = vpop.f32.mrf.mxu0
    %1306 = vmatprep.mubr.f32.mxu0 0.0
    %1307 = vmatmul.mubr.f32.gmra.mxu0 %v1105
    %v1308 = vpop.f32.mrf.mxu0
    %v1309 = vadd.f32 0.0, %v1308
    %v1310 = vpop.f32.mrf.mxu0
    %1311 = vdwg.mxu0
    %v1312 = vadd.f32 %v1052, %v1183
    %v1313 = vadd.f32 %v1053, %v1185
    %v1314 = vadd.f32 %v1054, %v1284
    %v1315 = vadd.f32 %v1055, %v1189
    %v1316 = vadd.f32 %v1056, %v1191
    %v1317 = vadd.f32 %v1057, %v1289
    %v1318 = vadd.f32 %v1058, %v1195
    %v1319 = vadd.f32 %v1059, %v1197
    %v1320 = vadd.f32 %v1060, %v1294
    %v1321 = vadd.f32 %v1061, %v1201
    %v1322 = vadd.f32 %v1062, %v1203
    %v1323 = vadd.f32 %v1063, %v1299
    %v1324 = vadd.f32 %v1064, %v1207
    %v1325 = vadd.f32 %v1065, %v1209
    %v1326 = vadd.f32 %v1066, %v1304
    %v1327 = vadd.f32 %v1067, %v1213
    %v1328 = vadd.f32 %v1068, %v1215
    %v1329 = vadd.f32 %v1069, %v1309
    %1342 = vrot.lane.b32.xlu0 %v1313, 64
    %v1343 = vpop.permute.xlu0 %1342
    %1344 = vrot.lane.b32.xlu0 %v1314, 64
    %v1345 = vpop.permute.xlu0 %1344
    %1346 = vrot.lane.b32.xlu0 %v1316, 64
    %v1347 = vpop.permute.xlu0 %1346
    %1348 = vrot.lane.b32.xlu0 %v1317, 64
    %v1349 = vpop.permute.xlu0 %1348
    %1350 = vrot.lane.b32.xlu0 %v1319, 64
    %v1351 = vpop.permute.xlu0 %1350
    %1352 = vrot.lane.b32.xlu0 %v1320, 64
    %v1353 = vpop.permute.xlu0 %1352
    %1354 = vrot.lane.b32.xlu0 %v1322, 64
    %v1355 = vpop.permute.xlu0 %1354
    %1356 = vrot.lane.b32.xlu0 %v1323, 64
    %v1357 = vpop.permute.xlu0 %1356
    %1358 = vrot.lane.b32.xlu0 %v1325, 64
    %v1359 = vpop.permute.xlu0 %1358
    %1360 = vrot.lane.b32.xlu0 %v1326, 64
    %v1361 = vpop.permute.xlu0 %1360
    %1362 = vrot.lane.b32.xlu0 %v1328, 64
    %v1363 = vpop.permute.xlu0 %1362
    %1364 = vrot.lane.b32.xlu0 %v1329, 64
    %v1365 = vpop.permute.xlu0 %1364
    %vm1366 = vcmask 523264
    %v1367 = vsel %vm1366, %v1343, %v1345
    %v1368 = vsel %vm1366, %v1347, %v1349
    %v1369 = vsel %vm1366, %v1351, %v1353
    %v1370 = vsel %vm1366, %v1355, %v1357
    %v1371 = vsel %vm1366, %v1359, %v1361
    %v1372 = vsel %vm1366, %v1363, %v1365
    %v1385 = vmax.f32 %v1312, %v1367
    %v1386 = vmax.f32 %v1313, %v1345
    %v1387 = vmax.f32 %v1315, %v1368
    %v1388 = vmax.f32 %v1316, %v1349
    %v1389 = vmax.f32 %v1318, %v1369
    %v1390 = vmax.f32 %v1319, %v1353
    %v1391 = vmax.f32 %v1321, %v1370
    %v1392 = vmax.f32 %v1322, %v1357
    %v1393 = vmax.f32 %v1324, %v1371
    %v1394 = vmax.f32 %v1325, %v1361
    %v1395 = vmax.f32 %v1327, %v1372
    %v1396 = vmax.f32 %v1328, %v1365
    %v1397 = vld [vmem:[%s2] sm:$0x3]
    %v1399 = vlaneseq
    %v1400 = vshrl.u32 %v1399, 7
    %v1401 = vsub.s32 0, %v1400
    %v1402 = vrot.slane %v1397, %v1401
    %v1403 = vlaneseq
    %v1404 = vshrl.u32 %v1403, 7
    %v1405 = vsub.s32 1, %v1404
    %v1406 = vrot.slane %v1397, %v1405
    %v1409 = vadd.f32 %v1385, %v1402
    %v1410 = vadd.f32 %v1386, %v1406
    %v1411 = vadd.f32 %v1387, %v1402
    %v1412 = vadd.f32 %v1388, %v1406
    %v1413 = vadd.f32 %v1389, %v1402
    %v1414 = vadd.f32 %v1390, %v1406
    %v1415 = vadd.f32 %v1391, %v1402
    %v1416 = vadd.f32 %v1392, %v1406
    %v1417 = vadd.f32 %v1393, %v1402
    %v1418 = vadd.f32 %v1394, %v1406
    %v1419 = vadd.f32 %v1395, %v1402
    %v1420 = vadd.f32 %v1396, %v1406
    %v1425 = vrot.slane %v1409, 1
    %v1426 = vrot.slane %v1410, 1
    %v1427 = vrot.slane %v1415, 1
    %v1428 = vrot.slane %v1416, 1
    %v1433 = vmax.f32 %v1409, %v1425
    %v1434 = vmax.f32 %v1410, %v1426
    %v1435 = vmax.f32 %v1415, %v1427
    %v1436 = vmax.f32 %v1416, %v1428
    %v1437 = vmax.f32 %v1433, 0.0
    %v1438 = vmax.f32 %v1434, 0.0
    %v1439 = vmax.f32 %v1435, 0.0
    %v1440 = vmax.f32 %v1436, 0.0
    %v1445 = vcombine.low %v1437, %v1438
    %v1447 = vunpack.c.l.s4 1966171168
    %v1448 = vunpack.c.0.s8 %v1447
    %v1449 = vlaneseq
    %v1450 = vshrl.u32 %v1449, 7
    %v1451 = vsub.s32 %v1448, %v1450
    %v1452 = vrot.slane %v1445, %v1451
    %v1454 = vunpack.c.l.s4 1966171168
    %v1455 = vunpack.c.0.s8 %v1454
    %v1456 = vlaneseq
    %v1457 = vshrl.u32 %v1456, 7
    %v1458 = vsub.s32 %v1455, %v1457
    %v1459 = vrot.slane %v1452, %v1458
    %v1460 = vcombine.low %v1439, %v1440
    %v1462 = vunpack.c.l.s4 1966171168
    %v1463 = vunpack.c.0.s8 %v1462
    %v1464 = vlaneseq
    %v1465 = vshrl.u32 %v1464, 7
    %v1466 = vsub.s32 %v1463, %v1465
    %v1467 = vrot.slane %v1460, %v1466
    %v1469 = vunpack.c.l.s4 1966171168
    %v1470 = vunpack.c.0.s8 %v1469
    %v1471 = vlaneseq
    %v1472 = vshrl.u32 %v1471, 7
    %v1473 = vsub.s32 %v1470, %v1472
    %v1474 = vrot.slane %v1467, %v1473
    %v1477 = vlaneseq
    %vm1478 = vcmp.ge.s32.totalorder %v1477, 0
    %vm1479 = vcmp.lt.s32.totalorder %v1477, 192
    %vm1480 = vmand %vm1478, %vm1479
    %1481 = vst.msk [vmem:[#allocation2] ss:$8 sm:$0x3] %vm1480, %v1459
    %1482 = vst.msk [vmem:[#allocation2] ss:$8 sm:$0x0] %vm1480, %v1459
    %s1483 = scalar_lea.vmem [#allocation2], 32
    %1484 = vst.msk [vmem:[%s1483] ss:$8 sm:$0x3] %vm1480, %v1474
    %1485 = vst.msk [vmem:[%s1483] ss:$8 sm:$0x0] %vm1480, %v1474
    %v1486 = vcombine.high %v1459, %v1459
    %v1487 = vcombine.high %v1474, %v1474
    %s1490 = scalar_lea.vmem [#allocation2], 1
    %1491 = vst.msk [vmem:[%s1490] ss:$8 sm:$0x3] %vm1480, %v1486
    %1492 = vst.msk [vmem:[%s1490] ss:$8 sm:$0x0] %vm1480, %v1486
    %s1493 = scalar_lea.vmem [#allocation2], 33
    %1494 = vst.msk [vmem:[%s1493] ss:$8 sm:$0x3] %vm1480, %v1487
    %1495 = vst.msk [vmem:[%s1493] ss:$8 sm:$0x0] %vm1480, %v1487
    %v1496 = vcombine.high %v1437, %v1438
    %v1498 = vunpack.c.l.s4 1966171168
    %v1499 = vunpack.c.0.s8 %v1498
    %v1500 = vlaneseq
    %v1501 = vshrl.u32 %v1500, 7
    %v1502 = vsub.s32 %v1499, %v1501
    %v1503 = vrot.slane %v1496, %v1502
    %v1505 = vunpack.c.l.s4 1966171168
    %v1506 = vunpack.c.0.s8 %v1505
    %v1507 = vlaneseq
    %v1508 = vshrl.u32 %v1507, 7
    %v1509 = vsub.s32 %v1506, %v1508
    %v1510 = vrot.slane %v1503, %v1509
    %v1511 = vcombine.high %v1439, %v1440
    %v1513 = vunpack.c.l.s4 1966171168
    %v1514 = vunpack.c.0.s8 %v1513
    %v1515 = vlaneseq
    %v1516 = vshrl.u32 %v1515, 7
    %v1517 = vsub.s32 %v1514, %v1516
    %v1518 = vrot.slane %v1511, %v1517
    %v1520 = vunpack.c.l.s4 1966171168
    %v1521 = vunpack.c.0.s8 %v1520
    %v1522 = vlaneseq
    %v1523 = vshrl.u32 %v1522, 7
    %v1524 = vsub.s32 %v1521, %v1523
    %v1525 = vrot.slane %v1518, %v1524
    %s1528 = scalar_lea.vmem [#allocation2], 2
    %1529 = vst.msk [vmem:[%s1528] ss:$8 sm:$0x3] %vm1480, %v1510
    %1530 = vst.msk [vmem:[%s1528] ss:$8 sm:$0x0] %vm1480, %v1510
    %s1531 = scalar_lea.vmem [#allocation2], 34
    %1532 = vst.msk [vmem:[%s1531] ss:$8 sm:$0x3] %vm1480, %v1525
    %1533 = vst.msk [vmem:[%s1531] ss:$8 sm:$0x0] %vm1480, %v1525
    %v1534 = vcombine.high %v1510, %v1510
    %v1535 = vcombine.high %v1525, %v1525
    %s1538 = scalar_lea.vmem [#allocation2], 3
    %1539 = vst.msk [vmem:[%s1538] ss:$8 sm:$0x3] %vm1480, %v1534
    %1540 = vst.msk [vmem:[%s1538] ss:$8 sm:$0x0] %vm1480, %v1534
    %s1541 = scalar_lea.vmem [#allocation2], 35
    %1542 = vst.msk [vmem:[%s1541] ss:$8 sm:$0x3] %vm1480, %v1535
    %1543 = vst.msk [vmem:[%s1541] ss:$8 sm:$0x0] %vm1480, %v1535
    %v1548 = vrot.slane %v1411, 1
    %v1549 = vrot.slane %v1412, 1
    %v1550 = vrot.slane %v1417, 1
    %v1551 = vrot.slane %v1418, 1
    %v1556 = vmax.f32 %v1411, %v1548
    %v1557 = vmax.f32 %v1412, %v1549
    %v1558 = vmax.f32 %v1417, %v1550
    %v1559 = vmax.f32 %v1418, %v1551
    %v1560 = vmax.f32 %v1556, 0.0
    %v1561 = vmax.f32 %v1557, 0.0
    %v1562 = vmax.f32 %v1558, 0.0
    %v1563 = vmax.f32 %v1559, 0.0
    %v1568 = vcombine.low %v1560, %v1561
    %v1570 = vunpack.c.l.s4 1966171168
    %v1571 = vunpack.c.0.s8 %v1570
    %v1572 = vlaneseq
    %v1573 = vshrl.u32 %v1572, 7
    %v1574 = vsub.s32 %v1571, %v1573
    %v1575 = vrot.slane %v1568, %v1574
    %v1577 = vunpack.c.l.s4 1966171168
    %v1578 = vunpack.c.0.s8 %v1577
    %v1579 = vlaneseq
    %v1580 = vshrl.u32 %v1579, 7
    %v1581 = vsub.s32 %v1578, %v1580
    %v1582 = vrot.slane %v1575, %v1581
    %v1583 = vcombine.low %v1562, %v1563
    %v1585 = vunpack.c.l.s4 1966171168
    %v1586 = vunpack.c.0.s8 %v1585
    %v1587 = vlaneseq
    %v1588 = vshrl.u32 %v1587, 7
    %v1589 = vsub.s32 %v1586, %v1588
    %v1590 = vrot.slane %v1583, %v1589
    %v1592 = vunpack.c.l.s4 1966171168
    %v1593 = vunpack.c.0.s8 %v1592
    %v1594 = vlaneseq
    %v1595 = vshrl.u32 %v1594, 7
    %v1596 = vsub.s32 %v1593, %v1595
    %v1597 = vrot.slane %v1590, %v1596
    %s1600 = scalar_lea.vmem [#allocation2], 4
    %1601 = vst.msk [vmem:[%s1600] ss:$8 sm:$0x3] %vm1480, %v1582
    %1602 = vst.msk [vmem:[%s1600] ss:$8 sm:$0x0] %vm1480, %v1582
    %s1603 = scalar_lea.vmem [#allocation2], 36
    %1604 = vst.msk [vmem:[%s1603] ss:$8 sm:$0x3] %vm1480, %v1597
    %1605 = vst.msk [vmem:[%s1603] ss:$8 sm:$0x0] %vm1480, %v1597
    %v1606 = vcombine.high %v1582, %v1582
    %v1607 = vcombine.high %v1597, %v1597
    %s1610 = scalar_lea.vmem [#allocation2], 5
    %1611 = vst.msk [vmem:[%s1610] ss:$8 sm:$0x3] %vm1480, %v1606
    %1612 = vst.msk [vmem:[%s1610] ss:$8 sm:$0x0] %vm1480, %v1606
    %s1613 = scalar_lea.vmem [#allocation2], 37
    %1614 = vst.msk [vmem:[%s1613] ss:$8 sm:$0x3] %vm1480, %v1607
    %1615 = vst.msk [vmem:[%s1613] ss:$8 sm:$0x0] %vm1480, %v1607
    %v1616 = vcombine.high %v1560, %v1561
    %v1618 = vunpack.c.l.s4 1966171168
    %v1619 = vunpack.c.0.s8 %v1618
    %v1620 = vlaneseq
    %v1621 = vshrl.u32 %v1620, 7
    %v1622 = vsub.s32 %v1619, %v1621
    %v1623 = vrot.slane %v1616, %v1622
    %v1625 = vunpack.c.l.s4 1966171168
    %v1626 = vunpack.c.0.s8 %v1625
    %v1627 = vlaneseq
    %v1628 = vshrl.u32 %v1627, 7
    %v1629 = vsub.s32 %v1626, %v1628
    %v1630 = vrot.slane %v1623, %v1629
    %v1631 = vcombine.high %v1562, %v1563
    %v1633 = vunpack.c.l.s4 1966171168
    %v1634 = vunpack.c.0.s8 %v1633
    %v1635 = vlaneseq
    %v1636 = vshrl.u32 %v1635, 7
    %v1637 = vsub.s32 %v1634, %v1636
    %v1638 = vrot.slane %v1631, %v1637
    %v1640 = vunpack.c.l.s4 1966171168
    %v1641 = vunpack.c.0.s8 %v1640
    %v1642 = vlaneseq
    %v1643 = vshrl.u32 %v1642, 7
    %v1644 = vsub.s32 %v1641, %v1643
    %v1645 = vrot.slane %v1638, %v1644
    %s1648 = scalar_lea.vmem [#allocation2], 6
    %1649 = vst.msk [vmem:[%s1648] ss:$8 sm:$0x3] %vm1480, %v1630
    %1650 = vst.msk [vmem:[%s1648] ss:$8 sm:$0x0] %vm1480, %v1630
    %s1651 = scalar_lea.vmem [#allocation2], 38
    %1652 = vst.msk [vmem:[%s1651] ss:$8 sm:$0x3] %vm1480, %v1645
    %1653 = vst.msk [vmem:[%s1651] ss:$8 sm:$0x0] %vm1480, %v1645
    %v1654 = vcombine.high %v1630, %v1630
    %v1655 = vcombine.high %v1645, %v1645
    %s1658 = scalar_lea.vmem [#allocation2], 7
    %1659 = vst.msk [vmem:[%s1658] ss:$8 sm:$0x3] %vm1480, %v1654
    %1660 = vst.msk [vmem:[%s1658] ss:$8 sm:$0x0] %vm1480, %v1654
    %s1661 = scalar_lea.vmem [#allocation2], 39
    %1662 = vst.msk [vmem:[%s1661] ss:$8 sm:$0x3] %vm1480, %v1655
    %1663 = vst.msk [vmem:[%s1661] ss:$8 sm:$0x0] %vm1480, %v1655
    %v1668 = vrot.slane %v1413, 1
    %v1669 = vrot.slane %v1414, 1
    %v1670 = vrot.slane %v1419, 1
    %v1671 = vrot.slane %v1420, 1
    %v1676 = vmax.f32 %v1413, %v1668
    %v1677 = vmax.f32 %v1414, %v1669
    %v1678 = vmax.f32 %v1419, %v1670
    %v1679 = vmax.f32 %v1420, %v1671
    %v1680 = vmax.f32 %v1676, 0.0
    %v1681 = vmax.f32 %v1677, 0.0
    %v1682 = vmax.f32 %v1678, 0.0
    %v1683 = vmax.f32 %v1679, 0.0
    %v1688 = vcombine.low %v1680, %v1681
    %v1690 = vunpack.c.l.s4 1966171168
    %v1691 = vunpack.c.0.s8 %v1690
    %v1692 = vlaneseq
    %v1693 = vshrl.u32 %v1692, 7
    %v1694 = vsub.s32 %v1691, %v1693
    %v1695 = vrot.slane %v1688, %v1694
    %v1697 = vunpack.c.l.s4 1966171168
    %v1698 = vunpack.c.0.s8 %v1697
    %v1699 = vlaneseq
    %v1700 = vshrl.u32 %v1699, 7
    %v1701 = vsub.s32 %v1698, %v1700
    %v1702 = vrot.slane %v1695, %v1701
    %v1703 = vcombine.low %v1682, %v1683
    %v1705 = vunpack.c.l.s4 1966171168
    %v1706 = vunpack.c.0.s8 %v1705
    %v1707 = vlaneseq
    %v1708 = vshrl.u32 %v1707, 7
    %v1709 = vsub.s32 %v1706, %v1708
    %v1710 = vrot.slane %v1703, %v1709
    %v1712 = vunpack.c.l.s4 1966171168
    %v1713 = vunpack.c.0.s8 %v1712
    %v1714 = vlaneseq
    %v1715 = vshrl.u32 %v1714, 7
    %v1716 = vsub.s32 %v1713, %v1715
    %v1717 = vrot.slane %v1710, %v1716
    %s1720 = scalar_lea.vmem [#allocation2], 16
    %1721 = vst.msk [vmem:[%s1720] ss:$8 sm:$0x3] %vm1480, %v1702
    %1722 = vst.msk [vmem:[%s1720] ss:$8 sm:$0x0] %vm1480, %v1702
    %s1723 = scalar_lea.vmem [#allocation2], 48
    %1724 = vst.msk [vmem:[%s1723] ss:$8 sm:$0x3] %vm1480, %v1717
    %1725 = vst.msk [vmem:[%s1723] ss:$8 sm:$0x0] %vm1480, %v1717
    %v1726 = vcombine.high %v1702, %v1702
    %v1727 = vcombine.high %v1717, %v1717
    %s1730 = scalar_lea.vmem [#allocation2], 17
    %1731 = vst.msk [vmem:[%s1730] ss:$8 sm:$0x3] %vm1480, %v1726
    %1732 = vst.msk [vmem:[%s1730] ss:$8 sm:$0x0] %vm1480, %v1726
    %s1733 = scalar_lea.vmem [#allocation2], 49
    %1734 = vst.msk [vmem:[%s1733] ss:$8 sm:$0x3] %vm1480, %v1727
    %1735 = vst.msk [vmem:[%s1733] ss:$8 sm:$0x0] %vm1480, %v1727
    %v1736 = vcombine.high %v1680, %v1681
    %v1738 = vunpack.c.l.s4 1966171168
    %v1739 = vunpack.c.0.s8 %v1738
    %v1740 = vlaneseq
    %v1741 = vshrl.u32 %v1740, 7
    %v1742 = vsub.s32 %v1739, %v1741
    %v1743 = vrot.slane %v1736, %v1742
    %v1745 = vunpack.c.l.s4 1966171168
    %v1746 = vunpack.c.0.s8 %v1745
    %v1747 = vlaneseq
    %v1748 = vshrl.u32 %v1747, 7
    %v1749 = vsub.s32 %v1746, %v1748
    %v1750 = vrot.slane %v1743, %v1749
    %v1751 = vcombine.high %v1682, %v1683
    %v1753 = vunpack.c.l.s4 1966171168
    %v1754 = vunpack.c.0.s8 %v1753
    %v1755 = vlaneseq
    %v1756 = vshrl.u32 %v1755, 7
    %v1757 = vsub.s32 %v1754, %v1756
    %v1758 = vrot.slane %v1751, %v1757
    %v1760 = vunpack.c.l.s4 1966171168
    %v1761 = vunpack.c.0.s8 %v1760
    %v1762 = vlaneseq
    %v1763 = vshrl.u32 %v1762, 7
    %v1764 = vsub.s32 %v1761, %v1763
    %v1765 = vrot.slane %v1758, %v1764
    %s1768 = scalar_lea.vmem [#allocation2], 18
    %1769 = vst.msk [vmem:[%s1768] ss:$8 sm:$0x3] %vm1480, %v1750
    %1770 = vst.msk [vmem:[%s1768] ss:$8 sm:$0x0] %vm1480, %v1750
    %s1771 = scalar_lea.vmem [#allocation2], 50
    %1772 = vst.msk [vmem:[%s1771] ss:$8 sm:$0x3] %vm1480, %v1765
    %1773 = vst.msk [vmem:[%s1771] ss:$8 sm:$0x0] %vm1480, %v1765
    %v1774 = vcombine.high %v1750, %v1750
    %v1775 = vcombine.high %v1765, %v1765
    %s1778 = scalar_lea.vmem [#allocation2], 19
    %1779 = vst.msk [vmem:[%s1778] ss:$8 sm:$0x3] %vm1480, %v1774
    %1780 = vst.msk [vmem:[%s1778] ss:$8 sm:$0x0] %vm1480, %v1774
    %s1781 = scalar_lea.vmem [#allocation2], 51
    %1782 = vst.msk [vmem:[%s1781] ss:$8 sm:$0x3] %vm1480, %v1775
    %1783 = vst.msk [vmem:[%s1781] ss:$8 sm:$0x0] %vm1480, %v1775
    %v1784 = vld [vmem:[#allocation2] sm:$0xff]
    %v1785 = vld [vmem:[#allocation2 + $0x8] sm:$0xff]
    %v1786 = vld [vmem:[#allocation2 + $0x20] sm:$0xff]
    %v1787 = vld [vmem:[#allocation2 + $0x28] sm:$0xff]
    %v1788 = vld [vmem:[#allocation6] sm:$0xff]
    %v1789 = vld [vmem:[#allocation6 + $0x8] sm:$0xff]
    %v1790 = vld [vmem:[#allocation6 + $0x10] sm:$0xff]
    %v1791 = vld [vmem:[#allocation6 + $0x18] sm:$0xff]
    %v1792 = vld [vmem:[#allocation6 + $0x20] sm:$0xff]
    %v1793 = vld [vmem:[#allocation6 + $0x28] sm:$0xff]
    %v1794 = vld [vmem:[#allocation6 + $0x30] sm:$0xff]
    %v1795 = vld [vmem:[#allocation6 + $0x38] sm:$0xff]
    %v1796 = vld [vmem:[#allocation6 + $0x40] sm:$0xff]
    %v1797 = vld [vmem:[#allocation6 + $0x48] sm:$0xff]
    %v1798 = vld [vmem:[#allocation6 + $0x50] sm:$0xff]
    %v1799 = vld [vmem:[#allocation6 + $0x58] sm:$0xff]
    %v1800 = vld [vmem:[#allocation6 + $0x60] sm:$0xff]
    %v1801 = vld [vmem:[#allocation6 + $0x68] sm:$0xff]
    %v1802 = vld [vmem:[#allocation6 + $0x70] sm:$0xff]
    %v1803 = vld [vmem:[#allocation6 + $0x78] sm:$0xff]
    %v1804 = vld [vmem:[#allocation6 + $0x80] sm:$0xff]
    %v1805 = vld [vmem:[#allocation6 + $0x88] sm:$0xff]
    %v1806 = vld [vmem:[#allocation6 + $0x90] sm:$0xff]
    %v1807 = vld [vmem:[#allocation6 + $0x98] sm:$0xff]
    %v1808 = vld [vmem:[#allocation6 + $0xa0] sm:$0xff]
    %v1809 = vld [vmem:[#allocation6 + $0xa8] sm:$0xff]
    %v1810 = vld [vmem:[#allocation6 + $0xb0] sm:$0xff]
    %v1811 = vld [vmem:[#allocation6 + $0xb8] sm:$0xff]
    %v1812 = vld [vmem:[#allocation2] sm:$0xfe]
    %v1813 = vld [vmem:[#allocation2 + $0x8] sm:$0xfe]
    %v1814 = vld [vmem:[#allocation2 + $0x10] sm:$0x1]
    %v1815 = vld [vmem:[#allocation2 + $0x18] sm:$0x1]
    %v1816 = vld [vmem:[#allocation2 + $0x20] sm:$0xfe]
    %v1817 = vld [vmem:[#allocation2 + $0x28] sm:$0xfe]
    %v1818 = vld [vmem:[#allocation2 + $0x30] sm:$0x1]
    %v1819 = vld [vmem:[#allocation2 + $0x38] sm:$0x1]
    %vm1828 = vcmask 1046528
    %v1829 = vrot.slane %v1812, 1
    %v1830 = vrot.slane %v1814, 1
    %v1831 = vsel %vm1828, %v1829, %v1830
    %v1832 = vrot.slane %v1813, 1
    %v1833 = vrot.slane %v1815, 1
    %v1834 = vsel %vm1828, %v1832, %v1833
    %v1835 = vrot.slane %v1816, 1
    %v1836 = vrot.slane %v1818, 1
    %v1837 = vsel %vm1828, %v1835, %v1836
    %v1838 = vrot.slane %v1817, 1
    %v1839 = vrot.slane %v1819, 1
    %v1840 = vsel %vm1828, %v1838, %v1839
    %s1843 = scalar_lea.vmem [#allocation6], 192
    %v1844 = vld [vmem:[%s1843] sm:$0xff]
    %v1845 = vld [vmem:[%s1843 + $0x8] sm:$0xff]
    %v1846 = vld [vmem:[%s1843 + $0x10] sm:$0xff]
    %v1847 = vld [vmem:[%s1843 + $0x18] sm:$0xff]
    %v1848 = vld [vmem:[%s1843 + $0x20] sm:$0xff]
    %v1849 = vld [vmem:[%s1843 + $0x28] sm:$0xff]
    %v1850 = vld [vmem:[%s1843 + $0x30] sm:$0xff]
    %v1851 = vld [vmem:[%s1843 + $0x38] sm:$0xff]
    %v1852 = vld [vmem:[%s1843 + $0x40] sm:$0xff]
    %v1853 = vld [vmem:[%s1843 + $0x48] sm:$0xff]
    %v1854 = vld [vmem:[%s1843 + $0x50] sm:$0xff]
    %v1855 = vld [vmem:[%s1843 + $0x58] sm:$0xff]
    %v1856 = vld [vmem:[%s1843 + $0x60] sm:$0xff]
    %v1857 = vld [vmem:[%s1843 + $0x68] sm:$0xff]
    %v1858 = vld [vmem:[%s1843 + $0x70] sm:$0xff]
    %v1859 = vld [vmem:[%s1843 + $0x78] sm:$0xff]
    %v1860 = vld [vmem:[%s1843 + $0x80] sm:$0xff]
    %v1861 = vld [vmem:[%s1843 + $0x88] sm:$0xff]
    %v1862 = vld [vmem:[%s1843 + $0x90] sm:$0xff]
    %v1863 = vld [vmem:[%s1843 + $0x98] sm:$0xff]
    %v1864 = vld [vmem:[%s1843 + $0xa0] sm:$0xff]
    %v1865 = vld [vmem:[%s1843 + $0xa8] sm:$0xff]
    %v1866 = vld [vmem:[%s1843 + $0xb0] sm:$0xff]
    %v1867 = vld [vmem:[%s1843 + $0xb8] sm:$0xff]
    %v1868 = vsel %vm1366, %v1834, 0
    %v1870 = vsel %vm1366, %v1840, 0
    %1872 = vmatprep.subr.mxu0 0.0
    %1873 = vmatpush1.msra.mxu0 %v1859
    %1874 = vmatprep.subr.mxu0 0.0
    %1875 = vmatpush1.msra.mxu0 %v1858
    %1876 = vmatprep.subr.mxu0 0.0
    %1877 = vmatpush1.msra.mxu0 %v1857
    %1878 = vmatprep.subr.mxu0 0.0
    %1879 = vmatpush1.msra.mxu0 %v1856
    %1880 = vmatprep.subr.mxu0 0.0
    %1881 = vmatpush1.msra.mxu0 %v1855
    %1882 = vmatprep.subr.mxu0 0.0
    %1883 = vmatpush1.msra.mxu0 %v1854
    %1884 = vmatprep.subr.mxu0 0.0
    %1885 = vmatpush1.msra.mxu0 %v1853
    %1886 = vmatprep.subr.mxu0 0.0
    %1887 = vmatpush1.msra.mxu0 %v1852
    %1888 = vmatprep.subr.mxu0 0.0
    %1889 = vmatpush1.msra.mxu0 %v1851
    %1890 = vmatprep.subr.mxu0 0.0
    %1891 = vmatpush1.msra.mxu0 %v1850
    %1892 = vmatprep.subr.mxu0 0.0
    %1893 = vmatpush1.msra.mxu0 %v1849
    %1894 = vmatprep.subr.mxu0 0.0
    %1895 = vmatpush1.msra.mxu0 %v1848
    %1896 = vmatprep.subr.mxu0 0.0
    %1897 = vmatpush1.msra.mxu0 %v1847
    %1898 = vmatprep.subr.mxu0 0.0
    %1899 = vmatpush1.msra.mxu0 %v1846
    %1900 = vmatprep.subr.mxu0 0.0
    %1901 = vmatpush1.msra.mxu0 %v1845
    %1902 = vmatprep.subr.mxu0 0.0
    %1903 = vmatpush1.msra.mxu0 %v1844
    %1904 = vmatprep.subr.mxu0 0.0
    %1905 = vmatpush2.msra.mxu0 0.0
    %1906 = vmatprep.subr.mxu0 0.0
    %1907 = vmatpush2.msra.mxu0 0.0
    %1908 = vmatprep.subr.mxu0 0.0
    %1909 = vmatpush2.msra.mxu0 0.0
    %1910 = vmatprep.subr.mxu0 0.0
    %1911 = vmatpush2.msra.mxu0 0.0
    %1912 = vmatprep.subr.mxu0 0.0
    %1913 = vmatpush2.msra.mxu0 0.0
    %1914 = vmatprep.subr.mxu0 0.0
    %1915 = vmatpush2.msra.mxu0 0.0
    %1916 = vmatprep.subr.mxu0 0.0
    %1917 = vmatpush2.msra.mxu0 0.0
    %1918 = vmatprep.subr.mxu0 0.0
    %1919 = vmatpush2.msra.mxu0 0.0
    %1920 = vmatprep.subr.mxu0 0.0
    %1921 = vmatpush2.msra.mxu0 %v1867
    %1922 = vmatprep.subr.mxu0 0.0
    %1923 = vmatpush2.msra.mxu0 %v1866
    %1924 = vmatprep.subr.mxu0 0.0
    %1925 = vmatpush2.msra.mxu0 %v1865
    %1926 = vmatprep.subr.mxu0 0.0
    %1927 = vmatpush2.msra.mxu0 %v1864
    %1928 = vmatprep.subr.mxu0 0.0
    %1929 = vmatpush2.msra.mxu0 %v1863
    %1930 = vmatprep.subr.mxu0 0.0
    %1931 = vmatpush2.msra.mxu0 %v1862
    %1932 = vmatprep.subr.mxu0 0.0
    %1933 = vmatpush2.msra.mxu0 %v1861
    %1934 = vmatprep.subr.mxu0 0.0
    %1935 = vmatpush2.msra.mxu0 %v1860
    %1936 = vmatprep.mubr.f32.mxu0 %v1868
    %1937 = vmatmul.mubr.f32.gmra.mxu0 %v1831
    %v1938 = vpop.f32.mrf.mxu0
    %v1939 = vadd.f32 0.0, %v1938
    %v1940 = vpop.f32.mrf.mxu0
    %1941 = vmatprep.mubr.f32.mxu0 %v1870
    %1942 = vmatmul.mubr.f32.gmra.mxu0 %v1837
    %v1943 = vpop.f32.mrf.mxu0
    %v1944 = vadd.f32 0.0, %v1943
    %v1945 = vpop.f32.mrf.mxu0
    %1946 = vdwg.mxu0
    %v1948 = vsel %vm1366, %v1785, 0
    %v1951 = vsel %vm1366, %v1787, 0
    %1953 = vmatprep.subr.mxu0 0.0
    %1954 = vmatpush1.msra.mxu0 %v1803
    %1955 = vmatprep.subr.mxu0 0.0
    %1956 = vmatpush1.msra.mxu0 %v1802
    %1957 = vmatprep.subr.mxu0 0.0
    %1958 = vmatpush1.msra.mxu0 %v1801
    %1959 = vmatprep.subr.mxu0 0.0
    %1960 = vmatpush1.msra.mxu0 %v1800
    %1961 = vmatprep.subr.mxu0 0.0
    %1962 = vmatpush1.msra.mxu0 %v1799
    %1963 = vmatprep.subr.mxu0 0.0
    %1964 = vmatpush1.msra.mxu0 %v1798
    %1965 = vmatprep.subr.mxu0 0.0
    %1966 = vmatpush1.msra.mxu0 %v1797
    %1967 = vmatprep.subr.mxu0 0.0
    %1968 = vmatpush1.msra.mxu0 %v1796
    %1969 = vmatprep.subr.mxu0 0.0
    %1970 = vmatpush1.msra.mxu0 %v1795
    %1971 = vmatprep.subr.mxu0 0.0
    %1972 = vmatpush1.msra.mxu0 %v1794
    %1973 = vmatprep.subr.mxu0 0.0
    %1974 = vmatpush1.msra.mxu0 %v1793
    %1975 = vmatprep.subr.mxu0 0.0
    %1976 = vmatpush1.msra.mxu0 %v1792
    %1977 = vmatprep.subr.mxu0 0.0
    %1978 = vmatpush1.msra.mxu0 %v1791
    %1979 = vmatprep.subr.mxu0 0.0
    %1980 = vmatpush1.msra.mxu0 %v1790
    %1981 = vmatprep.subr.mxu0 0.0
    %1982 = vmatpush1.msra.mxu0 %v1789
    %1983 = vmatprep.subr.mxu0 0.0
    %1984 = vmatpush1.msra.mxu0 %v1788
    %1985 = vmatprep.subr.mxu0 0.0
    %1986 = vmatpush2.msra.mxu0 0.0
    %1987 = vmatprep.subr.mxu0 0.0
    %1988 = vmatpush2.msra.mxu0 0.0
    %1989 = vmatprep.subr.mxu0 0.0
    %1990 = vmatpush2.msra.mxu0 0.0
    %1991 = vmatprep.subr.mxu0 0.0
    %1992 = vmatpush2.msra.mxu0 0.0
    %1993 = vmatprep.subr.mxu0 0.0
    %1994 = vmatpush2.msra.mxu0 0.0
    %1995 = vmatprep.subr.mxu0 0.0
    %1996 = vmatpush2.msra.mxu0 0.0
    %1997 = vmatprep.subr.mxu0 0.0
    %1998 = vmatpush2.msra.mxu0 0.0
    %1999 = vmatprep.subr.mxu0 0.0
    %2000 = vmatpush2.msra.mxu0 0.0
    %2001 = vmatprep.subr.mxu0 0.0
    %2002 = vmatpush2.msra.mxu0 %v1811
    %2003 = vmatprep.subr.mxu0 0.0
    %2004 = vmatpush2.msra.mxu0 %v1810
    %2005 = vmatprep.subr.mxu0 0.0
    %2006 = vmatpush2.msra.mxu0 %v1809
    %2007 = vmatprep.subr.mxu0 0.0
    %2008 = vmatpush2.msra.mxu0 %v1808
    %2009 = vmatprep.subr.mxu0 0.0
    %2010 = vmatpush2.msra.mxu0 %v1807
    %2011 = vmatprep.subr.mxu0 0.0
    %2012 = vmatpush2.msra.mxu0 %v1806
    %2013 = vmatprep.subr.mxu0 0.0
    %2014 = vmatpush2.msra.mxu0 %v1805
    %2015 = vmatprep.subr.mxu0 0.0
    %2016 = vmatpush2.msra.mxu0 %v1804
    %2017 = vmatprep.mubr.f32.mxu0 %v1948
    %2018 = vmatmul.mubr.f32.gmra.mxu0 %v1784
    %v2019 = vpop.f32.mrf.mxu0
    %v2020 = vadd.f32 %v1939, %v2019
    %v2021 = vpop.f32.mrf.mxu0
    %2022 = vmatprep.mubr.f32.mxu0 %v1951
    %2023 = vmatmul.mubr.f32.gmra.mxu0 %v1786
    %v2024 = vpop.f32.mrf.mxu0
    %v2025 = vadd.f32 %v1944, %v2024
    %v2026 = vpop.f32.mrf.mxu0
    %2027 = vdwg.mxu0
    %v2028 = vld [vmem:[#allocation2] sm:$0xfc]
    %v2029 = vld [vmem:[#allocation2 + $0x8] sm:$0xfc]
    %v2030 = vld [vmem:[#allocation2 + $0x10] sm:$0x3]
    %v2031 = vld [vmem:[#allocation2 + $0x18] sm:$0x3]
    %v2032 = vld [vmem:[#allocation2 + $0x20] sm:$0xfc]
    %v2033 = vld [vmem:[#allocation2 + $0x28] sm:$0xfc]
    %v2034 = vld [vmem:[#allocation2 + $0x30] sm:$0x3]
    %v2035 = vld [vmem:[#allocation2 + $0x38] sm:$0x3]
    %vm2044 = vcmask 1045504
    %v2045 = vrot.slane %v2028, 2
    %v2046 = vrot.slane %v2030, 2
    %v2047 = vsel %vm2044, %v2045, %v2046
    %v2048 = vrot.slane %v2029, 2
    %v2049 = vrot.slane %v2031, 2
    %v2050 = vsel %vm2044, %v2048, %v2049
    %v2051 = vrot.slane %v2032, 2
    %v2052 = vrot.slane %v2034, 2
    %v2053 = vsel %vm2044, %v2051, %v2052
    %v2054 = vrot.slane %v2033, 2
    %v2055 = vrot.slane %v2035, 2
    %v2056 = vsel %vm2044, %v2054, %v2055
    %s2059 = scalar_lea.vmem [#allocation6], 384
    %v2060 = vld [vmem:[%s2059] sm:$0xff]
    %v2061 = vld [vmem:[%s2059 + $0x8] sm:$0xff]
    %v2062 = vld [vmem:[%s2059 + $0x10] sm:$0xff]
    %v2063 = vld [vmem:[%s2059 + $0x18] sm:$0xff]
    %v2064 = vld [vmem:[%s2059 + $0x20] sm:$0xff]
    %v2065 = vld [vmem:[%s2059 + $0x28] sm:$0xff]
    %v2066 = vld [vmem:[%s2059 + $0x30] sm:$0xff]
    %v2067 = vld [vmem:[%s2059 + $0x38] sm:$0xff]
    %v2068 = vld [vmem:[%s2059 + $0x40] sm:$0xff]
    %v2069 = vld [vmem:[%s2059 + $0x48] sm:$0xff]
    %v2070 = vld [vmem:[%s2059 + $0x50] sm:$0xff]
    %v2071 = vld [vmem:[%s2059 + $0x58] sm:$0xff]
    %v2072 = vld [vmem:[%s2059 + $0x60] sm:$0xff]
    %v2073 = vld [vmem:[%s2059 + $0x68] sm:$0xff]
    %v2074 = vld [vmem:[%s2059 + $0x70] sm:$0xff]
    %v2075 = vld [vmem:[%s2059 + $0x78] sm:$0xff]
    %v2076 = vld [vmem:[%s2059 + $0x80] sm:$0xff]
    %v2077 = vld [vmem:[%s2059 + $0x88] sm:$0xff]
    %v2078 = vld [vmem:[%s2059 + $0x90] sm:$0xff]
    %v2079 = vld [vmem:[%s2059 + $0x98] sm:$0xff]
    %v2080 = vld [vmem:[%s2059 + $0xa0] sm:$0xff]
    %v2081 = vld [vmem:[%s2059 + $0xa8] sm:$0xff]
    %v2082 = vld [vmem:[%s2059 + $0xb0] sm:$0xff]
    %v2083 = vld [vmem:[%s2059 + $0xb8] sm:$0xff]
    %v2084 = vsel %vm1366, %v2050, 0
    %v2086 = vsel %vm1366, %v2056, 0
    %2088 = vmatprep.subr.mxu0 0.0
    %2089 = vmatpush1.msra.mxu0 %v2075
    %2090 = vmatprep.subr.mxu0 0.0
    %2091 = vmatpush1.msra.mxu0 %v2074
    %2092 = vmatprep.subr.mxu0 0.0
    %2093 = vmatpush1.msra.mxu0 %v2073
    %2094 = vmatprep.subr.mxu0 0.0
    %2095 = vmatpush1.msra.mxu0 %v2072
    %2096 = vmatprep.subr.mxu0 0.0
    %2097 = vmatpush1.msra.mxu0 %v2071
    %2098 = vmatprep.subr.mxu0 0.0
    %2099 = vmatpush1.msra.mxu0 %v2070
    %2100 = vmatprep.subr.mxu0 0.0
    %2101 = vmatpush1.msra.mxu0 %v2069
    %2102 = vmatprep.subr.mxu0 0.0
    %2103 = vmatpush1.msra.mxu0 %v2068
    %2104 = vmatprep.subr.mxu0 0.0
    %2105 = vmatpush1.msra.mxu0 %v2067
    %2106 = vmatprep.subr.mxu0 0.0
    %2107 = vmatpush1.msra.mxu0 %v2066
    %2108 = vmatprep.subr.mxu0 0.0
    %2109 = vmatpush1.msra.mxu0 %v2065
    %2110 = vmatprep.subr.mxu0 0.0
    %2111 = vmatpush1.msra.mxu0 %v2064
    %2112 = vmatprep.subr.mxu0 0.0
    %2113 = vmatpush1.msra.mxu0 %v2063
    %2114 = vmatprep.subr.mxu0 0.0
    %2115 = vmatpush1.msra.mxu0 %v2062
    %2116 = vmatprep.subr.mxu0 0.0
    %2117 = vmatpush1.msra.mxu0 %v2061
    %2118 = vmatprep.subr.mxu0 0.0
    %2119 = vmatpush1.msra.mxu0 %v2060
    %2120 = vmatprep.subr.mxu0 0.0
    %2121 = vmatpush2.msra.mxu0 0.0
    %2122 = vmatprep.subr.mxu0 0.0
    %2123 = vmatpush2.msra.mxu0 0.0
    %2124 = vmatprep.subr.mxu0 0.0
    %2125 = vmatpush2.msra.mxu0 0.0
    %2126 = vmatprep.subr.mxu0 0.0
    %2127 = vmatpush2.msra.mxu0 0.0
    %2128 = vmatprep.subr.mxu0 0.0
    %2129 = vmatpush2.msra.mxu0 0.0
    %2130 = vmatprep.subr.mxu0 0.0
    %2131 = vmatpush2.msra.mxu0 0.0
    %2132 = vmatprep.subr.mxu0 0.0
    %2133 = vmatpush2.msra.mxu0 0.0
    %2134 = vmatprep.subr.mxu0 0.0
    %2135 = vmatpush2.msra.mxu0 0.0
    %2136 = vmatprep.subr.mxu0 0.0
    %2137 = vmatpush2.msra.mxu0 %v2083
    %2138 = vmatprep.subr.mxu0 0.0
    %2139 = vmatpush2.msra.mxu0 %v2082
    %2140 = vmatprep.subr.mxu0 0.0
    %2141 = vmatpush2.msra.mxu0 %v2081
    %2142 = vmatprep.subr.mxu0 0.0
    %2143 = vmatpush2.msra.mxu0 %v2080
    %2144 = vmatprep.subr.mxu0 0.0
    %2145 = vmatpush2.msra.mxu0 %v2079
    %2146 = vmatprep.subr.mxu0 0.0
    %2147 = vmatpush2.msra.mxu0 %v2078
    %2148 = vmatprep.subr.mxu0 0.0
    %2149 = vmatpush2.msra.mxu0 %v2077
    %2150 = vmatprep.subr.mxu0 0.0
    %2151 = vmatpush2.msra.mxu0 %v2076
    %2152 = vmatprep.mubr.f32.mxu0 %v2084
    %2153 = vmatmul.mubr.f32.gmra.mxu0 %v2047
    %v2154 = vpop.f32.mrf.mxu0
    %v2155 = vadd.f32 0.0, %v2154
    %v2156 = vpop.f32.mrf.mxu0
    %2157 = vmatprep.mubr.f32.mxu0 %v2086
    %2158 = vmatmul.mubr.f32.gmra.mxu0 %v2053
    %v2159 = vpop.f32.mrf.mxu0
    %v2160 = vadd.f32 0.0, %v2159
    %v2161 = vpop.f32.mrf.mxu0
    %2162 = vdwg.mxu0
    %v2163 = vadd.f32 %v2020, %v2155
    %v2164 = vadd.f32 %v2025, %v2160
    %v2165 = vld [vmem:[#allocation2] sm:$0xf8]
    %v2166 = vld [vmem:[#allocation2 + $0x8] sm:$0xf8]
    %v2167 = vld [vmem:[#allocation2 + $0x10] sm:$0x7]
    %v2168 = vld [vmem:[#allocation2 + $0x18] sm:$0x7]
    %v2169 = vld [vmem:[#allocation2 + $0x20] sm:$0xf8]
    %v2170 = vld [vmem:[#allocation2 + $0x28] sm:$0xf8]
    %v2171 = vld [vmem:[#allocation2 + $0x30] sm:$0x7]
    %v2172 = vld [vmem:[#allocation2 + $0x38] sm:$0x7]
    %vm2181 = vcmask 1044480
    %v2182 = vrot.slane %v2165, 3
    %v2183 = vrot.slane %v2167, 3
    %v2184 = vsel %vm2181, %v2182, %v2183
    %v2185 = vrot.slane %v2166, 3
    %v2186 = vrot.slane %v2168, 3
    %v2187 = vsel %vm2181, %v2185, %v2186
    %v2188 = vrot.slane %v2169, 3
    %v2189 = vrot.slane %v2171, 3
    %v2190 = vsel %vm2181, %v2188, %v2189
    %v2191 = vrot.slane %v2170, 3
    %v2192 = vrot.slane %v2172, 3
    %v2193 = vsel %vm2181, %v2191, %v2192
    %s2196 = scalar_lea.vmem [#allocation6], 576
    %v2197 = vld [vmem:[%s2196] sm:$0xff]
    %v2198 = vld [vmem:[%s2196 + $0x8] sm:$0xff]
    %v2199 = vld [vmem:[%s2196 + $0x10] sm:$0xff]
    %v2200 = vld [vmem:[%s2196 + $0x18] sm:$0xff]
    %v2201 = vld [vmem:[%s2196 + $0x20] sm:$0xff]
    %v2202 = vld [vmem:[%s2196 + $0x28] sm:$0xff]
    %v2203 = vld [vmem:[%s2196 + $0x30] sm:$0xff]
    %v2204 = vld [vmem:[%s2196 + $0x38] sm:$0xff]
    %v2205 = vld [vmem:[%s2196 + $0x40] sm:$0xff]
    %v2206 = vld [vmem:[%s2196 + $0x48] sm:$0xff]
    %v2207 = vld [vmem:[%s2196 + $0x50] sm:$0xff]
    %v2208 = vld [vmem:[%s2196 + $0x58] sm:$0xff]
    %v2209 = vld [vmem:[%s2196 + $0x60] sm:$0xff]
    %v2210 = vld [vmem:[%s2196 + $0x68] sm:$0xff]
    %v2211 = vld [vmem:[%s2196 + $0x70] sm:$0xff]
    %v2212 = vld [vmem:[%s2196 + $0x78] sm:$0xff]
    %v2213 = vld [vmem:[%s2196 + $0x80] sm:$0xff]
    %v2214 = vld [vmem:[%s2196 + $0x88] sm:$0xff]
    %v2215 = vld [vmem:[%s2196 + $0x90] sm:$0xff]
    %v2216 = vld [vmem:[%s2196 + $0x98] sm:$0xff]
    %v2217 = vld [vmem:[%s2196 + $0xa0] sm:$0xff]
    %v2218 = vld [vmem:[%s2196 + $0xa8] sm:$0xff]
    %v2219 = vld [vmem:[%s2196 + $0xb0] sm:$0xff]
    %v2220 = vld [vmem:[%s2196 + $0xb8] sm:$0xff]
    %v2221 = vsel %vm1366, %v2187, 0
    %v2223 = vsel %vm1366, %v2193, 0
    %2225 = vmatprep.subr.mxu0 0.0
    %2226 = vmatpush1.msra.mxu0 %v2212
    %2227 = vmatprep.subr.mxu0 0.0
    %2228 = vmatpush1.msra.mxu0 %v2211
    %2229 = vmatprep.subr.mxu0 0.0
    %2230 = vmatpush1.msra.mxu0 %v2210
    %2231 = vmatprep.subr.mxu0 0.0
    %2232 = vmatpush1.msra.mxu0 %v2209
    %2233 = vmatprep.subr.mxu0 0.0
    %2234 = vmatpush1.msra.mxu0 %v2208
    %2235 = vmatprep.subr.mxu0 0.0
    %2236 = vmatpush1.msra.mxu0 %v2207
    %2237 = vmatprep.subr.mxu0 0.0
    %2238 = vmatpush1.msra.mxu0 %v2206
    %2239 = vmatprep.subr.mxu0 0.0
    %2240 = vmatpush1.msra.mxu0 %v2205
    %2241 = vmatprep.subr.mxu0 0.0
    %2242 = vmatpush1.msra.mxu0 %v2204
    %2243 = vmatprep.subr.mxu0 0.0
    %2244 = vmatpush1.msra.mxu0 %v2203
    %2245 = vmatprep.subr.mxu0 0.0
    %2246 = vmatpush1.msra.mxu0 %v2202
    %2247 = vmatprep.subr.mxu0 0.0
    %2248 = vmatpush1.msra.mxu0 %v2201
    %2249 = vmatprep.subr.mxu0 0.0
    %2250 = vmatpush1.msra.mxu0 %v2200
    %2251 = vmatprep.subr.mxu0 0.0
    %2252 = vmatpush1.msra.mxu0 %v2199
    %2253 = vmatprep.subr.mxu0 0.0
    %2254 = vmatpush1.msra.mxu0 %v2198
    %2255 = vmatprep.subr.mxu0 0.0
    %2256 = vmatpush1.msra.mxu0 %v2197
    %2257 = vmatprep.subr.mxu0 0.0
    %2258 = vmatpush2.msra.mxu0 0.0
    %2259 = vmatprep.subr.mxu0 0.0
    %2260 = vmatpush2.msra.mxu0 0.0
    %2261 = vmatprep.subr.mxu0 0.0
    %2262 = vmatpush2.msra.mxu0 0.0
    %2263 = vmatprep.subr.mxu0 0.0
    %2264 = vmatpush2.msra.mxu0 0.0
    %2265 = vmatprep.subr.mxu0 0.0
    %2266 = vmatpush2.msra.mxu0 0.0
    %2267 = vmatprep.subr.mxu0 0.0
    %2268 = vmatpush2.msra.mxu0 0.0
    %2269 = vmatprep.subr.mxu0 0.0
    %2270 = vmatpush2.msra.mxu0 0.0
    %2271 = vmatprep.subr.mxu0 0.0
    %2272 = vmatpush2.msra.mxu0 0.0
    %2273 = vmatprep.subr.mxu0 0.0
    %2274 = vmatpush2.msra.mxu0 %v2220
    %2275 = vmatprep.subr.mxu0 0.0
    %2276 = vmatpush2.msra.mxu0 %v2219
    %2277 = vmatprep.subr.mxu0 0.0
    %2278 = vmatpush2.msra.mxu0 %v2218
    %2279 = vmatprep.subr.mxu0 0.0
    %2280 = vmatpush2.msra.mxu0 %v2217
    %2281 = vmatprep.subr.mxu0 0.0
    %2282 = vmatpush2.msra.mxu0 %v2216
    %2283 = vmatprep.subr.mxu0 0.0
    %2284 = vmatpush2.msra.mxu0 %v2215
    %2285 = vmatprep.subr.mxu0 0.0
    %2286 = vmatpush2.msra.mxu0 %v2214
    %2287 = vmatprep.subr.mxu0 0.0
    %2288 = vmatpush2.msra.mxu0 %v2213
    %2289 = vmatprep.mubr.f32.mxu0 %v2221
    %2290 = vmatmul.mubr.f32.gmra.mxu0 %v2184
    %v2291 = vpop.f32.mrf.mxu0
    %v2292 = vadd.f32 0.0, %v2291
    %v2293 = vpop.f32.mrf.mxu0
    %2294 = vmatprep.mubr.f32.mxu0 %v2223
    %2295 = vmatmul.mubr.f32.gmra.mxu0 %v2190
    %v2296 = vpop.f32.mrf.mxu0
    %v2297 = vadd.f32 0.0, %v2296
    %v2298 = vpop.f32.mrf.mxu0
    %2299 = vdwg.mxu0
    %v2300 = vadd.f32 %v2163, %v2292
    %v2301 = vadd.f32 %v2164, %v2297
    %v2302 = vld [vmem:[#allocation2] sm:$0xf0]
    %v2303 = vld [vmem:[#allocation2 + $0x8] sm:$0xf0]
    %v2304 = vld [vmem:[#allocation2 + $0x10] sm:$0xf]
    %v2305 = vld [vmem:[#allocation2 + $0x18] sm:$0xf]
    %v2306 = vld [vmem:[#allocation2 + $0x20] sm:$0xf0]
    %v2307 = vld [vmem:[#allocation2 + $0x28] sm:$0xf0]
    %v2308 = vld [vmem:[#allocation2 + $0x30] sm:$0xf]
    %v2309 = vld [vmem:[#allocation2 + $0x38] sm:$0xf]
    %v2318 = vrot.slane %v2302, 4
    %v2319 = vrot.slane %v2304, 4
    %v2320 = vsel %vm121, %v2318, %v2319
    %v2321 = vrot.slane %v2303, 4
    %v2322 = vrot.slane %v2305, 4
    %v2323 = vsel %vm121, %v2321, %v2322
    %v2324 = vrot.slane %v2306, 4
    %v2325 = vrot.slane %v2308, 4
    %v2326 = vsel %vm121, %v2324, %v2325
    %v2327 = vrot.slane %v2307, 4
    %v2328 = vrot.slane %v2309, 4
    %v2329 = vsel %vm121, %v2327, %v2328
    %s2332 = scalar_lea.vmem [#allocation6], 768
    %v2333 = vld [vmem:[%s2332] sm:$0xff]
    %v2334 = vld [vmem:[%s2332 + $0x8] sm:$0xff]
    %v2335 = vld [vmem:[%s2332 + $0x10] sm:$0xff]
    %v2336 = vld [vmem:[%s2332 + $0x18] sm:$0xff]
    %v2337 = vld [vmem:[%s2332 + $0x20] sm:$0xff]
    %v2338 = vld [vmem:[%s2332 + $0x28] sm:$0xff]
    %v2339 = vld [vmem:[%s2332 + $0x30] sm:$0xff]
    %v2340 = vld [vmem:[%s2332 + $0x38] sm:$0xff]
    %v2341 = vld [vmem:[%s2332 + $0x40] sm:$0xff]
    %v2342 = vld [vmem:[%s2332 + $0x48] sm:$0xff]
    %v2343 = vld [vmem:[%s2332 + $0x50] sm:$0xff]
    %v2344 = vld [vmem:[%s2332 + $0x58] sm:$0xff]
    %v2345 = vld [vmem:[%s2332 + $0x60] sm:$0xff]
    %v2346 = vld [vmem:[%s2332 + $0x68] sm:$0xff]
    %v2347 = vld [vmem:[%s2332 + $0x70] sm:$0xff]
    %v2348 = vld [vmem:[%s2332 + $0x78] sm:$0xff]
    %v2349 = vld [vmem:[%s2332 + $0x80] sm:$0xff]
    %v2350 = vld [vmem:[%s2332 + $0x88] sm:$0xff]
    %v2351 = vld [vmem:[%s2332 + $0x90] sm:$0xff]
    %v2352 = vld [vmem:[%s2332 + $0x98] sm:$0xff]
    %v2353 = vld [vmem:[%s2332 + $0xa0] sm:$0xff]
    %v2354 = vld [vmem:[%s2332 + $0xa8] sm:$0xff]
    %v2355 = vld [vmem:[%s2332 + $0xb0] sm:$0xff]
    %v2356 = vld [vmem:[%s2332 + $0xb8] sm:$0xff]
    %v2357 = vsel %vm1366, %v2323, 0
    %v2359 = vsel %vm1366, %v2329, 0
    %2361 = vmatprep.subr.mxu0 0.0
    %2362 = vmatpush1.msra.mxu0 %v2348
    %2363 = vmatprep.subr.mxu0 0.0
    %2364 = vmatpush1.msra.mxu0 %v2347
    %2365 = vmatprep.subr.mxu0 0.0
    %2366 = vmatpush1.msra.mxu0 %v2346
    %2367 = vmatprep.subr.mxu0 0.0
    %2368 = vmatpush1.msra.mxu0 %v2345
    %2369 = vmatprep.subr.mxu0 0.0
    %2370 = vmatpush1.msra.mxu0 %v2344
    %2371 = vmatprep.subr.mxu0 0.0
    %2372 = vmatpush1.msra.mxu0 %v2343
    %2373 = vmatprep.subr.mxu0 0.0
    %2374 = vmatpush1.msra.mxu0 %v2342
    %2375 = vmatprep.subr.mxu0 0.0
    %2376 = vmatpush1.msra.mxu0 %v2341
    %2377 = vmatprep.subr.mxu0 0.0
    %2378 = vmatpush1.msra.mxu0 %v2340
    %2379 = vmatprep.subr.mxu0 0.0
    %2380 = vmatpush1.msra.mxu0 %v2339
    %2381 = vmatprep.subr.mxu0 0.0
    %2382 = vmatpush1.msra.mxu0 %v2338
    %2383 = vmatprep.subr.mxu0 0.0
    %2384 = vmatpush1.msra.mxu0 %v2337
    %2385 = vmatprep.subr.mxu0 0.0
    %2386 = vmatpush1.msra.mxu0 %v2336
    %2387 = vmatprep.subr.mxu0 0.0
    %2388 = vmatpush1.msra.mxu0 %v2335
    %2389 = vmatprep.subr.mxu0 0.0
    %2390 = vmatpush1.msra.mxu0 %v2334
    %2391 = vmatprep.subr.mxu0 0.0
    %2392 = vmatpush1.msra.mxu0 %v2333
    %2393 = vmatprep.subr.mxu0 0.0
    %2394 = vmatpush2.msra.mxu0 0.0
    %2395 = vmatprep.subr.mxu0 0.0
    %2396 = vmatpush2.msra.mxu0 0.0
    %2397 = vmatprep.subr.mxu0 0.0
    %2398 = vmatpush2.msra.mxu0 0.0
    %2399 = vmatprep.subr.mxu0 0.0
    %2400 = vmatpush2.msra.mxu0 0.0
    %2401 = vmatprep.subr.mxu0 0.0
    %2402 = vmatpush2.msra.mxu0 0.0
    %2403 = vmatprep.subr.mxu0 0.0
    %2404 = vmatpush2.msra.mxu0 0.0
    %2405 = vmatprep.subr.mxu0 0.0
    %2406 = vmatpush2.msra.mxu0 0.0
    %2407 = vmatprep.subr.mxu0 0.0
    %2408 = vmatpush2.msra.mxu0 0.0
    %2409 = vmatprep.subr.mxu0 0.0
    %2410 = vmatpush2.msra.mxu0 %v2356
    %2411 = vmatprep.subr.mxu0 0.0
    %2412 = vmatpush2.msra.mxu0 %v2355
    %2413 = vmatprep.subr.mxu0 0.0
    %2414 = vmatpush2.msra.mxu0 %v2354
    %2415 = vmatprep.subr.mxu0 0.0
    %2416 = vmatpush2.msra.mxu0 %v2353
    %2417 = vmatprep.subr.mxu0 0.0
    %2418 = vmatpush2.msra.mxu0 %v2352
    %2419 = vmatprep.subr.mxu0 0.0
    %2420 = vmatpush2.msra.mxu0 %v2351
    %2421 = vmatprep.subr.mxu0 0.0
    %2422 = vmatpush2.msra.mxu0 %v2350
    %2423 = vmatprep.subr.mxu0 0.0
    %2424 = vmatpush2.msra.mxu0 %v2349
    %2425 = vmatprep.mubr.f32.mxu0 %v2357
    %2426 = vmatmul.mubr.f32.gmra.mxu0 %v2320
    %v2427 = vpop.f32.mrf.mxu0
    %v2428 = vadd.f32 0.0, %v2427
    %v2429 = vpop.f32.mrf.mxu0
    %2430 = vmatprep.mubr.f32.mxu0 %v2359
    %2431 = vmatmul.mubr.f32.gmra.mxu0 %v2326
    %v2432 = vpop.f32.mrf.mxu0
    %v2433 = vadd.f32 0.0, %v2432
    %v2434 = vpop.f32.mrf.mxu0
    %2435 = vdwg.mxu0
    %v2436 = vadd.f32 %v2300, %v2428
    %v2437 = vadd.f32 %v2301, %v2433
    %2440 = vrot.lane.b32.xlu0 %v2436, 64
    %v2441 = vpop.permute.xlu0 %2440
    %2442 = vrot.lane.b32.xlu0 %v2437, 64
    %v2443 = vpop.permute.xlu0 %2442
    %v2446 = vmax.f32 %v2436, %v2441
    %v2447 = vmax.f32 %v2437, %v2443
    %v2448 = vld [vmem:[%s4] sm:$0x1]
    %v2450 = vlaneseq
    %v2451 = vshrl.u32 %v2450, 7
    %v2452 = vsub.s32 0, %v2451
    %v2453 = vrot.slane %v2448, %v2452
    %v2455 = vadd.f32 %v2446, %v2453
    %v2456 = vadd.f32 %v2447, %v2453
    %v2459 = vrot.slane %v2455, 1
    %v2460 = vrot.slane %v2456, 1
    %v2463 = vmax.f32 %v2455, %v2459
    %v2464 = vmax.f32 %v2456, %v2460
    %v2465 = vmax.f32 %v2463, 0.0
    %v2466 = vmax.f32 %v2464, 0.0
    %v2467 = vld [vmem:[#allocation8] sm:$0xff]
    %v2468 = vld [vmem:[#allocation8 + $0x8] sm:$0xff]
    %v2469 = vld [vmem:[#allocation8 + $0x10] sm:$0xff]
    %v2470 = vld [vmem:[#allocation8 + $0x18] sm:$0xff]
    %v2471 = vld [vmem:[#allocation8 + $0x20] sm:$0xff]
    %v2472 = vld [vmem:[#allocation8 + $0x28] sm:$0xff]
    %v2473 = vld [vmem:[#allocation8 + $0x30] sm:$0xff]
    %v2474 = vld [vmem:[#allocation8 + $0x38] sm:$0xff]
    %v2475 = vld [vmem:[#allocation8 + $0x40] sm:$0xff]
    %v2476 = vld [vmem:[#allocation8 + $0x48] sm:$0xff]
    %v2477 = vld [vmem:[#allocation8 + $0x50] sm:$0xff]
    %v2478 = vld [vmem:[#allocation8 + $0x58] sm:$0xff]
    %v2479 = vld [vmem:[#allocation8 + $0x60] sm:$0xff]
    %v2480 = vld [vmem:[#allocation8 + $0x68] sm:$0xff]
    %v2481 = vld [vmem:[#allocation8 + $0x70] sm:$0xff]
    %v2482 = vld [vmem:[#allocation8 + $0x78] sm:$0xff]
    %s2483 = scalar_lea.vmem [#allocation8], 128
    %v2484 = vld [vmem:[%s2483] sm:$0xff]
    %v2485 = vld [vmem:[%s2483 + $0x8] sm:$0xff]
    %v2486 = vld [vmem:[%s2483 + $0x10] sm:$0xff]
    %v2487 = vld [vmem:[%s2483 + $0x18] sm:$0xff]
    %v2488 = vld [vmem:[%s2483 + $0x20] sm:$0xff]
    %v2489 = vld [vmem:[%s2483 + $0x28] sm:$0xff]
    %v2490 = vld [vmem:[%s2483 + $0x30] sm:$0xff]
    %v2491 = vld [vmem:[%s2483 + $0x38] sm:$0xff]
    %v2492 = vld [vmem:[%s2483 + $0x40] sm:$0xff]
    %v2493 = vld [vmem:[%s2483 + $0x48] sm:$0xff]
    %v2494 = vld [vmem:[%s2483 + $0x50] sm:$0xff]
    %v2495 = vld [vmem:[%s2483 + $0x58] sm:$0xff]
    %v2496 = vld [vmem:[%s2483 + $0x60] sm:$0xff]
    %v2497 = vld [vmem:[%s2483 + $0x68] sm:$0xff]
    %v2498 = vld [vmem:[%s2483 + $0x70] sm:$0xff]
    %v2499 = vld [vmem:[%s2483 + $0x78] sm:$0xff]
    %v2502 = vrot.slane %v2465, 2
    %v2503 = vrot.slane %v2466, 1
    %vm2504 = vcmask 1041409
    %v2505 = vsel %vm2504, %v2503, %v2502
    %v2506 = vsel %vm1366, %v2505, 0
    %2508 = vmatprep.subr.mxu0 0.0
    %2509 = vmatpush1.msra.mxu0 0.0
    %2510 = vmatprep.subr.mxu0 0.0
    %2511 = vmatpush1.msra.mxu0 0.0
    %2512 = vmatprep.subr.mxu0 0.0
    %2513 = vmatpush1.msra.mxu0 0.0
    %2514 = vmatprep.subr.mxu0 0.0
    %2515 = vmatpush1.msra.mxu0 0.0
    %2516 = vmatprep.subr.mxu0 0.0
    %2517 = vmatpush1.msra.mxu0 0.0
    %2518 = vmatprep.subr.mxu0 0.0
    %2519 = vmatpush1.msra.mxu0 0.0
    %2520 = vmatprep.subr.mxu0 0.0
    %2521 = vmatpush1.msra.mxu0 0.0
    %2522 = vmatprep.subr.mxu0 0.0
    %2523 = vmatpush1.msra.mxu0 0.0
    %2524 = vmatprep.subr.mxu0 %v2499
    %2525 = vmatpush1.msra.mxu0 %v2498
    %2526 = vmatprep.subr.mxu0 %v2497
    %2527 = vmatpush1.msra.mxu0 %v2496
    %2528 = vmatprep.subr.mxu0 %v2495
    %2529 = vmatpush1.msra.mxu0 %v2494
    %2530 = vmatprep.subr.mxu0 %v2493
    %2531 = vmatpush1.msra.mxu0 %v2492
    %2532 = vmatprep.subr.mxu0 %v2491
    %2533 = vmatpush1.msra.mxu0 %v2490
    %2534 = vmatprep.subr.mxu0 %v2489
    %2535 = vmatpush1.msra.mxu0 %v2488
    %2536 = vmatprep.subr.mxu0 %v2487
    %2537 = vmatpush1.msra.mxu0 %v2486
    %2538 = vmatprep.subr.mxu0 %v2485
    %2539 = vmatpush1.msra.mxu0 %v2484
    %2540 = vmatprep.subr.mxu0 0.0
    %2541 = vmatpush2.msra.mxu0 0.0
    %2542 = vmatprep.subr.mxu0 0.0
    %2543 = vmatpush2.msra.mxu0 0.0
    %2544 = vmatprep.subr.mxu0 0.0
    %2545 = vmatpush2.msra.mxu0 0.0
    %2546 = vmatprep.subr.mxu0 0.0
    %2547 = vmatpush2.msra.mxu0 0.0
    %2548 = vmatprep.subr.mxu0 0.0
    %2549 = vmatpush2.msra.mxu0 0.0
    %2550 = vmatprep.subr.mxu0 0.0
    %2551 = vmatpush2.msra.mxu0 0.0
    %2552 = vmatprep.subr.mxu0 0.0
    %2553 = vmatpush2.msra.mxu0 0.0
    %2554 = vmatprep.subr.mxu0 0.0
    %2555 = vmatpush2.msra.mxu0 0.0
    %2556 = vmatprep.subr.mxu0 0.0
    %2557 = vmatpush2.msra.mxu0 0.0
    %2558 = vmatprep.subr.mxu0 0.0
    %2559 = vmatpush2.msra.mxu0 0.0
    %2560 = vmatprep.subr.mxu0 0.0
    %2561 = vmatpush2.msra.mxu0 0.0
    %2562 = vmatprep.subr.mxu0 0.0
    %2563 = vmatpush2.msra.mxu0 0.0
    %2564 = vmatprep.subr.mxu0 0.0
    %2565 = vmatpush2.msra.mxu0 0.0
    %2566 = vmatprep.subr.mxu0 0.0
    %2567 = vmatpush2.msra.mxu0 0.0
    %2568 = vmatprep.subr.mxu0 0.0
    %2569 = vmatpush2.msra.mxu0 0.0
    %2570 = vmatprep.subr.mxu0 0.0
    %2571 = vmatpush2.msra.mxu0 0.0
    %2572 = vmatprep.mubr.f32.mxu0 0.0
    %2573 = vmatmul.mubr.f32.gmra.mxu0 %v2506
    %v2574 = vpop.f32.mrf.mxu0
    %v2575 = vadd.f32 0.0, %v2574
    %v2576 = vpop.f32.mrf.mxu0
    %v2577 = vadd.f32 0.0, %v2576
    %2578 = vdwg.mxu0
    %v2579 = vrot.slane %v2466, 7
    %v2580 = vsel %vm2504, %v2579, %v2465
    %v2581 = vsel %vm1366, %v2580, 0
    %2583 = vmatprep.subr.mxu0 0.0
    %2584 = vmatpush1.msra.mxu0 0.0
    %2585 = vmatprep.subr.mxu0 0.0
    %2586 = vmatpush1.msra.mxu0 0.0
    %2587 = vmatprep.subr.mxu0 0.0
    %2588 = vmatpush1.msra.mxu0 0.0
    %2589 = vmatprep.subr.mxu0 0.0
    %2590 = vmatpush1.msra.mxu0 0.0
    %2591 = vmatprep.subr.mxu0 0.0
    %2592 = vmatpush1.msra.mxu0 0.0
    %2593 = vmatprep.subr.mxu0 0.0
    %2594 = vmatpush1.msra.mxu0 0.0
    %2595 = vmatprep.subr.mxu0 0.0
    %2596 = vmatpush1.msra.mxu0 0.0
    %2597 = vmatprep.subr.mxu0 0.0
    %2598 = vmatpush1.msra.mxu0 0.0
    %2599 = vmatprep.subr.mxu0 %v2482
    %2600 = vmatpush1.msra.mxu0 %v2481
    %2601 = vmatprep.subr.mxu0 %v2480
    %2602 = vmatpush1.msra.mxu0 %v2479
    %2603 = vmatprep.subr.mxu0 %v2478
    %2604 = vmatpush1.msra.mxu0 %v2477
    %2605 = vmatprep.subr.mxu0 %v2476
    %2606 = vmatpush1.msra.mxu0 %v2475
    %2607 = vmatprep.subr.mxu0 %v2474
    %2608 = vmatpush1.msra.mxu0 %v2473
    %2609 = vmatprep.subr.mxu0 %v2472
    %2610 = vmatpush1.msra.mxu0 %v2471
    %2611 = vmatprep.subr.mxu0 %v2470
    %2612 = vmatpush1.msra.mxu0 %v2469
    %2613 = vmatprep.subr.mxu0 %v2468
    %2614 = vmatpush1.msra.mxu0 %v2467
    %2615 = vmatprep.subr.mxu0 0.0
    %2616 = vmatpush2.msra.mxu0 0.0
    %2617 = vmatprep.subr.mxu0 0.0
    %2618 = vmatpush2.msra.mxu0 0.0
    %2619 = vmatprep.subr.mxu0 0.0
    %2620 = vmatpush2.msra.mxu0 0.0
    %2621 = vmatprep.subr.mxu0 0.0
    %2622 = vmatpush2.msra.mxu0 0.0
    %2623 = vmatprep.subr.mxu0 0.0
    %2624 = vmatpush2.msra.mxu0 0.0
    %2625 = vmatprep.subr.mxu0 0.0
    %2626 = vmatpush2.msra.mxu0 0.0
    %2627 = vmatprep.subr.mxu0 0.0
    %2628 = vmatpush2.msra.mxu0 0.0
    %2629 = vmatprep.subr.mxu0 0.0
    %2630 = vmatpush2.msra.mxu0 0.0
    %2631 = vmatprep.subr.mxu0 0.0
    %2632 = vmatpush2.msra.mxu0 0.0
    %2633 = vmatprep.subr.mxu0 0.0
    %2634 = vmatpush2.msra.mxu0 0.0
    %2635 = vmatprep.subr.mxu0 0.0
    %2636 = vmatpush2.msra.mxu0 0.0
    %2637 = vmatprep.subr.mxu0 0.0
    %2638 = vmatpush2.msra.mxu0 0.0
    %2639 = vmatprep.subr.mxu0 0.0
    %2640 = vmatpush2.msra.mxu0 0.0
    %2641 = vmatprep.subr.mxu0 0.0
    %2642 = vmatpush2.msra.mxu0 0.0
    %2643 = vmatprep.subr.mxu0 0.0
    %2644 = vmatpush2.msra.mxu0 0.0
    %2645 = vmatprep.subr.mxu0 0.0
    %2646 = vmatpush2.msra.mxu0 0.0
    %2647 = vmatprep.mubr.f32.mxu0 0.0
    %2648 = vmatmul.mubr.f32.gmra.mxu0 %v2581
    %v2649 = vpop.f32.mrf.mxu0
    %v2650 = vadd.f32 %v2575, %v2649
    %v2651 = vpop.f32.mrf.mxu0
    %v2652 = vadd.f32 %v2577, %v2651
    %2653 = vdwg.mxu0
    %s2654 = scalar_lea.vmem [#allocation8], 256
    %v2655 = vld [vmem:[%s2654] sm:$0xff]
    %v2656 = vld [vmem:[%s2654 + $0x8] sm:$0xff]
    %v2657 = vld [vmem:[%s2654 + $0x10] sm:$0xff]
    %v2658 = vld [vmem:[%s2654 + $0x18] sm:$0xff]
    %v2659 = vld [vmem:[%s2654 + $0x20] sm:$0xff]
    %v2660 = vld [vmem:[%s2654 + $0x28] sm:$0xff]
    %v2661 = vld [vmem:[%s2654 + $0x30] sm:$0xff]
    %v2662 = vld [vmem:[%s2654 + $0x38] sm:$0xff]
    %v2663 = vld [vmem:[%s2654 + $0x40] sm:$0xff]
    %v2664 = vld [vmem:[%s2654 + $0x48] sm:$0xff]
    %v2665 = vld [vmem:[%s2654 + $0x50] sm:$0xff]
    %v2666 = vld [vmem:[%s2654 + $0x58] sm:$0xff]
    %v2667 = vld [vmem:[%s2654 + $0x60] sm:$0xff]
    %v2668 = vld [vmem:[%s2654 + $0x68] sm:$0xff]
    %v2669 = vld [vmem:[%s2654 + $0x70] sm:$0xff]
    %v2670 = vld [vmem:[%s2654 + $0x78] sm:$0xff]
    %v2671 = vrot.slane %v2465, 4
    %v2672 = vrot.slane %v2466, 3
    %v2673 = vsel %vm2504, %v2672, %v2671
    %v2674 = vsel %vm1366, %v2673, 0
    %2676 = vmatprep.subr.mxu0 0.0
    %2677 = vmatpush1.msra.mxu0 0.0
    %2678 = vmatprep.subr.mxu0 0.0
    %2679 = vmatpush1.msra.mxu0 0.0
    %2680 = vmatprep.subr.mxu0 0.0
    %2681 = vmatpush1.msra.mxu0 0.0
    %2682 = vmatprep.subr.mxu0 0.0
    %2683 = vmatpush1.msra.mxu0 0.0
    %2684 = vmatprep.subr.mxu0 0.0
    %2685 = vmatpush1.msra.mxu0 0.0
    %2686 = vmatprep.subr.mxu0 0.0
    %2687 = vmatpush1.msra.mxu0 0.0
    %2688 = vmatprep.subr.mxu0 0.0
    %2689 = vmatpush1.msra.mxu0 0.0
    %2690 = vmatprep.subr.mxu0 0.0
    %2691 = vmatpush1.msra.mxu0 0.0
    %2692 = vmatprep.subr.mxu0 %v2670
    %2693 = vmatpush1.msra.mxu0 %v2669
    %2694 = vmatprep.subr.mxu0 %v2668
    %2695 = vmatpush1.msra.mxu0 %v2667
    %2696 = vmatprep.subr.mxu0 %v2666
    %2697 = vmatpush1.msra.mxu0 %v2665
    %2698 = vmatprep.subr.mxu0 %v2664
    %2699 = vmatpush1.msra.mxu0 %v2663
    %2700 = vmatprep.subr.mxu0 %v2662
    %2701 = vmatpush1.msra.mxu0 %v2661
    %2702 = vmatprep.subr.mxu0 %v2660
    %2703 = vmatpush1.msra.mxu0 %v2659
    %2704 = vmatprep.subr.mxu0 %v2658
    %2705 = vmatpush1.msra.mxu0 %v2657
    %2706 = vmatprep.subr.mxu0 %v2656
    %2707 = vmatpush1.msra.mxu0 %v2655
    %2708 = vmatprep.subr.mxu0 0.0
    %2709 = vmatpush2.msra.mxu0 0.0
    %2710 = vmatprep.subr.mxu0 0.0
    %2711 = vmatpush2.msra.mxu0 0.0
    %2712 = vmatprep.subr.mxu0 0.0
    %2713 = vmatpush2.msra.mxu0 0.0
    %2714 = vmatprep.subr.mxu0 0.0
    %2715 = vmatpush2.msra.mxu0 0.0
    %2716 = vmatprep.subr.mxu0 0.0
    %2717 = vmatpush2.msra.mxu0 0.0
    %2718 = vmatprep.subr.mxu0 0.0
    %2719 = vmatpush2.msra.mxu0 0.0
    %2720 = vmatprep.subr.mxu0 0.0
    %2721 = vmatpush2.msra.mxu0 0.0
    %2722 = vmatprep.subr.mxu0 0.0
    %2723 = vmatpush2.msra.mxu0 0.0
    %2724 = vmatprep.subr.mxu0 0.0
    %2725 = vmatpush2.msra.mxu0 0.0
    %2726 = vmatprep.subr.mxu0 0.0
    %2727 = vmatpush2.msra.mxu0 0.0
    %2728 = vmatprep.subr.mxu0 0.0
    %2729 = vmatpush2.msra.mxu0 0.0
    %2730 = vmatprep.subr.mxu0 0.0
    %2731 = vmatpush2.msra.mxu0 0.0
    %2732 = vmatprep.subr.mxu0 0.0
    %2733 = vmatpush2.msra.mxu0 0.0
    %2734 = vmatprep.subr.mxu0 0.0
    %2735 = vmatpush2.msra.mxu0 0.0
    %2736 = vmatprep.subr.mxu0 0.0
    %2737 = vmatpush2.msra.mxu0 0.0
    %2738 = vmatprep.subr.mxu0 0.0
    %2739 = vmatpush2.msra.mxu0 0.0
    %2740 = vmatprep.mubr.f32.mxu0 0.0
    %2741 = vmatmul.mubr.f32.gmra.mxu0 %v2674
    %v2742 = vpop.f32.mrf.mxu0
    %v2743 = vadd.f32 0.0, %v2742
    %v2744 = vpop.f32.mrf.mxu0
    %v2745 = vadd.f32 0.0, %v2744
    %2746 = vdwg.mxu0
    %v2747 = vadd.f32 %v2650, %v2743
    %v2748 = vadd.f32 %v2652, %v2745
    %s2749 = scalar_lea.vmem [#allocation8], 384
    %v2750 = vld [vmem:[%s2749] sm:$0xff]
    %v2751 = vld [vmem:[%s2749 + $0x8] sm:$0xff]
    %v2752 = vld [vmem:[%s2749 + $0x10] sm:$0xff]
    %v2753 = vld [vmem:[%s2749 + $0x18] sm:$0xff]
    %v2754 = vld [vmem:[%s2749 + $0x20] sm:$0xff]
    %v2755 = vld [vmem:[%s2749 + $0x28] sm:$0xff]
    %v2756 = vld [vmem:[%s2749 + $0x30] sm:$0xff]
    %v2757 = vld [vmem:[%s2749 + $0x38] sm:$0xff]
    %v2758 = vld [vmem:[%s2749 + $0x40] sm:$0xff]
    %v2759 = vld [vmem:[%s2749 + $0x48] sm:$0xff]
    %v2760 = vld [vmem:[%s2749 + $0x50] sm:$0xff]
    %v2761 = vld [vmem:[%s2749 + $0x58] sm:$0xff]
    %v2762 = vld [vmem:[%s2749 + $0x60] sm:$0xff]
    %v2763 = vld [vmem:[%s2749 + $0x68] sm:$0xff]
    %v2764 = vld [vmem:[%s2749 + $0x70] sm:$0xff]
    %v2765 = vld [vmem:[%s2749 + $0x78] sm:$0xff]
    %v2766 = vrot.slane %v2465, 6
    %v2767 = vrot.slane %v2466, 5
    %v2768 = vsel %vm2504, %v2767, %v2766
    %v2769 = vsel %vm1366, %v2768, 0
    %2771 = vmatprep.subr.mxu0 0.0
    %2772 = vmatpush1.msra.mxu0 0.0
    %2773 = vmatprep.subr.mxu0 0.0
    %2774 = vmatpush1.msra.mxu0 0.0
    %2775 = vmatprep.subr.mxu0 0.0
    %2776 = vmatpush1.msra.mxu0 0.0
    %2777 = vmatprep.subr.mxu0 0.0
    %2778 = vmatpush1.msra.mxu0 0.0
    %2779 = vmatprep.subr.mxu0 0.0
    %2780 = vmatpush1.msra.mxu0 0.0
    %2781 = vmatprep.subr.mxu0 0.0
    %2782 = vmatpush1.msra.mxu0 0.0
    %2783 = vmatprep.subr.mxu0 0.0
    %2784 = vmatpush1.msra.mxu0 0.0
    %2785 = vmatprep.subr.mxu0 0.0
    %2786 = vmatpush1.msra.mxu0 0.0
    %2787 = vmatprep.subr.mxu0 %v2765
    %2788 = vmatpush1.msra.mxu0 %v2764
    %2789 = vmatprep.subr.mxu0 %v2763
    %2790 = vmatpush1.msra.mxu0 %v2762
    %2791 = vmatprep.subr.mxu0 %v2761
    %2792 = vmatpush1.msra.mxu0 %v2760
    %2793 = vmatprep.subr.mxu0 %v2759
    %2794 = vmatpush1.msra.mxu0 %v2758
    %2795 = vmatprep.subr.mxu0 %v2757
    %2796 = vmatpush1.msra.mxu0 %v2756
    %2797 = vmatprep.subr.mxu0 %v2755
    %2798 = vmatpush1.msra.mxu0 %v2754
    %2799 = vmatprep.subr.mxu0 %v2753
    %2800 = vmatpush1.msra.mxu0 %v2752
    %2801 = vmatprep.subr.mxu0 %v2751
    %2802 = vmatpush1.msra.mxu0 %v2750
    %2803 = vmatprep.subr.mxu0 0.0
    %2804 = vmatpush2.msra.mxu0 0.0
    %2805 = vmatprep.subr.mxu0 0.0
    %2806 = vmatpush2.msra.mxu0 0.0
    %2807 = vmatprep.subr.mxu0 0.0
    %2808 = vmatpush2.msra.mxu0 0.0
    %2809 = vmatprep.subr.mxu0 0.0
    %2810 = vmatpush2.msra.mxu0 0.0
    %2811 = vmatprep.subr.mxu0 0.0
    %2812 = vmatpush2.msra.mxu0 0.0
    %2813 = vmatprep.subr.mxu0 0.0
    %2814 = vmatpush2.msra.mxu0 0.0
    %2815 = vmatprep.subr.mxu0 0.0
    %2816 = vmatpush2.msra.mxu0 0.0
    %2817 = vmatprep.subr.mxu0 0.0
    %2818 = vmatpush2.msra.mxu0 0.0
    %2819 = vmatprep.subr.mxu0 0.0
    %2820 = vmatpush2.msra.mxu0 0.0
    %2821 = vmatprep.subr.mxu0 0.0
    %2822 = vmatpush2.msra.mxu0 0.0
    %2823 = vmatprep.subr.mxu0 0.0
    %2824 = vmatpush2.msra.mxu0 0.0
    %2825 = vmatprep.subr.mxu0 0.0
    %2826 = vmatpush2.msra.mxu0 0.0
    %2827 = vmatprep.subr.mxu0 0.0
    %2828 = vmatpush2.msra.mxu0 0.0
    %2829 = vmatprep.subr.mxu0 0.0
    %2830 = vmatpush2.msra.mxu0 0.0
    %2831 = vmatprep.subr.mxu0 0.0
    %2832 = vmatpush2.msra.mxu0 0.0
    %2833 = vmatprep.subr.mxu0 0.0
    %2834 = vmatpush2.msra.mxu0 0.0
    %2835 = vmatprep.mubr.f32.mxu0 0.0
    %2836 = vmatmul.mubr.f32.gmra.mxu0 %v2769
    %v2837 = vpop.f32.mrf.mxu0
    %v2838 = vadd.f32 0.0, %v2837
    %v2839 = vpop.f32.mrf.mxu0
    %v2840 = vadd.f32 0.0, %v2839
    %2841 = vdwg.mxu0
    %v2842 = vadd.f32 %v2747, %v2838
    %v2843 = vadd.f32 %v2748, %v2840
    %v2846 = vcombine.low %v2842, %v2843
    %v2848 = vunpack.c.l.s4 1983009808
    %v2849 = vunpack.c.0.s8 %v2848
    %v2850 = vlaneseq
    %v2851 = vshrl.u32 %v2850, 7
    %v2852 = vsub.s32 %v2849, %v2851
    %v2853 = vrot.slane %v2846, %v2852
    %2855 = vst [vmem:[#allocation9] sm:$0xf] %v2853
    // Predicated region
    $region38: #{tpu_custom_call.1} parent=1 // pred_check
      _
    $region39: #{tpu_custom_call.1} parent=1 // pred_check_branch
      %2857 = sbr.rel (0) target = $region41
    $region40: #{tpu_custom_call.1} parent=1 // pred_region
      %s2859 = ssub.s32 64, 64
      %2860 = vsyncadd [#allocation5], %s2859
      %s2862 = sshll.u32 [#allocation9], 4
      %s2863 = int_to_ptr.vmem [resolvable:$true] %s2862
      %2865 = dma.vmem_to_hbm [thread:$0]  %s2863, 64, %s6, [#allocation5]
    $region41: #{tpu_custom_call.1} parent=1 // pred_fallthru
      _
    // Predicated region
    $region42: #{tpu_custom_call.1} parent=1 // pred_check
      _
    $region43: #{tpu_custom_call.1} parent=1 // pred_check_branch
      %2867 = sbr.rel (0) target = $region45
    $region44: #{tpu_custom_call.1} parent=1 // pred_region
      %2868 = dma.done [#allocation5], 64
    $region45: #{tpu_custom_call.1} parent=1 // pred_fallthru
      _
    %2869 = vsyncpa [#allocation4], 1
    %2870 = vsyncpa [#allocation7], 1
    %2871 = vsyncpa [#allocation5], 1

</llo_original>
